<compile_context>
chip_gen: v6e
topology: v6e:2x2x1
jax: 0.10.0
libtpu: 0.0.40
codegen_flags: <defaults>
</compile_context>

<pallas_src>
import jax
import jax.numpy as jnp
from jax.experimental import pallas as pl
from jax.experimental.pallas import tpu as pltpu

LANES = 128


def _pad_to(x, axis, target):
    pad = target - x.shape[axis]
    if pad <= 0:
        return x
    widths = [(0, 0)] * x.ndim
    widths[axis] = (0, pad)
    return jnp.pad(x, widths)


# ---------------------------------------------------------------------------
# Parameter layout (done once, outside the jitted forward)
# ---------------------------------------------------------------------------
def _fused_conv_weight(w, cin, cout):
    """PyTorch conv weight (cout, cin, 5, 5) -> pool-fused matmul weight.

    Rows: the 6x6xCin union receptive field of a 2x2 pooling window, ordered
    (dh, dw, cin).  Columns: four 32-lane groups; group g = (gy, gx) holds the
    conv output for pool offset (gy, gx) in lanes [32g, 32g + cout).
    """
    w_hwio = jnp.transpose(w, (2, 3, 1, 0))              # (5, 5, cin, cout)
    full = jnp.zeros((6, 6, cin, 4, 32), w.dtype)
    for gy in range(2):
        for gx in range(2):
            g = gy * 2 + gx
            full = full.at[gy:gy + 5, gx:gx + 5, :, g, :cout].set(w_hwio)
    return full.reshape(36 * cin, 4 * 32)                # (36*cin, 128)


def _fused_conv_bias(b, cout):
    full = jnp.zeros((4, 32), b.dtype)
    full = full.at[:, :cout].set(jnp.broadcast_to(b, (4, cout)))
    return full.reshape(1, LANES)


def prepare_params(p):
    """Convert PyTorch-layout params into the kernel layouts (run once)."""
    out = {}
    # conv1: K = 6*6*3 = 108 -> 128 rows, 4x6-channel column groups.
    out["w1c"] = _pad_to(_fused_conv_weight(p["conv1_w"], 3, 6), 0,
                         LANES).astype(jnp.bfloat16)
    out["b1c"] = _fused_conv_bias(p["conv1_b"], 6).astype(jnp.float32)
    # conv2: K = 6*6*6 = 216 -> 256 rows, 4x16-channel column groups.
    out["w2c"] = _pad_to(_fused_conv_weight(p["conv2_w"], 6, 16), 0,
                         2 * LANES).astype(jnp.bfloat16)
    out["b2c"] = _fused_conv_bias(p["conv2_b"], 16).astype(jnp.float32)
    # fc1 as 25 per-spatial-position taps: tap r = h*5+w is a (128,128) matrix
    # whose rows 0..15 hold fc1_w[:, c, h, w].T -- the flatten is done by the
    # tap-indexed matmuls, matching PyTorch's (c, h, w) flatten order.
    w1 = p["fc1_w"].reshape(120, 16, 5, 5)
    w1 = jnp.transpose(w1, (2, 3, 1, 0)).reshape(25, 16, 120)   # (hw, cin, cout)
    taps = jnp.zeros((25, LANES, LANES), jnp.float32).at[:, :16, :120].set(w1)
    out["fc1_w"] = taps.astype(jnp.bfloat16)
    out["fc1_b"] = _pad_to(p["fc1_b"].reshape(1, -1), 1, LANES).astype(jnp.float32)
    out["fc2_w"] = _pad_to(_pad_to(p["fc2_w"].T, 0, LANES), 1,
                           LANES).astype(jnp.bfloat16)
    out["fc2_b"] = _pad_to(p["fc2_b"].reshape(1, -1), 1, LANES).astype(jnp.float32)
    out["fc3_w"] = _pad_to(_pad_to(p["fc3_w"].T, 0, LANES), 1,
                           LANES).astype(jnp.bfloat16)
    out["fc3_b"] = _pad_to(p["fc3_b"].reshape(1, -1), 1, LANES).astype(jnp.float32)
    return out


# ---------------------------------------------------------------------------
# Pool-fused im2col (plain JAX; fuses into one XLA fusion under jit)
# ---------------------------------------------------------------------------
def _pool_fused_patches(x, cin, n_pool):
    """x: (N, H, W, cin) -> (N, n_pool*n_pool, 36*cin).

    One row per 2x2-pooled conv output position, covering the 6x6 union
    receptive field of its pooling window, feature order (dh, dw, cin).
    """
    cols = []
    stop = 2 * n_pool - 1
    for dh in range(6):
        for dw in range(6):
            cols.append(x[:, dh:dh + stop:2, dw:dw + stop:2, :])
    patches = jnp.concatenate(cols, axis=-1)             # (N, n_pool, n_pool, 36*cin)
    return patches.reshape(x.shape[0], n_pool * n_pool, 36 * cin)


# ---------------------------------------------------------------------------
# Kernel 1: conv1 matmul + bias + ReLU + 2x2 maxpool (lane-group max)
# ---------------------------------------------------------------------------
def _conv_pool_kernel(p_ref, w_ref, b_ref, o_ref):
    # (M, K) @ (K, 128) -> (M, 128) f32.  Column group g holds the conv output
    # for pool offset g; bias + ReLU; 2x2 maxpool == max over the four 32-lane
    # groups (two lane rotations).  Store bf16, 128-lane dense.
    y = jnp.dot(p_ref[...], w_ref[...], preferred_element_type=jnp.float32)
    y = jnp.maximum(y + b_ref[...], 0.0)
    y = jnp.maximum(y, pltpu.roll(y, 32, axis=1))
    y = jnp.maximum(y, pltpu.roll(y, 64, axis=1))
    o_ref[...] = y.astype(jnp.bfloat16)


def conv1_pool(x_nhwc, pp):
    """x: (N, 32, 32, 3) f32 -> (N, 196, 128) bf16; lanes 0..5 = pooled chans."""
    n = x_nhwc.shape[0]
    patches = _pool_fused_patches(x_nhwc, 3, 14)                  # (N, 196, 108)
    patches = _pad_to(patches, 2, LANES).astype(jnp.bfloat16)     # (N, 196, 128)
    return pl.pallas_call(
        _conv_pool_kernel,
        out_shape=jax.ShapeDtypeStruct((n, 196, LANES), jnp.bfloat16),
        grid=(n,),
        in_specs=[
            pl.BlockSpec((None, 196, LANES), lambda b: (b, 0, 0)),
            pl.BlockSpec((LANES, LANES), lambda b: (0, 0)),
            pl.BlockSpec((1, LANES), lambda b: (0, 0)),
        ],
        out_specs=pl.BlockSpec((None, 196, LANES), lambda b: (b, 0, 0)),
        compiler_params=pltpu.CompilerParams(
            dimension_semantics=("parallel",)),
    )(patches, pp["w1c"], pp["b1c"])


# ---------------------------------------------------------------------------
# Kernel 2: conv2 matmul + ReLU + maxpool + flatten + fc1 + fc2 + fc3
# ---------------------------------------------------------------------------
def _tail_kernel(p_ref, wc_ref, bc_ref, w1_ref, b1_ref, w2_ref, b2_ref,
                 w3_ref, b3_ref, o_ref):
    # conv2 (pool-fused matmul) + bias + ReLU: (25, 256) @ (256, 128).
    y = jnp.dot(p_ref[...], wc_ref[...], preferred_element_type=jnp.float32)
    y = jnp.maximum(y + bc_ref[...], 0.0)
    # 2x2 maxpool == max over the four 32-lane groups; lanes 0..15 hold the
    # pooled channels, lanes >=16 are don't-care (fc1 tap rows >=16 are zero).
    y = jnp.maximum(y, pltpu.roll(y, 32, axis=1))
    y = jnp.maximum(y, pltpu.roll(y, 64, axis=1))                 # (25, 128)
    # fc1: 25 per-position taps -- this IS torch.flatten(x, 1) + fc1.
    h = b1_ref[...]                                               # (1, 128) f32
    for r in range(25):
        h = h + jnp.dot(y[r:r + 1, :].astype(jnp.bfloat16), w1_ref[r],
                        preferred_element_type=jnp.float32)
    h = jnp.maximum(h, 0.0)
    # fc2 + ReLU, fc3.
    h = jnp.dot(h.astype(jnp.bfloat16), w2_ref[...],
                preferred_element_type=jnp.float32)
    h = jnp.maximum(h + b2_ref[...], 0.0)
    h = jnp.dot(h.astype(jnp.bfloat16), w3_ref[...],
                preferred_element_type=jnp.float32)
    o_ref[...] = h + b3_ref[...]


def conv2_fc(act1, pp):
    """act1: (N, 196, 128) bf16 conv1-pooled activation -> (N, 10) f32."""
    n = act1.shape[0]
    a = act1.reshape(n, 14, 14, LANES)[..., :6]                   # (N, 14, 14, 6)
    patches = _pool_fused_patches(a, 6, 5)                        # (N, 25, 216) bf16
    patches = _pad_to(patches, 2, 2 * LANES)                      # (N, 25, 256)
    out = pl.pallas_call(
        _tail_kernel,
        out_shape=jax.ShapeDtypeStruct((n, 1, LANES), jnp.float32),
        grid=(n,),
        in_specs=[
            pl.BlockSpec((None, 25, 2 * LANES), lambda b: (b, 0, 0)),
            pl.BlockSpec((2 * LANES, LANES), lambda b: (0, 0)),
            pl.BlockSpec((1, LANES), lambda b: (0, 0)),
            pl.BlockSpec((25, LANES, LANES), lambda b: (0, 0, 0)),
            pl.BlockSpec((1, LANES), lambda b: (0, 0)),
            pl.BlockSpec((LANES, LANES), lambda b: (0, 0)),
            pl.BlockSpec((1, LANES), lambda b: (0, 0)),
            pl.BlockSpec((LANES, LANES), lambda b: (0, 0)),
            pl.BlockSpec((1, LANES), lambda b: (0, 0)),
        ],
        out_specs=pl.BlockSpec((None, 1, LANES), lambda b: (b, 0, 0)),
        compiler_params=pltpu.CompilerParams(
            dimension_semantics=("parallel",)),
    )(patches, pp["w2c"], pp["b2c"], pp["fc1_w"], pp["fc1_b"],
      pp["fc2_w"], pp["fc2_b"], pp["fc3_w"], pp["fc3_b"])
    return out[:, 0, :10]


# ---------------------------------------------------------------------------
# Forward pass + parameter init
# ---------------------------------------------------------------------------
def net_forward(x_nchw, pp):
    x = jnp.transpose(x_nchw, (0, 2, 3, 1))       # NHWC (N, 32, 32, 3)
    act1 = conv1_pool(x, pp)                      # (N, 196, 128) bf16
    return conv2_fc(act1, pp)                     # (N, 10) f32


def init_params(key):
    def uniform(key, shape, fan_in):
        bound = 1.0 / jnp.sqrt(fan_in)
        return jax.random.uniform(key, shape, jnp.float32, -bound, bound)

    ks = jax.random.split(key, 10)
    p = {}
    p["conv1_w"] = uniform(ks[0], (6, 3, 5, 5), 3 * 5 * 5)
    p["conv1_b"] = uniform(ks[1], (6,), 3 * 5 * 5)
    p["conv2_w"] = uniform(ks[2], (16, 6, 5, 5), 6 * 5 * 5)
    p["conv2_b"] = uniform(ks[3], (16,), 6 * 5 * 5)
    p["fc1_w"] = uniform(ks[4], (120, 400), 400)
    p["fc1_b"] = uniform(ks[5], (120,), 400)
    p["fc2_w"] = uniform(ks[6], (84, 120), 120)
    p["fc2_b"] = uniform(ks[7], (84,), 120)
    p["fc3_w"] = uniform(ks[8], (10, 84), 84)
    p["fc3_b"] = uniform(ks[9], (10,), 84)
    return p


if __name__ == "__main__":
    key = jax.random.PRNGKey(0)
    pkey, xkey = jax.random.split(key)
    params = init_params(pkey)
    pp = prepare_params(params)                                   # once, outside jit
    x = jax.random.normal(xkey, (2, 3, 32, 32), jnp.float32)      # NCHW, like PyTorch

    out = jax.jit(net_forward)(x, pp)
    out = jax.block_until_ready(out)
    assert out.shape == (2, 10) and out.dtype == jnp.float32
    print("KERNEL_OK")
</pallas_src>

<mosaic_0001>
module attributes {stable_mosaic.version = 11 : i64} {
  func.func @_conv_pool_kernel(%arg0: i32, %arg1: memref<1x196x128xbf16, #tpu.memory_space<vmem>>, %arg2: memref<128x128xbf16, #tpu.memory_space<vmem>>, %arg3: memref<1x128xf32, #tpu.memory_space<vmem>>, %arg4: memref<1x196x128xbf16, #tpu.memory_space<vmem>>) attributes {dimension_semantics = [#tpu.dimension_semantics<parallel>], iteration_bounds = array<i64: 2>, scalar_prefetch = 0 : i64, scratch_operands = 0 : i64, tpu.core_type = #tpu.core_type<tc>, window_params = [{transform_indices = @transform_0, window_bounds = array<i64: 1, 196, 128>}, {pipeline_mode = #tpu.pipeline_mode<synchronous>, transform_indices = @transform_1, window_bounds = array<i64: 128, 128>}, {pipeline_mode = #tpu.pipeline_mode<synchronous>, transform_indices = @transform_2, window_bounds = array<i64: 1, 128>}, {transform_indices = @transform_3, window_bounds = array<i64: 1, 196, 128>}]} {
    %c0 = arith.constant 0 : index
    %c0_0 = arith.constant 0 : index
    %c0_1 = arith.constant 0 : index
    %0 = vector.load %arg1[%c0, %c0_0, %c0_1] : memref<1x196x128xbf16, #tpu.memory_space<vmem>>, vector<1x196x128xbf16>
    %1 = vector.shape_cast %0 : vector<1x196x128xbf16> to vector<196x128xbf16>
    %c0_2 = arith.constant 0 : index
    %c0_3 = arith.constant 0 : index
    %2 = vector.load %arg2[%c0_2, %c0_3] : memref<128x128xbf16, #tpu.memory_space<vmem>>, vector<128x128xbf16>
    %cst = arith.constant dense<0.000000e+00> : vector<196x128xf32>
    %3 = tpu.matmul %1, %2, %cst {dimension_numbers = #tpu.dot_dimension_numbers<[1], [0], [0], [1], [0, 0, 1, 1], [], []>} : vector<196x128xbf16>, vector<128x128xbf16>, vector<196x128xf32> -> vector<196x128xf32>
    %c0_4 = arith.constant 0 : index
    %c0_5 = arith.constant 0 : index
    %4 = vector.load %arg3[%c0_4, %c0_5] : memref<1x128xf32, #tpu.memory_space<vmem>>, vector<1x128xf32>
    %5 = vector.broadcast %4 : vector<1x128xf32> to vector<196x128xf32>
    %6 = arith.addf %3, %5 : vector<196x128xf32>
    %cst_6 = arith.constant 0.000000e+00 : f32
    %7 = vector.broadcast %cst_6 : f32 to vector<196x128xf32>
    %8 = arith.maximumf %6, %7 : vector<196x128xf32>
    %c32_i32 = arith.constant 32 : i32
    %9 = tpu.dynamic_rotate %8 by %c32_i32 dim 1 : vector<196x128xf32>, i32 -> vector<196x128xf32>
    %10 = arith.maximumf %8, %9 : vector<196x128xf32>
    %c64_i32 = arith.constant 64 : i32
    %11 = tpu.dynamic_rotate %10 by %c64_i32 dim 1 : vector<196x128xf32>, i32 -> vector<196x128xf32>
    %12 = arith.maximumf %10, %11 : vector<196x128xf32>
    %13 = arith.truncf %12 : vector<196x128xf32> to vector<196x128xbf16>
    %c0_7 = arith.constant 0 : index
    %c0_8 = arith.constant 0 : index
    %c0_9 = arith.constant 0 : index
    %14 = vector.load %arg4[%c0_7, %c0_8, %c0_9] : memref<1x196x128xbf16, #tpu.memory_space<vmem>>, vector<1x196x128xbf16>
    %15 = vector.shape_cast %14 : vector<1x196x128xbf16> to vector<196x128xbf16>
    %16 = vector.shape_cast %13 : vector<196x128xbf16> to vector<1x196x128xbf16>
    tpu.vector_store %arg4[%c0_7, %c0_8, %c0_9], %16 {strides = array<i32>} : memref<1x196x128xbf16, #tpu.memory_space<vmem>>, vector<1x196x128xbf16>,
    return
  }
  func.func @transform_0(%arg0: i32) -> (i32, i32, i32) {
    %c0_i32 = arith.constant 0 : i32
    %c0_i32_0 = arith.constant 0 : i32
    %c0_i32_1 = arith.constant 0 : i32
    return %arg0, %c0_i32, %c0_i32_0 : i32, i32, i32
  }
  func.func @transform_1(%arg0: i32) -> (i32, i32) {
    %c0_i32 = arith.constant 0 : i32
    %c0_i32_0 = arith.constant 0 : i32
    %c0_i32_1 = arith.constant 0 : i32
    return %c0_i32, %c0_i32_0 : i32, i32
  }
  func.func @transform_2(%arg0: i32) -> (i32, i32) {
    %c0_i32 = arith.constant 0 : i32
    %c0_i32_0 = arith.constant 0 : i32
    %c0_i32_1 = arith.constant 0 : i32
    return %c0_i32, %c0_i32_0 : i32, i32
  }
  func.func @transform_3(%arg0: i32) -> (i32, i32, i32) {
    %c0_i32 = arith.constant 0 : i32
    %c0_i32_0 = arith.constant 0 : i32
    %c0_i32_1 = arith.constant 0 : i32
    return %arg0, %c0_i32, %c0_i32_0 : i32, i32, i32
  }
}

module attributes {stable_mosaic.version = 11 : i64} {
  func.func @_tail_kernel(%arg0: i32, %arg1: memref<1x25x256xbf16, #tpu.memory_space<vmem>>, %arg2: memref<256x128xbf16, #tpu.memory_space<vmem>>, %arg3: memref<1x128xf32, #tpu.memory_space<vmem>>, %arg4: memref<25x128x128xbf16, #tpu.memory_space<vmem>>, %arg5: memref<1x128xf32, #tpu.memory_space<vmem>>, %arg6: memref<128x128xbf16, #tpu.memory_space<vmem>>, %arg7: memref<1x128xf32, #tpu.memory_space<vmem>>, %arg8: memref<128x128xbf16, #tpu.memory_space<vmem>>, %arg9: memref<1x128xf32, #tpu.memory_space<vmem>>, %arg10: memref<1x1x128xf32, #tpu.memory_space<vmem>>) attributes {dimension_semantics = [#tpu.dimension_semantics<parallel>], iteration_bounds = array<i64: 2>, scalar_prefetch = 0 : i64, scratch_operands = 0 : i64, tpu.core_type = #tpu.core_type<tc>, window_params = [{transform_indices = @transform_0, window_bounds = array<i64: 1, 25, 256>}, {pipeline_mode = #tpu.pipeline_mode<synchronous>, transform_indices = @transform_1, window_bounds = array<i64: 256, 128>}, {pipeline_mode = #tpu.pipeline_mode<synchronous>, transform_indices = @transform_2, window_bounds = array<i64: 1, 128>}, {pipeline_mode = #tpu.pipeline_mode<synchronous>, transform_indices = @transform_3, window_bounds = array<i64: 25, 128, 128>}, {pipeline_mode = #tpu.pipeline_mode<synchronous>, transform_indices = @transform_4, window_bounds = array<i64: 1, 128>}, {pipeline_mode = #tpu.pipeline_mode<synchronous>, transform_indices = @transform_5, window_bounds = array<i64: 128, 128>}, {pipeline_mode = #tpu.pipeline_mode<synchronous>, transform_indices = @transform_6, window_bounds = array<i64: 1, 128>}, {pipeline_mode = #tpu.pipeline_mode<synchronous>, transform_indices = @transform_7, window_bounds = array<i64: 128, 128>}, {pipeline_mode = #tpu.pipeline_mode<synchronous>, transform_indices = @transform_8, window_bounds = array<i64: 1, 128>}, {transform_indices = @transform_9, window_bounds = array<i64: 1, 1, 128>}]} {
    %c0 = arith.constant 0 : index
    %c0_0 = arith.constant 0 : index
    %c0_1 = arith.constant 0 : index
    %0 = vector.load %arg1[%c0, %c0_0, %c0_1] : memref<1x25x256xbf16, #tpu.memory_space<vmem>>, vector<1x25x256xbf16>
    %1 = vector.shape_cast %0 : vector<1x25x256xbf16> to vector<25x256xbf16>
    %c0_2 = arith.constant 0 : index
    %c0_3 = arith.constant 0 : index
    %2 = vector.load %arg2[%c0_2, %c0_3] : memref<256x128xbf16, #tpu.memory_space<vmem>>, vector<256x128xbf16>
    %cst = arith.constant dense<0.000000e+00> : vector<25x128xf32>
    %3 = tpu.matmul %1, %2, %cst {dimension_numbers = #tpu.dot_dimension_numbers<[1], [0], [0], [1], [0, 0, 1, 1], [], []>} : vector<25x256xbf16>, vector<256x128xbf16>, vector<25x128xf32> -> vector<25x128xf32>
    %c0_4 = arith.constant 0 : index
    %c0_5 = arith.constant 0 : index
    %4 = vector.load %arg3[%c0_4, %c0_5] : memref<1x128xf32, #tpu.memory_space<vmem>>, vector<1x128xf32>
    %5 = vector.broadcast %4 : vector<1x128xf32> to vector<25x128xf32>
    %6 = arith.addf %3, %5 : vector<25x128xf32>
    %cst_6 = arith.constant 0.000000e+00 : f32
    %7 = vector.broadcast %cst_6 : f32 to vector<25x128xf32>
    %8 = arith.maximumf %6, %7 : vector<25x128xf32>
    %c32_i32 = arith.constant 32 : i32
    %9 = tpu.dynamic_rotate %8 by %c32_i32 dim 1 : vector<25x128xf32>, i32 -> vector<25x128xf32>
    %10 = arith.maximumf %8, %9 : vector<25x128xf32>
    %c64_i32 = arith.constant 64 : i32
    %11 = tpu.dynamic_rotate %10 by %c64_i32 dim 1 : vector<25x128xf32>, i32 -> vector<25x128xf32>
    %12 = arith.maximumf %10, %11 : vector<25x128xf32>
    %c0_7 = arith.constant 0 : index
    %c0_8 = arith.constant 0 : index
    %13 = vector.load %arg5[%c0_7, %c0_8] : memref<1x128xf32, #tpu.memory_space<vmem>>, vector<1x128xf32>
    %14 = vector.extract_strided_slice %12 {offsets = [0, 0], sizes = [1, 128], strides = [1, 1]} : vector<25x128xf32> to vector<1x128xf32>
    %15 = arith.truncf %14 : vector<1x128xf32> to vector<1x128xbf16>
    %c0_9 = arith.constant 0 : index
    %c0_10 = arith.constant 0 : index
    %c0_11 = arith.constant 0 : index
    %16 = vector.load %arg4[%c0_9, %c0_10, %c0_11] : memref<25x128x128xbf16, #tpu.memory_space<vmem>>, vector<1x128x128xbf16>
    %17 = vector.shape_cast %16 : vector<1x128x128xbf16> to vector<128x128xbf16>
    %cst_12 = arith.constant dense<0.000000e+00> : vector<1x128xf32>
    %18 = tpu.matmul %15, %17, %cst_12 {dimension_numbers = #tpu.dot_dimension_numbers<[1], [0], [0], [1], [0, 0, 1, 1], [], []>} : vector<1x128xbf16>, vector<128x128xbf16>, vector<1x128xf32> -> vector<1x128xf32>
    %19 = arith.addf %13, %18 : vector<1x128xf32>
    %20 = vector.extract_strided_slice %12 {offsets = [1, 0], sizes = [1, 128], strides = [1, 1]} : vector<25x128xf32> to vector<1x128xf32>
    %21 = arith.truncf %20 : vector<1x128xf32> to vector<1x128xbf16>
    %c1 = arith.constant 1 : index
    %c0_13 = arith.constant 0 : index
    %c0_14 = arith.constant 0 : index
    %22 = vector.load %arg4[%c1, %c0_13, %c0_14] : memref<25x128x128xbf16, #tpu.memory_space<vmem>>, vector<1x128x128xbf16>
    %23 = vector.shape_cast %22 : vector<1x128x128xbf16> to vector<128x128xbf16>
    %cst_15 = arith.constant dense<0.000000e+00> : vector<1x128xf32>
    %24 = tpu.matmul %21, %23, %cst_15 {dimension_numbers = #tpu.dot_dimension_numbers<[1], [0], [0], [1], [0, 0, 1, 1], [], []>} : vector<1x128xbf16>, vector<128x128xbf16>, vector<1x128xf32> -> vector<1x128xf32>
    %25 = arith.addf %19, %24 : vector<1x128xf32>
    %26 = vector.extract_strided_slice %12 {offsets = [2, 0], sizes = [1, 128], strides = [1, 1]} : vector<25x128xf32> to vector<1x128xf32>
    %27 = arith.truncf %26 : vector<1x128xf32> to vector<1x128xbf16>
    %c2 = arith.constant 2 : index
    %c0_16 = arith.constant 0 : index
    %c0_17 = arith.constant 0 : index
    %28 = vector.load %arg4[%c2, %c0_16, %c0_17] : memref<25x128x128xbf16, #tpu.memory_space<vmem>>, vector<1x128x128xbf16>
    %29 = vector.shape_cast %28 : vector<1x128x128xbf16> to vector<128x128xbf16>
    %cst_18 = arith.constant dense<0.000000e+00> : vector<1x128xf32>
    %30 = tpu.matmul %27, %29, %cst_18 {dimension_numbers = #tpu.dot_dimension_numbers<[1], [0], [0], [1], [0, 0, 1, 1], [], []>} : vector<1x128xbf16>, vector<128x128xbf16>, vector<1x128xf32> -> vector<1x128xf32>
    %31 = arith.addf %25, %30 : vector<1x128xf32>
    %32 = vector.extract_strided_slice %12 {offsets = [3, 0], sizes = [1, 128], strides = [1, 1]} : vector<25x128xf32> to vector<1x128xf32>
    %33 = arith.truncf %32 : vector<1x128xf32> to vector<1x128xbf16>
    %c3 = arith.constant 3 : index
    %c0_19 = arith.constant 0 : index
    %c0_20 = arith.constant 0 : index
    %34 = vector.load %arg4[%c3, %c0_19, %c0_20] : memref<25x128x128xbf16, #tpu.memory_space<vmem>>, vector<1x128x128xbf16>
    %35 = vector.shape_cast %34 : vector<1x128x128xbf16> to vector<128x128xbf16>
    %cst_21 = arith.constant dense<0.000000e+00> : vector<1x128xf32>
    %36 = tpu.matmul %33, %35, %cst_21 {dimension_numbers = #tpu.dot_dimension_numbers<[1], [0], [0], [1], [0, 0, 1, 1], [], []>} : vector<1x128xbf16>, vector<128x128xbf16>, vector<1x128xf32> -> vector<1x128xf32>
    %37 = arith.addf %31, %36 : vector<1x128xf32>
    %38 = vector.extract_strided_slice %12 {offsets = [4, 0], sizes = [1, 128], strides = [1, 1]} : vector<25x128xf32> to vector<1x128xf32>
    %39 = arith.truncf %38 : vector<1x128xf32> to vector<1x128xbf16>
    %c4 = arith.constant 4 : index
    %c0_22 = arith.constant 0 : index
    %c0_23 = arith.constant 0 : index
    %40 = vector.load %arg4[%c4, %c0_22, %c0_23] : memref<25x128x128xbf16, #tpu.memory_space<vmem>>, vector<1x128x128xbf16>
    %41 = vector.shape_cast %40 : vector<1x128x128xbf16> to vector<128x128xbf16>
    %cst_24 = arith.constant dense<0.000000e+00> : vector<1x128xf32>
    %42 = tpu.matmul %39, %41, %cst_24 {dimension_numbers = #tpu.dot_dimension_numbers<[1], [0], [0], [1], [0, 0, 1, 1], [], []>} : vector<1x128xbf16>, vector<128x128xbf16>, vector<1x128xf32> -> vector<1x128xf32>
    %43 = arith.addf %37, %42 : vector<1x128xf32>
    %44 = vector.extract_strided_slice %12 {offsets = [5, 0], sizes = [1, 128], strides = [1, 1]} : vector<25x128xf32> to vector<1x128xf32>
    %45 = arith.truncf %44 : vector<1x128xf32> to vector<1x128xbf16>
    %c5 = arith.constant 5 : index
    %c0_25 = arith.constant 0 : index
    %c0_26 = arith.constant 0 : index
    %46 = vector.load %arg4[%c5, %c0_25, %c0_26] : memref<25x128x128xbf16, #tpu.memory_space<vmem>>, vector<1x128x128xbf16>
    %47 = vector.shape_cast %46 : vector<1x128x128xbf16> to vector<128x128xbf16>
    %cst_27 = arith.constant dense<0.000000e+00> : vector<1x128xf32>
    %48 = tpu.matmul %45, %47, %cst_27 {dimension_numbers = #tpu.dot_dimension_numbers<[1], [0], [0], [1], [0, 0, 1, 1], [], []>} : vector<1x128xbf16>, vector<128x128xbf16>, vector<1x128xf32> -> vector<1x128xf32>
    %49 = arith.addf %43, %48 : vector<1x128xf32>
    %50 = vector.extract_strided_slice %12 {offsets = [6, 0], sizes = [1, 128], strides = [1, 1]} : vector<25x128xf32> to vector<1x128xf32>
    %51 = arith.truncf %50 : vector<1x128xf32> to vector<1x128xbf16>
    %c6 = arith.constant 6 : index
    %c0_28 = arith.constant 0 : index
    %c0_29 = arith.constant 0 : index
    %52 = vector.load %arg4[%c6, %c0_28, %c0_29] : memref<25x128x128xbf16, #tpu.memory_space<vmem>>, vector<1x128x128xbf16>
    %53 = vector.shape_cast %52 : vector<1x128x128xbf16> to vector<128x128xbf16>
    %cst_30 = arith.constant dense<0.000000e+00> : vector<1x128xf32>
    %54 = tpu.matmul %51, %53, %cst_30 {dimension_numbers = #tpu.dot_dimension_numbers<[1], [0], [0], [1], [0, 0, 1, 1], [], []>} : vector<1x128xbf16>, vector<128x128xbf16>, vector<1x128xf32> -> vector<1x128xf32>
    %55 = arith.addf %49, %54 : vector<1x128xf32>
    %56 = vector.extract_strided_slice %12 {offsets = [7, 0], sizes = [1, 128], strides = [1, 1]} : vector<25x128xf32> to vector<1x128xf32>
    %57 = arith.truncf %56 : vector<1x128xf32> to vector<1x128xbf16>
    %c7 = arith.constant 7 : index
    %c0_31 = arith.constant 0 : index
    %c0_32 = arith.constant 0 : index
    %58 = vector.load %arg4[%c7, %c0_31, %c0_32] : memref<25x128x128xbf16, #tpu.memory_space<vmem>>, vector<1x128x128xbf16>
    %59 = vector.shape_cast %58 : vector<1x128x128xbf16> to vector<128x128xbf16>
    %cst_33 = arith.constant dense<0.000000e+00> : vector<1x128xf32>
    %60 = tpu.matmul %57, %59, %cst_33 {dimension_numbers = #tpu.dot_dimension_numbers<[1], [0], [0], [1], [0, 0, 1, 1], [], []>} : vector<1x128xbf16>, vector<128x128xbf16>, vector<1x128xf32> -> vector<1x128xf32>
    %61 = arith.addf %55, %60 : vector<1x128xf32>
    %62 = vector.extract_strided_slice %12 {offsets = [8, 0], sizes = [1, 128], strides = [1, 1]} : vector<25x128xf32> to vector<1x128xf32>
    %63 = arith.truncf %62 : vector<1x128xf32> to vector<1x128xbf16>
    %c8 = arith.constant 8 : index
    %c0_34 = arith.constant 0 : index
    %c0_35 = arith.constant 0 : index
    %64 = vector.load %arg4[%c8, %c0_34, %c0_35] : memref<25x128x128xbf16, #tpu.memory_space<vmem>>, vector<1x128x128xbf16>
    %65 = vector.shape_cast %64 : vector<1x128x128xbf16> to vector<128x128xbf16>
    %cst_36 = arith.constant dense<0.000000e+00> : vector<1x128xf32>
    %66 = tpu.matmul %63, %65, %cst_36 {dimension_numbers = #tpu.dot_dimension_numbers<[1], [0], [0], [1], [0, 0, 1, 1], [], []>} : vector<1x128xbf16>, vector<128x128xbf16>, vector<1x128xf32> -> vector<1x128xf32>
    %67 = arith.addf %61, %66 : vector<1x128xf32>
    %68 = vector.extract_strided_slice %12 {offsets = [9, 0], sizes = [1, 128], strides = [1, 1]} : vector<25x128xf32> to vector<1x128xf32>
    %69 = arith.truncf %68 : vector<1x128xf32> to vector<1x128xbf16>
    %c9 = arith.constant 9 : index
    %c0_37 = arith.constant 0 : index
    %c0_38 = arith.constant 0 : index
    %70 = vector.load %arg4[%c9, %c0_37, %c0_38] : memref<25x128x128xbf16, #tpu.memory_space<vmem>>, vector<1x128x128xbf16>
    %71 = vector.shape_cast %70 : vector<1x128x128xbf16> to vector<128x128xbf16>
    %cst_39 = arith.constant dense<0.000000e+00> : vector<1x128xf32>
    %72 = tpu.matmul %69, %71, %cst_39 {dimension_numbers = #tpu.dot_dimension_numbers<[1], [0], [0], [1], [0, 0, 1, 1], [], []>} : vector<1x128xbf16>, vector<128x128xbf16>, vector<1x128xf32> -> vector<1x128xf32>
    %73 = arith.addf %67, %72 : vector<1x128xf32>
    %74 = vector.extract_strided_slice %12 {offsets = [10, 0], sizes = [1, 128], strides = [1, 1]} : vector<25x128xf32> to vector<1x128xf32>
    %75 = arith.truncf %74 : vector<1x128xf32> to vector<1x128xbf16>
    %c10 = arith.constant 10 : index
    %c0_40 = arith.constant 0 : index
    %c0_41 = arith.constant 0 : index
    %76 = vector.load %arg4[%c10, %c0_40, %c0_41] : memref<25x128x128xbf16, #tpu.memory_space<vmem>>, vector<1x128x128xbf16>
    %77 = vector.shape_cast %76 : vector<1x128x128xbf16> to vector<128x128xbf16>
    %cst_42 = arith.constant dense<0.000000e+00> : vector<1x128xf32>
    %78 = tpu.matmul %75, %77, %cst_42 {dimension_numbers = #tpu.dot_dimension_numbers<[1], [0], [0], [1], [0, 0, 1, 1], [], []>} : vector<1x128xbf16>, vector<128x128xbf16>, vector<1x128xf32> -> vector<1x128xf32>
    %79 = arith.addf %73, %78 : vector<1x128xf32>
    %80 = vector.extract_strided_slice %12 {offsets = [11, 0], sizes = [1, 128], strides = [1, 1]} : vector<25x128xf32> to vector<1x128xf32>
    %81 = arith.truncf %80 : vector<1x128xf32> to vector<1x128xbf16>
    %c11 = arith.constant 11 : index
    %c0_43 = arith.constant 0 : index
    %c0_44 = arith.constant 0 : index
    %82 = vector.load %arg4[%c11, %c0_43, %c0_44] : memref<25x128x128xbf16, #tpu.memory_space<vmem>>, vector<1x128x128xbf16>
    %83 = vector.shape_cast %82 : vector<1x128x128xbf16> to vector<128x128xbf16>
    %cst_45 = arith.constant dense<0.000000e+00> : vector<1x128xf32>
    %84 = tpu.matmul %81, %83, %cst_45 {dimension_numbers = #tpu.dot_dimension_numbers<[1], [0], [0], [1], [0, 0, 1, 1], [], []>} : vector<1x128xbf16>, vector<128x128xbf16>, vector<1x128xf32> -> vector<1x128xf32>
    %85 = arith.addf %79, %84 : vector<1x128xf32>
    %86 = vector.extract_strided_slice %12 {offsets = [12, 0], sizes = [1, 128], strides = [1, 1]} : vector<25x128xf32> to vector<1x128xf32>
    %87 = arith.truncf %86 : vector<1x128xf32> to vector<1x128xbf16>
    %c12 = arith.constant 12 : index
    %c0_46 = arith.constant 0 : index
    %c0_47 = arith.constant 0 : index
    %88 = vector.load %arg4[%c12, %c0_46, %c0_47] : memref<25x128x128xbf16, #tpu.memory_space<vmem>>, vector<1x128x128xbf16>
    %89 = vector.shape_cast %88 : vector<1x128x128xbf16> to vector<128x128xbf16>
    %cst_48 = arith.constant dense<0.000000e+00> : vector<1x128xf32>
    %90 = tpu.matmul %87, %89, %cst_48 {dimension_numbers = #tpu.dot_dimension_numbers<[1], [0], [0], [1], [0, 0, 1, 1], [], []>} : vector<1x128xbf16>, vector<128x128xbf16>, vector<1x128xf32> -> vector<1x128xf32>
    %91 = arith.addf %85, %90 : vector<1x128xf32>
    %92 = vector.extract_strided_slice %12 {offsets = [13, 0], sizes = [1, 128], strides = [1, 1]} : vector<25x128xf32> to vector<1x128xf32>
    %93 = arith.truncf %92 : vector<1x128xf32> to vector<1x128xbf16>
    %c13 = arith.constant 13 : index
    %c0_49 = arith.constant 0 : index
    %c0_50 = arith.constant 0 : index
    %94 = vector.load %arg4[%c13, %c0_49, %c0_50] : memref<25x128x128xbf16, #tpu.memory_space<vmem>>, vector<1x128x128xbf16>
    %95 = vector.shape_cast %94 : vector<1x128x128xbf16> to vector<128x128xbf16>
    %cst_51 = arith.constant dense<0.000000e+00> : vector<1x128xf32>
    %96 = tpu.matmul %93, %95, %cst_51 {dimension_numbers = #tpu.dot_dimension_numbers<[1], [0], [0], [1], [0, 0, 1, 1], [], []>} : vector<1x128xbf16>, vector<128x128xbf16>, vector<1x128xf32> -> vector<1x128xf32>
    %97 = arith.addf %91, %96 : vector<1x128xf32>
    %98 = vector.extract_strided_slice %12 {offsets = [14, 0], sizes = [1, 128], strides = [1, 1]} : vector<25x128xf32> to vector<1x128xf32>
    %99 = arith.truncf %98 : vector<1x128xf32> to vector<1x128xbf16>
    %c14 = arith.constant 14 : index
    %c0_52 = arith.constant 0 : index
    %c0_53 = arith.constant 0 : index
    %100 = vector.load %arg4[%c14, %c0_52, %c0_53] : memref<25x128x128xbf16, #tpu.memory_space<vmem>>, vector<1x128x128xbf16>
    %101 = vector.shape_cast %100 : vector<1x128x128xbf16> to vector<128x128xbf16>
    %cst_54 = arith.constant dense<0.000000e+00> : vector<1x128xf32>
    %102 = tpu.matmul %99, %101, %cst_54 {dimension_numbers = #tpu.dot_dimension_numbers<[1], [0], [0], [1], [0, 0, 1, 1], [], []>} : vector<1x128xbf16>, vector<128x128xbf16>, vector<1x128xf32> -> vector<1x128xf32>
    %103 = arith.addf %97, %102 : vector<1x128xf32>
    %104 = vector.extract_strided_slice %12 {offsets = [15, 0], sizes = [1, 128], strides = [1, 1]} : vector<25x128xf32> to vector<1x128xf32>
    %105 = arith.truncf %104 : vector<1x128xf32> to vector<1x128xbf16>
    %c15 = arith.constant 15 : index
    %c0_55 = arith.constant 0 : index
    %c0_56 = arith.constant 0 : index
    %106 = vector.load %arg4[%c15, %c0_55, %c0_56] : memref<25x128x128xbf16, #tpu.memory_space<vmem>>, vector<1x128x128xbf16>
    %107 = vector.shape_cast %106 : vector<1x128x128xbf16> to vector<128x128xbf16>
    %cst_57 = arith.constant dense<0.000000e+00> : vector<1x128xf32>
    %108 = tpu.matmul %105, %107, %cst_57 {dimension_numbers = #tpu.dot_dimension_numbers<[1], [0], [0], [1], [0, 0, 1, 1], [], []>} : vector<1x128xbf16>, vector<128x128xbf16>, vector<1x128xf32> -> vector<1x128xf32>
    %109 = arith.addf %103, %108 : vector<1x128xf32>
    %110 = vector.extract_strided_slice %12 {offsets = [16, 0], sizes = [1, 128], strides = [1, 1]} : vector<25x128xf32> to vector<1x128xf32>
    %111 = arith.truncf %110 : vector<1x128xf32> to vector<1x128xbf16>
    %c16 = arith.constant 16 : index
    %c0_58 = arith.constant 0 : index
    %c0_59 = arith.constant 0 : index
    %112 = vector.load %arg4[%c16, %c0_58, %c0_59] : memref<25x128x128xbf16, #tpu.memory_space<vmem>>, vector<1x128x128xbf16>
    %113 = vector.shape_cast %112 : vector<1x128x128xbf16> to vector<128x128xbf16>
    %cst_60 = arith.constant dense<0.000000e+00> : vector<1x128xf32>
    %114 = tpu.matmul %111, %113, %cst_60 {dimension_numbers = #tpu.dot_dimension_numbers<[1], [0], [0], [1], [0, 0, 1, 1], [], []>} : vector<1x128xbf16>, vector<128x128xbf16>, vector<1x128xf32> -> vector<1x128xf32>
    %115 = arith.addf %109, %114 : vector<1x128xf32>
    %116 = vector.extract_strided_slice %12 {offsets = [17, 0], sizes = [1, 128], strides = [1, 1]} : vector<25x128xf32> to vector<1x128xf32>
    %117 = arith.truncf %116 : vector<1x128xf32> to vector<1x128xbf16>
    %c17 = arith.constant 17 : index
    %c0_61 = arith.constant 0 : index
    %c0_62 = arith.constant 0 : index
    %118 = vector.load %arg4[%c17, %c0_61, %c0_62] : memref<25x128x128xbf16, #tpu.memory_space<vmem>>, vector<1x128x128xbf16>
    %119 = vector.shape_cast %118 : vector<1x128x128xbf16> to vector<128x128xbf16>
    %cst_63 = arith.constant dense<0.000000e+00> : vector<1x128xf32>
    %120 = tpu.matmul %117, %119, %cst_63 {dimension_numbers = #tpu.dot_dimension_numbers<[1], [0], [0], [1], [0, 0, 1, 1], [], []>} : vector<1x128xbf16>, vector<128x128xbf16>, vector<1x128xf32> -> vector<1x128xf32>
    %121 = arith.addf %115, %120 : vector<1x128xf32>
    %122 = vector.extract_strided_slice %12 {offsets = [18, 0], sizes = [1, 128], strides = [1, 1]} : vector<25x128xf32> to vector<1x128xf32>
    %123 = arith.truncf %122 : vector<1x128xf32> to vector<1x128xbf16>
    %c18 = arith.constant 18 : index
    %c0_64 = arith.constant 0 : index
    %c0_65 = arith.constant 0 : index
    %124 = vector.load %arg4[%c18, %c0_64, %c0_65] : memref<25x128x128xbf16, #tpu.memory_space<vmem>>, vector<1x128x128xbf16>
    %125 = vector.shape_cast %124 : vector<1x128x128xbf16> to vector<128x128xbf16>
    %cst_66 = arith.constant dense<0.000000e+00> : vector<1x128xf32>
    %126 = tpu.matmul %123, %125, %cst_66 {dimension_numbers = #tpu.dot_dimension_numbers<[1], [0], [0], [1], [0, 0, 1, 1], [], []>} : vector<1x128xbf16>, vector<128x128xbf16>, vector<1x128xf32> -> vector<1x128xf32>
    %127 = arith.addf %121, %126 : vector<1x128xf32>
    %128 = vector.extract_strided_slice %12 {offsets = [19, 0], sizes = [1, 128], strides = [1, 1]} : vector<25x128xf32> to vector<1x128xf32>
    %129 = arith.truncf %128 : vector<1x128xf32> to vector<1x128xbf16>
    %c19 = arith.constant 19 : index
    %c0_67 = arith.constant 0 : index
    %c0_68 = arith.constant 0 : index
    %130 = vector.load %arg4[%c19, %c0_67, %c0_68] : memref<25x128x128xbf16, #tpu.memory_space<vmem>>, vector<1x128x128xbf16>
    %131 = vector.shape_cast %130 : vector<1x128x128xbf16> to vector<128x128xbf16>
    %cst_69 = arith.constant dense<0.000000e+00> : vector<1x128xf32>
    %132 = tpu.matmul %129, %131, %cst_69 {dimension_numbers = #tpu.dot_dimension_numbers<[1], [0], [0], [1], [0, 0, 1, 1], [], []>} : vector<1x128xbf16>, vector<128x128xbf16>, vector<1x128xf32> -> vector<1x128xf32>
    %133 = arith.addf %127, %132 : vector<1x128xf32>
    %134 = vector.extract_strided_slice %12 {offsets = [20, 0], sizes = [1, 128], strides = [1, 1]} : vector<25x128xf32> to vector<1x128xf32>
    %135 = arith.truncf %134 : vector<1x128xf32> to vector<1x128xbf16>
    %c20 = arith.constant 20 : index
    %c0_70 = arith.constant 0 : index
    %c0_71 = arith.constant 0 : index
    %136 = vector.load %arg4[%c20, %c0_70, %c0_71] : memref<25x128x128xbf16, #tpu.memory_space<vmem>>, vector<1x128x128xbf16>
    %137 = vector.shape_cast %136 : vector<1x128x128xbf16> to vector<128x128xbf16>
    %cst_72 = arith.constant dense<0.000000e+00> : vector<1x128xf32>
    %138 = tpu.matmul %135, %137, %cst_72 {dimension_numbers = #tpu.dot_dimension_numbers<[1], [0], [0], [1], [0, 0, 1, 1], [], []>} : vector<1x128xbf16>, vector<128x128xbf16>, vector<1x128xf32> -> vector<1x128xf32>
    %139 = arith.addf %133, %138 : vector<1x128xf32>
    %140 = vector.extract_strided_slice %12 {offsets = [21, 0], sizes = [1, 128], strides = [1, 1]} : vector<25x128xf32> to vector<1x128xf32>
    %141 = arith.truncf %140 : vector<1x128xf32> to vector<1x128xbf16>
    %c21 = arith.constant 21 : index
    %c0_73 = arith.constant 0 : index
    %c0_74 = arith.constant 0 : index
    %142 = vector.load %arg4[%c21, %c0_73, %c0_74] : memref<25x128x128xbf16, #tpu.memory_space<vmem>>, vector<1x128x128xbf16>
    %143 = vector.shape_cast %142 : vector<1x128x128xbf16> to vector<128x128xbf16>
    %cst_75 = arith.constant dense<0.000000e+00> : vector<1x128xf32>
    %144 = tpu.matmul %141, %143, %cst_75 {dimension_numbers = #tpu.dot_dimension_numbers<[1], [0], [0], [1], [0, 0, 1, 1], [], []>} : vector<1x128xbf16>, vector<128x128xbf16>, vector<1x128xf32> -> vector<1x128xf32>
    %145 = arith.addf %139, %144 : vector<1x128xf32>
    %146 = vector.extract_strided_slice %12 {offsets = [22, 0], sizes = [1, 128], strides = [1, 1]} : vector<25x128xf32> to vector<1x128xf32>
    %147 = arith.truncf %146 : vector<1x128xf32> to vector<1x128xbf16>
    %c22 = arith.constant 22 : index
    %c0_76 = arith.constant 0 : index
    %c0_77 = arith.constant 0 : index
    %148 = vector.load %arg4[%c22, %c0_76, %c0_77] : memref<25x128x128xbf16, #tpu.memory_space<vmem>>, vector<1x128x128xbf16>
    %149 = vector.shape_cast %148 : vector<1x128x128xbf16> to vector<128x128xbf16>
    %cst_78 = arith.constant dense<0.000000e+00> : vector<1x128xf32>
    %150 = tpu.matmul %147, %149, %cst_78 {dimension_numbers = #tpu.dot_dimension_numbers<[1], [0], [0], [1], [0, 0, 1, 1], [], []>} : vector<1x128xbf16>, vector<128x128xbf16>, vector<1x128xf32> -> vector<1x128xf32>
    %151 = arith.addf %145, %150 : vector<1x128xf32>
    %152 = vector.extract_strided_slice %12 {offsets = [23, 0], sizes = [1, 128], strides = [1, 1]} : vector<25x128xf32> to vector<1x128xf32>
    %153 = arith.truncf %152 : vector<1x128xf32> to vector<1x128xbf16>
    %c23 = arith.constant 23 : index
    %c0_79 = arith.constant 0 : index
    %c0_80 = arith.constant 0 : index
    %154 = vector.load %arg4[%c23, %c0_79, %c0_80] : memref<25x128x128xbf16, #tpu.memory_space<vmem>>, vector<1x128x128xbf16>
    %155 = vector.shape_cast %154 : vector<1x128x128xbf16> to vector<128x128xbf16>
    %cst_81 = arith.constant dense<0.000000e+00> : vector<1x128xf32>
    %156 = tpu.matmul %153, %155, %cst_81 {dimension_numbers = #tpu.dot_dimension_numbers<[1], [0], [0], [1], [0, 0, 1, 1], [], []>} : vector<1x128xbf16>, vector<128x128xbf16>, vector<1x128xf32> -> vector<1x128xf32>
    %157 = arith.addf %151, %156 : vector<1x128xf32>
    %158 = vector.extract_strided_slice %12 {offsets = [24, 0], sizes = [1, 128], strides = [1, 1]} : vector<25x128xf32> to vector<1x128xf32>
    %159 = arith.truncf %158 : vector<1x128xf32> to vector<1x128xbf16>
    %c24 = arith.constant 24 : index
    %c0_82 = arith.constant 0 : index
    %c0_83 = arith.constant 0 : index
    %160 = vector.load %arg4[%c24, %c0_82, %c0_83] : memref<25x128x128xbf16, #tpu.memory_space<vmem>>, vector<1x128x128xbf16>
    %161 = vector.shape_cast %160 : vector<1x128x128xbf16> to vector<128x128xbf16>
    %cst_84 = arith.constant dense<0.000000e+00> : vector<1x128xf32>
    %162 = tpu.matmul %159, %161, %cst_84 {dimension_numbers = #tpu.dot_dimension_numbers<[1], [0], [0], [1], [0, 0, 1, 1], [], []>} : vector<1x128xbf16>, vector<128x128xbf16>, vector<1x128xf32> -> vector<1x128xf32>
    %163 = arith.addf %157, %162 : vector<1x128xf32>
    %cst_85 = arith.constant 0.000000e+00 : f32
    %164 = vector.broadcast %cst_85 : f32 to vector<1x128xf32>
    %165 = arith.maximumf %163, %164 : vector<1x128xf32>
    %166 = arith.truncf %165 : vector<1x128xf32> to vector<1x128xbf16>
    %c0_86 = arith.constant 0 : index
    %c0_87 = arith.constant 0 : index
    %167 = vector.load %arg6[%c0_86, %c0_87] : memref<128x128xbf16, #tpu.memory_space<vmem>>, vector<128x128xbf16>
    %cst_88 = arith.constant dense<0.000000e+00> : vector<1x128xf32>
    %168 = tpu.matmul %166, %167, %cst_88 {dimension_numbers = #tpu.dot_dimension_numbers<[1], [0], [0], [1], [0, 0, 1, 1], [], []>} : vector<1x128xbf16>, vector<128x128xbf16>, vector<1x128xf32> -> vector<1x128xf32>
    %c0_89 = arith.constant 0 : index
    %c0_90 = arith.constant 0 : index
    %169 = vector.load %arg7[%c0_89, %c0_90] : memref<1x128xf32, #tpu.memory_space<vmem>>, vector<1x128xf32>
    %170 = arith.addf %168, %169 : vector<1x128xf32>
    %cst_91 = arith.constant 0.000000e+00 : f32
    %171 = vector.broadcast %cst_91 : f32 to vector<1x128xf32>
    %172 = arith.maximumf %170, %171 : vector<1x128xf32>
    %173 = arith.truncf %172 : vector<1x128xf32> to vector<1x128xbf16>
    %c0_92 = arith.constant 0 : index
    %c0_93 = arith.constant 0 : index
    %174 = vector.load %arg8[%c0_92, %c0_93] : memref<128x128xbf16, #tpu.memory_space<vmem>>, vector<128x128xbf16>
    %cst_94 = arith.constant dense<0.000000e+00> : vector<1x128xf32>
    %175 = tpu.matmul %173, %174, %cst_94 {dimension_numbers = #tpu.dot_dimension_numbers<[1], [0], [0], [1], [0, 0, 1, 1], [], []>} : vector<1x128xbf16>, vector<128x128xbf16>, vector<1x128xf32> -> vector<1x128xf32>
    %c0_95 = arith.constant 0 : index
    %c0_96 = arith.constant 0 : index
    %176 = vector.load %arg9[%c0_95, %c0_96] : memref<1x128xf32, #tpu.memory_space<vmem>>, vector<1x128xf32>
    %177 = arith.addf %175, %176 : vector<1x128xf32>
    %c0_97 = arith.constant 0 : index
    %c0_98 = arith.constant 0 : index
    %c0_99 = arith.constant 0 : index
    %178 = vector.load %arg10[%c0_97, %c0_98, %c0_99] : memref<1x1x128xf32, #tpu.memory_space<vmem>>, vector<1x1x128xf32>
    %179 = vector.shape_cast %178 : vector<1x1x128xf32> to vector<1x128xf32>
    %180 = vector.shape_cast %177 : vector<1x128xf32> to vector<1x1x128xf32>
    tpu.vector_store %arg10[%c0_97, %c0_98, %c0_99], %180 {strides = array<i32>} : memref<1x1x128xf32, #tpu.memory_space<vmem>>, vector<1x1x128xf32>,
    return
  }
  func.func @transform_0(%arg0: i32) -> (i32, i32, i32) {
    %c0_i32 = arith.constant 0 : i32
    %c0_i32_0 = arith.constant 0 : i32
    %c0_i32_1 = arith.constant 0 : i32
    return %arg0, %c0_i32, %c0_i32_0 : i32, i32, i32
  }
  func.func @transform_1(%arg0: i32) -> (i32, i32) {
    %c0_i32 = arith.constant 0 : i32
    %c0_i32_0 = arith.constant 0 : i32
    %c0_i32_1 = arith.constant 0 : i32
    return %c0_i32, %c0_i32_0 : i32, i32
  }
  func.func @transform_2(%arg0: i32) -> (i32, i32) {
    %c0_i32 = arith.constant 0 : i32
    %c0_i32_0 = arith.constant 0 : i32
    %c0_i32_1 = arith.constant 0 : i32
    return %c0_i32, %c0_i32_0 : i32, i32
  }
  func.func @transform_3(%arg0: i32) -> (i32, i32, i32) {
    %c0_i32 = arith.constant 0 : i32
    %c0_i32_0 = arith.constant 0 : i32
    %c0_i32_1 = arith.constant 0 : i32
    %c0_i32_2 = arith.constant 0 : i32
    return %c0_i32, %c0_i32_0, %c0_i32_1 : i32, i32, i32
  }
  func.func @transform_4(%arg0: i32) -> (i32, i32) {
    %c0_i32 = arith.constant 0 : i32
    %c0_i32_0 = arith.constant 0 : i32
    %c0_i32_1 = arith.constant 0 : i32
    return %c0_i32, %c0_i32_0 : i32, i32
  }
  func.func @transform_5(%arg0: i32) -> (i32, i32) {
    %c0_i32 = arith.constant 0 : i32
    %c0_i32_0 = arith.constant 0 : i32
    %c0_i32_1 = arith.constant 0 : i32
    return %c0_i32, %c0_i32_0 : i32, i32
  }
  func.func @transform_6(%arg0: i32) -> (i32, i32) {
    %c0_i32 = arith.constant 0 : i32
    %c0_i32_0 = arith.constant 0 : i32
    %c0_i32_1 = arith.constant 0 : i32
    return %c0_i32, %c0_i32_0 : i32, i32
  }
  func.func @transform_7(%arg0: i32) -> (i32, i32) {
    %c0_i32 = arith.constant 0 : i32
    %c0_i32_0 = arith.constant 0 : i32
    %c0_i32_1 = arith.constant 0 : i32
    return %c0_i32, %c0_i32_0 : i32, i32
  }
  func.func @transform_8(%arg0: i32) -> (i32, i32) {
    %c0_i32 = arith.constant 0 : i32
    %c0_i32_0 = arith.constant 0 : i32
    %c0_i32_1 = arith.constant 0 : i32
    return %c0_i32, %c0_i32_0 : i32, i32
  }
  func.func @transform_9(%arg0: i32) -> (i32, i32, i32) {
    %c0_i32 = arith.constant 0 : i32
    %c0_i32_0 = arith.constant 0 : i32
    %c0_i32_1 = arith.constant 0 : i32
    return %arg0, %c0_i32, %c0_i32_0 : i32, i32, i32
  }
}

</mosaic_0001>

<llo_original>
// kernel: net_forward.2
$region0: #{net_forward.2}
  #allocation0 [shape = 'u32[]', space=smem, size = 0x4, offset = 0x4, fixed_abs, tag = 'smem constant byte address 0x4 - core index']
  #allocation1 [shape = 'u32[144,128]{1,0:T(1,128)}', space=vmem, size = 0x12000, scoped, tag = 'internal scratch']
  %s0 = inlined_call_operand.vmem [shape: bf16[2,196,128], index: 0, kind: input, shape index: {}]
  %s1 = inlined_call_operand.vmem [shape: bf16[128,128], index: 1, kind: input, shape index: {}]
  %s2 = inlined_call_operand.vmem [shape: f32[1,128], index: 2, kind: input, shape index: {}]
  %s3 = inlined_call_operand.vmem [shape: bf16[2,196,128], index: 3, kind: output, shape index: {}]
  %s4 = sld [smem:[#allocation0]]
  $region45: #{net_forward.2} parent=0
    _
  %s6 = ssub.s32 1, %s4
  %s7 = scalar_select 0, %s6, %s4
  loop: start=0, step=1, limit=4
  $region2: #{net_forward.2} parent=0 // loop_pre_header
    _
  $region3: #{net_forward.2} parent=0 // loop_header
    %s9 = sphi 0, %s13
    %p10 = scmp.ge.s32.totalorder %s9, 4
    %s19 = sphi 0, %s21
    %s22 = sphi 0, %s19
    %s23 = sphi 0, %s22
    %s39 = sphi 0, %s23
    %s43 = sphi 0, %s43
    %s45 = sphi 0, %s43
    %s46 = sphi 0, %s45
    %s60 = sphi 0, %s46
    %s64 = sphi 0, %s64
    %s66 = sphi 0, %s64
    %s67 = sphi 0, %s66
    %s81 = sphi 0, %s67
    %s87 = sphi 0, %s89
    %s90 = sphi 0, %s87
    %s91 = sphi 0, %s90
    %s107 = sphi 0, %s91
  $region4: #{net_forward.2} parent=0 // loop_header_branch
    %12 = sbr.rel (%p10) target = $region8
  $region5: #{net_forward.2} parent=0 // loop_body
    %s14 = ssub.s32 %s9, 1
    %s15 = ssub.s32 %s9, 2
    %s16 = sadd.s32 %s9, 1
    %s17 = ssub.s32 %s9, %s16
    %p18 = scmp.eq.s32.totalorder %s17, 0
    %s20 = sadd.s32 %s19, 1
    %s21 = scalar_select %p18, %s19, %s20
    %p24 = pneg %p18
    %p25 = scmp.eq.s32.totalorder %s9, 1
    %p26 = por %p24, %p25
    %p27 = scmp.ne.s32.totalorder %s19, %s22
    %p28 = scmp.eq.s32.totalorder %s9, 0
    %p29 = por %p27, %p28
    %p30 = scmp.ne.s32.totalorder %s19, %s22
    %p31 = scmp.eq.s32.totalorder %s14, 1
    %p32 = por %p30, %p31
    %p33 = scmp.ne.s32.totalorder %s22, %s23
    %p34 = scmp.eq.s32.totalorder %s14, 0
    %p35 = por %p33, %p34
    %p36 = scmp.ne.s32.totalorder %s22, %s23
    %p37 = scmp.eq.s32.totalorder %s15, 1
    %p38 = por %p36, %p37
    %p40 = scmp.ne.s32.totalorder %s23, %s39
    %p41 = scmp.eq.s32.totalorder %s15, 0
    %p42 = por %p40, %p41
    %s44 = sadd.s32 %s43, 1
    %p47 = scmp.eq.s32.totalorder %s9, 1
    %p48 = scmp.ne.s32.totalorder %s43, %s45
    %p49 = scmp.eq.s32.totalorder %s9, 0
    %p50 = por %p48, %p49
    %p51 = scmp.ne.s32.totalorder %s43, %s45
    %p52 = scmp.eq.s32.totalorder %s14, 1
    %p53 = por %p51, %p52
    %p54 = scmp.ne.s32.totalorder %s45, %s46
    %p55 = scmp.eq.s32.totalorder %s14, 0
    %p56 = por %p54, %p55
    %p57 = scmp.ne.s32.totalorder %s45, %s46
    %p58 = scmp.eq.s32.totalorder %s15, 1
    %p59 = por %p57, %p58
    %p61 = scmp.ne.s32.totalorder %s46, %s60
    %p62 = scmp.eq.s32.totalorder %s15, 0
    %p63 = por %p61, %p62
    %s65 = sadd.s32 %s64, 1
    %p68 = scmp.eq.s32.totalorder %s9, 1
    %p69 = scmp.ne.s32.totalorder %s64, %s66
    %p70 = scmp.eq.s32.totalorder %s9, 0
    %p71 = por %p69, %p70
    %p72 = scmp.ne.s32.totalorder %s64, %s66
    %p73 = scmp.eq.s32.totalorder %s14, 1
    %p74 = por %p72, %p73
    %p75 = scmp.ne.s32.totalorder %s66, %s67
    %p76 = scmp.eq.s32.totalorder %s14, 0
    %p77 = por %p75, %p76
    %p78 = scmp.ne.s32.totalorder %s66, %s67
    %p79 = scmp.eq.s32.totalorder %s15, 1
    %p80 = por %p78, %p79
    %p82 = scmp.ne.s32.totalorder %s67, %s81
    %p83 = scmp.eq.s32.totalorder %s15, 0
    %p84 = por %p82, %p83
    %s85 = ssub.s32 %s9, %s16
    %p86 = scmp.eq.s32.totalorder %s85, 0
    %s88 = sadd.s32 %s87, 1
    %s89 = scalar_select %p86, %s87, %s88
    %p92 = pneg %p86
    %p93 = scmp.eq.s32.totalorder %s9, 1
    %p94 = por %p92, %p93
    %p95 = scmp.ne.s32.totalorder %s87, %s90
    %p96 = scmp.eq.s32.totalorder %s9, 0
    %p97 = por %p95, %p96
    %p98 = scmp.ne.s32.totalorder %s87, %s90
    %p99 = scmp.eq.s32.totalorder %s14, 1
    %p100 = por %p98, %p99
    %p101 = scmp.ne.s32.totalorder %s90, %s91
    %p102 = scmp.eq.s32.totalorder %s14, 0
    %p103 = por %p101, %p102
    %p104 = scmp.ne.s32.totalorder %s90, %s91
    %p105 = scmp.eq.s32.totalorder %s15, 1
    %p106 = por %p104, %p105
    %p108 = scmp.ne.s32.totalorder %s91, %s107
    %p109 = scmp.eq.s32.totalorder %s15, 0
    %p110 = por %p108, %p109
    %p111 = scmp.le.s32.totalorder 1, %s9
    %p112 = scmp.lt.s32.totalorder %s9, 3
    %p113 = pnand %p111, %p112
    %p114 = pneg %p113
    // Predicated region
    $region9: #{net_forward.2} parent=5 // pred_check
      _
    $region10: #{net_forward.2} parent=5 // pred_check_branch
      %116 = sbr.rel (%p113) target = $region12
    $region11: #{net_forward.2} parent=5 // pred_region
      %s117 = ssub.s32 %s9, 1
      // Predicated region
      $region13: #{net_forward.2} parent=11 // pred_check
        %p118 = pneg %p56
      $region14: #{net_forward.2} parent=11 // pred_check_branch
        %120 = sbr.rel (%p118) target = $region16
      $region15: #{net_forward.2} parent=11 // pred_region
        _
      $region16: #{net_forward.2} parent=11 // pred_fallthru
        _
      // Predicated region
      $region17: #{net_forward.2} parent=11 // pred_check
        %p121 = pneg %p77
      $region18: #{net_forward.2} parent=11 // pred_check_branch
        %123 = sbr.rel (%p121) target = $region20
      $region19: #{net_forward.2} parent=11 // pred_region
        _
      $region20: #{net_forward.2} parent=11 // pred_fallthru
        _
    $region12: #{net_forward.2} parent=5 // pred_fallthru
      _
    %p124 = scmp.lt.s32.totalorder %s9, 2
    // Predicated region
    $region21: #{net_forward.2} parent=5 // pred_check
      %p125 = pneg %p124
    $region22: #{net_forward.2} parent=5 // pred_check_branch
      %127 = sbr.rel (%p125) target = $region24
    $region23: #{net_forward.2} parent=5 // pred_region
      // Predicated region
      $region25: #{net_forward.2} parent=23 // pred_check
        %p128 = pneg %p29
      $region26: #{net_forward.2} parent=23 // pred_check_branch
        %130 = sbr.rel (%p128) target = $region28
      $region27: #{net_forward.2} parent=23 // pred_region
        %p131 = scmp.lt.s32.totalorder %s9, 1
        %s132 = scalar_select %p131, %s9, 1
        %s133 = smul.addr %s132, 25
        %s134 = smul.addr %s133, 4
        %s135 = scalar_lea.vmem %s0, %s134
      $region28: #{net_forward.2} parent=23 // pred_fallthru
        _
    $region24: #{net_forward.2} parent=5 // pred_fallthru
      _
    %p136 = scmp.le.s32.totalorder 1, %s9
    %p137 = scmp.lt.s32.totalorder %s9, 3
    %p138 = pnand %p136, %p137
    %p139 = pneg %p138
    // Predicated region
    $region29: #{net_forward.2} parent=5 // pred_check
      _
    $region30: #{net_forward.2} parent=5 // pred_check_branch
      %141 = sbr.rel (%p138) target = $region32
    $region31: #{net_forward.2} parent=5 // pred_region
      %s142 = ssub.s32 %s9, 1
      %p143 = scmp.lt.s32.totalorder %s14, 1
      %s144 = scalar_select %p143, %s14, 1
      %s145 = smul.addr %s144, 25
      %s146 = smul.addr %s145, 4
      %s147 = scalar_lea.vmem %s0, %s146
      %p148 = pneg %p35
      %p149 = pneg %p32
      %p150 = pneg %p56
      %p151 = pneg %p53
      %p152 = pneg %p77
      %p153 = pneg %p74
      %p154 = pneg %p103
      %p155 = pneg %p100
      %p156 = scmp.lt.s32.totalorder %s14, 1
      %s157 = scalar_select %p156, %s14, 1
      %s158 = smul.addr %s157, 25
      %s159 = smul.addr %s158, 4
      %s160 = scalar_lea.vmem %s3, %s159
      %p161 = scmp.lt.s32.totalorder %s14, 1
      %s162 = scalar_select %p161, %s14, 1
      %s163 = smul.addr %s162, 25
      %s164 = smul.addr %s163, 4
      %s165 = scalar_lea.vmem %s0, %s164
      %p166 = scmp.lt.s32.totalorder %s14, 1
      %s167 = scalar_select %p166, %s14, 1
      %s168 = smul.addr %s167, 25
      %s169 = smul.addr %s168, 4
      %s170 = scalar_lea.vmem %s3, %s169
      %v172 = vld [vmem:[%s165] sm:$0xf]
      %v173 = vld [vmem:[%s165 + $0x4] sm:$0xf]
      %v174 = vld [vmem:[%s165 + $0x8] sm:$0xf]
      %v175 = vld [vmem:[%s165 + $0xc] sm:$0xf]
      %v176 = vld [vmem:[%s165 + $0x10] sm:$0xf]
      %v177 = vld [vmem:[%s165 + $0x14] sm:$0xf]
      %v178 = vld [vmem:[%s165 + $0x18] sm:$0xf]
      %v179 = vld [vmem:[%s165 + $0x1c] sm:$0xf]
      %v180 = vld [vmem:[%s165 + $0x20] sm:$0xf]
      %v181 = vld [vmem:[%s165 + $0x24] sm:$0xf]
      %v182 = vld [vmem:[%s165 + $0x28] sm:$0xf]
      %v183 = vld [vmem:[%s165 + $0x2c] sm:$0xf]
      %v184 = vld [vmem:[%s165 + $0x30] sm:$0xf]
      %v185 = vld [vmem:[%s165 + $0x34] sm:$0xf]
      %v186 = vld [vmem:[%s165 + $0x38] sm:$0xf]
      %v187 = vld [vmem:[%s165 + $0x3c] sm:$0xf]
      %v188 = vld [vmem:[%s165 + $0x40] sm:$0xf]
      %v189 = vld [vmem:[%s165 + $0x44] sm:$0xf]
      %v190 = vld [vmem:[%s165 + $0x48] sm:$0xf]
      %v191 = vld [vmem:[%s165 + $0x4c] sm:$0xf]
      %v192 = vld [vmem:[%s165 + $0x50] sm:$0xf]
      %v193 = vld [vmem:[%s165 + $0x54] sm:$0xf]
      %v194 = vld [vmem:[%s165 + $0x58] sm:$0xf]
      %v195 = vld [vmem:[%s165 + $0x5c] sm:$0xf]
      %v196 = vld [vmem:[%s165 + $0x60] sm:$0x3]
      %v197 = vld [vmem:[%s1] sm:$0xf]
      %v198 = vld [vmem:[%s1 + $0x4] sm:$0xf]
      %v199 = vld [vmem:[%s1 + $0x8] sm:$0xf]
      %v200 = vld [vmem:[%s1 + $0xc] sm:$0xf]
      %v201 = vld [vmem:[%s1 + $0x10] sm:$0xf]
      %v202 = vld [vmem:[%s1 + $0x14] sm:$0xf]
      %v203 = vld [vmem:[%s1 + $0x18] sm:$0xf]
      %v204 = vld [vmem:[%s1 + $0x1c] sm:$0xf]
      %v205 = vld [vmem:[%s1 + $0x20] sm:$0xf]
      %v206 = vld [vmem:[%s1 + $0x24] sm:$0xf]
      %v207 = vld [vmem:[%s1 + $0x28] sm:$0xf]
      %v208 = vld [vmem:[%s1 + $0x2c] sm:$0xf]
      %v209 = vld [vmem:[%s1 + $0x30] sm:$0xf]
      %v210 = vld [vmem:[%s1 + $0x34] sm:$0xf]
      %v211 = vld [vmem:[%s1 + $0x38] sm:$0xf]
      %v212 = vld [vmem:[%s1 + $0x3c] sm:$0xf]
      %v213 = vld [vmem:[%s2] sm:$0x1]
      %v215 = vlaneseq
      %v216 = vshrl.u32 %v215, 7
      %v217 = vsub.s32 0, %v216
      %v218 = vrot.slane %v213, %v217
      %v245 = vunpack.c.l.b16 %v172
      %v246 = vunpack.c.l.b16 %v173
      %v247 = vunpack.c.l.b16 %v174
      %v248 = vunpack.c.l.b16 %v175
      %v249 = vunpack.c.l.b16 %v176
      %v250 = vunpack.c.l.b16 %v177
      %v251 = vunpack.c.l.b16 %v178
      %v252 = vunpack.c.l.b16 %v179
      %v253 = vunpack.c.l.b16 %v180
      %v254 = vunpack.c.l.b16 %v181
      %v255 = vunpack.c.l.b16 %v182
      %v256 = vunpack.c.l.b16 %v183
      %v257 = vunpack.c.l.b16 %v184
      %v258 = vunpack.c.l.b16 %v185
      %v259 = vunpack.c.l.b16 %v186
      %v260 = vunpack.c.l.b16 %v187
      %v261 = vunpack.c.l.b16 %v188
      %v262 = vunpack.c.l.b16 %v189
      %v263 = vunpack.c.l.b16 %v190
      %v264 = vunpack.c.l.b16 %v191
      %v265 = vunpack.c.l.b16 %v192
      %v266 = vunpack.c.l.b16 %v193
      %v267 = vunpack.c.l.b16 %v194
      %v268 = vunpack.c.l.b16 %v195
      %v269 = vunpack.c.l.b16 %v196
      %v270 = vpack.c.b16 %v246, %v245
      %v271 = vpack.c.b16 %v248, %v247
      %v272 = vpack.c.b16 %v250, %v249
      %v273 = vpack.c.b16 %v252, %v251
      %v274 = vpack.c.b16 %v254, %v253
      %v275 = vpack.c.b16 %v256, %v255
      %v276 = vpack.c.b16 %v258, %v257
      %v277 = vpack.c.b16 %v260, %v259
      %v278 = vpack.c.b16 %v262, %v261
      %v279 = vpack.c.b16 %v264, %v263
      %v280 = vpack.c.b16 %v266, %v265
      %v281 = vpack.c.b16 %v268, %v267
      %v282 = vpack.c.b16 %v269, %v269
      %v312 = vunpack.c.l.b16 %v197
      %v313 = vunpack.c.l.b16 %v198
      %v314 = vunpack.c.l.b16 %v199
      %v315 = vunpack.c.l.b16 %v200
      %v316 = vunpack.c.l.b16 %v201
      %v317 = vunpack.c.l.b16 %v202
      %v318 = vunpack.c.l.b16 %v203
      %v319 = vunpack.c.l.b16 %v204
      %v320 = vunpack.c.l.b16 %v205
      %v321 = vunpack.c.l.b16 %v206
      %v322 = vunpack.c.l.b16 %v207
      %v323 = vunpack.c.l.b16 %v208
      %v324 = vunpack.c.l.b16 %v209
      %v325 = vunpack.c.l.b16 %v210
      %v326 = vunpack.c.l.b16 %v211
      %v327 = vunpack.c.l.b16 %v212
      %v328 = vpack.c.b16 %v313, %v312
      %v329 = vpack.c.b16 %v315, %v314
      %v330 = vpack.c.b16 %v317, %v316
      %v331 = vpack.c.b16 %v319, %v318
      %v332 = vpack.c.b16 %v321, %v320
      %v333 = vpack.c.b16 %v323, %v322
      %v334 = vpack.c.b16 %v325, %v324
      %v335 = vpack.c.b16 %v327, %v326
      %344 = vmatprep.subr.bf16.mxu0 0
      %345 = vmatpush1.bf16.msra.mxu0 %v335
      %346 = vmatprep.subr.bf16.mxu0 0
      %347 = vmatpush1.bf16.msra.mxu0 %v334
      %348 = vmatprep.subr.bf16.mxu0 0
      %349 = vmatpush1.bf16.msra.mxu0 %v333
      %350 = vmatprep.subr.bf16.mxu0 0
      %351 = vmatpush1.bf16.msra.mxu0 %v332
      %352 = vmatprep.subr.bf16.mxu0 0
      %353 = vmatpush1.bf16.msra.mxu0 %v331
      %354 = vmatprep.subr.bf16.mxu0 0
      %355 = vmatpush1.bf16.msra.mxu0 %v330
      %356 = vmatprep.subr.bf16.mxu0 0
      %357 = vmatpush1.bf16.msra.mxu0 %v329
      %358 = vmatprep.subr.bf16.mxu0 0
      %359 = vmatpush1.bf16.msra.mxu0 %v328
      %360 = vmatprep.subr.bf16.mxu0 0
      %361 = vmatpush2.bf16.msra.mxu0 0
      %362 = vmatprep.subr.bf16.mxu0 0
      %363 = vmatpush2.bf16.msra.mxu0 0
      %364 = vmatprep.subr.bf16.mxu0 0
      %365 = vmatpush2.bf16.msra.mxu0 0
      %366 = vmatprep.subr.bf16.mxu0 0
      %367 = vmatpush2.bf16.msra.mxu0 0
      %368 = vmatprep.subr.bf16.mxu0 0
      %369 = vmatpush2.bf16.msra.mxu0 0
      %370 = vmatprep.subr.bf16.mxu0 0
      %371 = vmatpush2.bf16.msra.mxu0 0
      %372 = vmatprep.subr.bf16.mxu0 0
      %373 = vmatpush2.bf16.msra.mxu0 0
      %374 = vmatprep.subr.bf16.mxu0 0
      %375 = vmatpush2.bf16.msra.mxu0 0
      %376 = vmatprep.mubr.bf16.mxu0 0
      %377 = vmatmul.mubr.bf16.gmra.mxu0 %v270
      %v378 = vpop.f32.mrf.mxu0
      %v379 = vadd.f32 %v218, %v378
      %v380 = vpop.f32.mrf.mxu0
      %v381 = vpop.f32.mrf.mxu0
      %v382 = vadd.f32 %v218, %v381
      %v383 = vpop.f32.mrf.mxu0
      %384 = vmatprep.mubr.bf16.mxu0 0
      %385 = vmatmul.mubr.bf16.gmra.mxu0 %v271
      %v386 = vpop.f32.mrf.mxu0
      %v387 = vadd.f32 %v218, %v386
      %v388 = vpop.f32.mrf.mxu0
      %v389 = vpop.f32.mrf.mxu0
      %v390 = vadd.f32 %v218, %v389
      %v391 = vpop.f32.mrf.mxu0
      %392 = vmatprep.mubr.bf16.mxu0 0
      %393 = vmatmul.mubr.bf16.gmra.mxu0 %v272
      %v394 = vpop.f32.mrf.mxu0
      %v395 = vadd.f32 %v218, %v394
      %v396 = vpop.f32.mrf.mxu0
      %v397 = vpop.f32.mrf.mxu0
      %v398 = vadd.f32 %v218, %v397
      %v399 = vpop.f32.mrf.mxu0
      %400 = vmatprep.mubr.bf16.mxu0 0
      %401 = vmatmul.mubr.bf16.gmra.mxu0 %v273
      %v402 = vpop.f32.mrf.mxu0
      %v403 = vadd.f32 %v218, %v402
      %v404 = vpop.f32.mrf.mxu0
      %v405 = vpop.f32.mrf.mxu0
      %v406 = vadd.f32 %v218, %v405
      %v407 = vpop.f32.mrf.mxu0
      %408 = vmatprep.mubr.bf16.mxu0 0
      %409 = vmatmul.mubr.bf16.gmra.mxu0 %v274
      %v410 = vpop.f32.mrf.mxu0
      %v411 = vadd.f32 %v218, %v410
      %v412 = vpop.f32.mrf.mxu0
      %v413 = vpop.f32.mrf.mxu0
      %v414 = vadd.f32 %v218, %v413
      %v415 = vpop.f32.mrf.mxu0
      %416 = vmatprep.mubr.bf16.mxu0 0
      %417 = vmatmul.mubr.bf16.gmra.mxu0 %v275
      %v418 = vpop.f32.mrf.mxu0
      %v419 = vadd.f32 %v218, %v418
      %v420 = vpop.f32.mrf.mxu0
      %v421 = vpop.f32.mrf.mxu0
      %v422 = vadd.f32 %v218, %v421
      %v423 = vpop.f32.mrf.mxu0
      %424 = vmatprep.mubr.bf16.mxu0 0
      %425 = vmatmul.mubr.bf16.gmra.mxu0 %v276
      %v426 = vpop.f32.mrf.mxu0
      %v427 = vadd.f32 %v218, %v426
      %v428 = vpop.f32.mrf.mxu0
      %v429 = vpop.f32.mrf.mxu0
      %v430 = vadd.f32 %v218, %v429
      %v431 = vpop.f32.mrf.mxu0
      %432 = vmatprep.mubr.bf16.mxu0 0
      %433 = vmatmul.mubr.bf16.gmra.mxu0 %v277
      %v434 = vpop.f32.mrf.mxu0
      %v435 = vadd.f32 %v218, %v434
      %v436 = vpop.f32.mrf.mxu0
      %v437 = vpop.f32.mrf.mxu0
      %v438 = vadd.f32 %v218, %v437
      %v439 = vpop.f32.mrf.mxu0
      %440 = vmatprep.mubr.bf16.mxu0 0
      %441 = vmatmul.mubr.bf16.gmra.mxu0 %v278
      %v442 = vpop.f32.mrf.mxu0
      %v443 = vadd.f32 %v218, %v442
      %v444 = vpop.f32.mrf.mxu0
      %v445 = vpop.f32.mrf.mxu0
      %v446 = vadd.f32 %v218, %v445
      %v447 = vpop.f32.mrf.mxu0
      %448 = vmatprep.mubr.bf16.mxu0 0
      %449 = vmatmul.mubr.bf16.gmra.mxu0 %v279
      %v450 = vpop.f32.mrf.mxu0
      %v451 = vadd.f32 %v218, %v450
      %v452 = vpop.f32.mrf.mxu0
      %v453 = vpop.f32.mrf.mxu0
      %v454 = vadd.f32 %v218, %v453
      %v455 = vpop.f32.mrf.mxu0
      %456 = vmatprep.mubr.bf16.mxu0 0
      %457 = vmatmul.mubr.bf16.gmra.mxu0 %v280
      %v458 = vpop.f32.mrf.mxu0
      %v459 = vadd.f32 %v218, %v458
      %v460 = vpop.f32.mrf.mxu0
      %v461 = vpop.f32.mrf.mxu0
      %v462 = vadd.f32 %v218, %v461
      %v463 = vpop.f32.mrf.mxu0
      %464 = vmatprep.mubr.bf16.mxu0 0
      %465 = vmatmul.mubr.bf16.gmra.mxu0 %v281
      %v466 = vpop.f32.mrf.mxu0
      %v467 = vadd.f32 %v218, %v466
      %v468 = vpop.f32.mrf.mxu0
      %v469 = vpop.f32.mrf.mxu0
      %v470 = vadd.f32 %v218, %v469
      %v471 = vpop.f32.mrf.mxu0
      %472 = vmatprep.mubr.bf16.mxu0 0
      %473 = vmatmul.mubr.bf16.gmra.mxu0 %v282
      %v474 = vpop.f32.mrf.mxu0
      %v475 = vadd.f32 %v218, %v474
      %v476 = vpop.f32.mrf.mxu0
      %v477 = vpop.f32.mrf.mxu0
      %v478 = vpop.f32.mrf.mxu0
      %479 = vdwg.mxu0
      %v480 = vmax.f32 %v379, 0.0
      %v481 = vmax.f32 %v382, 0.0
      %v482 = vmax.f32 %v387, 0.0
      %v483 = vmax.f32 %v390, 0.0
      %v484 = vmax.f32 %v395, 0.0
      %v485 = vmax.f32 %v398, 0.0
      %v486 = vmax.f32 %v403, 0.0
      %v487 = vmax.f32 %v406, 0.0
      %v488 = vmax.f32 %v411, 0.0
      %v489 = vmax.f32 %v414, 0.0
      %v490 = vmax.f32 %v419, 0.0
      %v491 = vmax.f32 %v422, 0.0
      %v492 = vmax.f32 %v427, 0.0
      %v493 = vmax.f32 %v430, 0.0
      %v494 = vmax.f32 %v435, 0.0
      %v495 = vmax.f32 %v438, 0.0
      %v496 = vmax.f32 %v443, 0.0
      %v497 = vmax.f32 %v446, 0.0
      %v498 = vmax.f32 %v451, 0.0
      %v499 = vmax.f32 %v454, 0.0
      %v500 = vmax.f32 %v459, 0.0
      %v501 = vmax.f32 %v462, 0.0
      %v502 = vmax.f32 %v467, 0.0
      %v503 = vmax.f32 %v470, 0.0
      %v504 = vmax.f32 %v475, 0.0
      %505 = vrot.lane.b32.xlu0 %v480, 32
      %v506 = vpop.permute.xlu0 %505
      %507 = vrot.lane.b32.xlu0 %v481, 32
      %v508 = vpop.permute.xlu0 %507
      %509 = vrot.lane.b32.xlu0 %v482, 32
      %v510 = vpop.permute.xlu0 %509
      %511 = vrot.lane.b32.xlu0 %v483, 32
      %v512 = vpop.permute.xlu0 %511
      %513 = vrot.lane.b32.xlu0 %v484, 32
      %v514 = vpop.permute.xlu0 %513
      %515 = vrot.lane.b32.xlu0 %v485, 32
      %v516 = vpop.permute.xlu0 %515
      %517 = vrot.lane.b32.xlu0 %v486, 32
      %v518 = vpop.permute.xlu0 %517
      %519 = vrot.lane.b32.xlu0 %v487, 32
      %v520 = vpop.permute.xlu0 %519
      %521 = vrot.lane.b32.xlu0 %v488, 32
      %v522 = vpop.permute.xlu0 %521
      %523 = vrot.lane.b32.xlu0 %v489, 32
      %v524 = vpop.permute.xlu0 %523
      %525 = vrot.lane.b32.xlu0 %v490, 32
      %v526 = vpop.permute.xlu0 %525
      %527 = vrot.lane.b32.xlu0 %v491, 32
      %v528 = vpop.permute.xlu0 %527
      %529 = vrot.lane.b32.xlu0 %v492, 32
      %v530 = vpop.permute.xlu0 %529
      %531 = vrot.lane.b32.xlu0 %v493, 32
      %v532 = vpop.permute.xlu0 %531
      %533 = vrot.lane.b32.xlu0 %v494, 32
      %v534 = vpop.permute.xlu0 %533
      %535 = vrot.lane.b32.xlu0 %v495, 32
      %v536 = vpop.permute.xlu0 %535
      %537 = vrot.lane.b32.xlu0 %v496, 32
      %v538 = vpop.permute.xlu0 %537
      %539 = vrot.lane.b32.xlu0 %v497, 32
      %v540 = vpop.permute.xlu0 %539
      %541 = vrot.lane.b32.xlu0 %v498, 32
      %v542 = vpop.permute.xlu0 %541
      %543 = vrot.lane.b32.xlu0 %v499, 32
      %v544 = vpop.permute.xlu0 %543
      %545 = vrot.lane.b32.xlu0 %v500, 32
      %v546 = vpop.permute.xlu0 %545
      %547 = vrot.lane.b32.xlu0 %v501, 32
      %v548 = vpop.permute.xlu0 %547
      %549 = vrot.lane.b32.xlu0 %v502, 32
      %v550 = vpop.permute.xlu0 %549
      %551 = vrot.lane.b32.xlu0 %v503, 32
      %v552 = vpop.permute.xlu0 %551
      %553 = vrot.lane.b32.xlu0 %v504, 32
      %v554 = vpop.permute.xlu0 %553
      %v555 = vmax.f32 %v480, %v506
      %v556 = vmax.f32 %v481, %v508
      %v557 = vmax.f32 %v482, %v510
      %v558 = vmax.f32 %v483, %v512
      %v559 = vmax.f32 %v484, %v514
      %v560 = vmax.f32 %v485, %v516
      %v561 = vmax.f32 %v486, %v518
      %v562 = vmax.f32 %v487, %v520
      %v563 = vmax.f32 %v488, %v522
      %v564 = vmax.f32 %v489, %v524
      %v565 = vmax.f32 %v490, %v526
      %v566 = vmax.f32 %v491, %v528
      %v567 = vmax.f32 %v492, %v530
      %v568 = vmax.f32 %v493, %v532
      %v569 = vmax.f32 %v494, %v534
      %v570 = vmax.f32 %v495, %v536
      %v571 = vmax.f32 %v496, %v538
      %v572 = vmax.f32 %v497, %v540
      %v573 = vmax.f32 %v498, %v542
      %v574 = vmax.f32 %v499, %v544
      %v575 = vmax.f32 %v500, %v546
      %v576 = vmax.f32 %v501, %v548
      %v577 = vmax.f32 %v502, %v550
      %v578 = vmax.f32 %v503, %v552
      %v579 = vmax.f32 %v504, %v554
      %580 = vrot.lane.b32.xlu0 %v555, 64
      %v581 = vpop.permute.xlu0 %580
      %582 = vrot.lane.b32.xlu0 %v556, 64
      %v583 = vpop.permute.xlu0 %582
      %584 = vrot.lane.b32.xlu0 %v557, 64
      %v585 = vpop.permute.xlu0 %584
      %586 = vrot.lane.b32.xlu0 %v558, 64
      %v587 = vpop.permute.xlu0 %586
      %588 = vrot.lane.b32.xlu0 %v559, 64
      %v589 = vpop.permute.xlu0 %588
      %590 = vrot.lane.b32.xlu0 %v560, 64
      %v591 = vpop.permute.xlu0 %590
      %592 = vrot.lane.b32.xlu0 %v561, 64
      %v593 = vpop.permute.xlu0 %592
      %594 = vrot.lane.b32.xlu0 %v562, 64
      %v595 = vpop.permute.xlu0 %594
      %596 = vrot.lane.b32.xlu0 %v563, 64
      %v597 = vpop.permute.xlu0 %596
      %598 = vrot.lane.b32.xlu0 %v564, 64
      %v599 = vpop.permute.xlu0 %598
      %600 = vrot.lane.b32.xlu0 %v565, 64
      %v601 = vpop.permute.xlu0 %600
      %602 = vrot.lane.b32.xlu0 %v566, 64
      %v603 = vpop.permute.xlu0 %602
      %604 = vrot.lane.b32.xlu0 %v567, 64
      %v605 = vpop.permute.xlu0 %604
      %606 = vrot.lane.b32.xlu0 %v568, 64
      %v607 = vpop.permute.xlu0 %606
      %608 = vrot.lane.b32.xlu0 %v569, 64
      %v609 = vpop.permute.xlu0 %608
      %610 = vrot.lane.b32.xlu0 %v570, 64
      %v611 = vpop.permute.xlu0 %610
      %612 = vrot.lane.b32.xlu0 %v571, 64
      %v613 = vpop.permute.xlu0 %612
      %614 = vrot.lane.b32.xlu0 %v572, 64
      %v615 = vpop.permute.xlu0 %614
      %616 = vrot.lane.b32.xlu0 %v573, 64
      %v617 = vpop.permute.xlu0 %616
      %618 = vrot.lane.b32.xlu0 %v574, 64
      %v619 = vpop.permute.xlu0 %618
      %620 = vrot.lane.b32.xlu0 %v575, 64
      %v621 = vpop.permute.xlu0 %620
      %622 = vrot.lane.b32.xlu0 %v576, 64
      %v623 = vpop.permute.xlu0 %622
      %624 = vrot.lane.b32.xlu0 %v577, 64
      %v625 = vpop.permute.xlu0 %624
      %626 = vrot.lane.b32.xlu0 %v578, 64
      %v627 = vpop.permute.xlu0 %626
      %628 = vrot.lane.b32.xlu0 %v579, 64
      %v629 = vpop.permute.xlu0 %628
      %v630 = vmax.f32 %v555, %v581
      %v631 = vmax.f32 %v556, %v583
      %v632 = vmax.f32 %v557, %v585
      %v633 = vmax.f32 %v558, %v587
      %v634 = vmax.f32 %v559, %v589
      %v635 = vmax.f32 %v560, %v591
      %v636 = vmax.f32 %v561, %v593
      %v637 = vmax.f32 %v562, %v595
      %v638 = vmax.f32 %v563, %v597
      %v639 = vmax.f32 %v564, %v599
      %v640 = vmax.f32 %v565, %v601
      %v641 = vmax.f32 %v566, %v603
      %v642 = vmax.f32 %v567, %v605
      %v643 = vmax.f32 %v568, %v607
      %v644 = vmax.f32 %v569, %v609
      %v645 = vmax.f32 %v570, %v611
      %v646 = vmax.f32 %v571, %v613
      %v647 = vmax.f32 %v572, %v615
      %v648 = vmax.f32 %v573, %v617
      %v649 = vmax.f32 %v574, %v619
      %v650 = vmax.f32 %v575, %v621
      %v651 = vmax.f32 %v576, %v623
      %v652 = vmax.f32 %v577, %v625
      %v653 = vmax.f32 %v578, %v627
      %v654 = vmax.f32 %v579, %v629
      %v655 = vpack.c.bf16 %v631, %v630
      %v656 = vpack.c.bf16 %v633, %v632
      %v657 = vpack.c.bf16 %v635, %v634
      %v658 = vpack.c.bf16 %v637, %v636
      %v659 = vpack.c.bf16 %v639, %v638
      %v660 = vpack.c.bf16 %v641, %v640
      %v661 = vpack.c.bf16 %v643, %v642
      %v662 = vpack.c.bf16 %v645, %v644
      %v663 = vpack.c.bf16 %v647, %v646
      %v664 = vpack.c.bf16 %v649, %v648
      %v665 = vpack.c.bf16 %v651, %v650
      %v666 = vpack.c.bf16 %v653, %v652
      %v667 = vpack.c.bf16 %v654, %v654
      %v681 = vunpack.c.l.b16 %v655
      %v682 = vunpack.c.h.b16 %v655
      %v683 = vunpack.c.l.b16 %v656
      %v684 = vunpack.c.h.b16 %v656
      %v685 = vunpack.c.l.b16 %v657
      %v686 = vunpack.c.h.b16 %v657
      %v687 = vunpack.c.l.b16 %v658
      %v688 = vunpack.c.h.b16 %v658
      %v689 = vunpack.c.l.b16 %v659
      %v690 = vunpack.c.h.b16 %v659
      %v691 = vunpack.c.l.b16 %v660
      %v692 = vunpack.c.h.b16 %v660
      %v693 = vunpack.c.l.b16 %v661
      %v694 = vunpack.c.h.b16 %v661
      %v695 = vunpack.c.l.b16 %v662
      %v696 = vunpack.c.h.b16 %v662
      %v697 = vunpack.c.l.b16 %v663
      %v698 = vunpack.c.h.b16 %v663
      %v699 = vunpack.c.l.b16 %v664
      %v700 = vunpack.c.h.b16 %v664
      %v701 = vunpack.c.l.b16 %v665
      %v702 = vunpack.c.h.b16 %v665
      %v703 = vunpack.c.l.b16 %v666
      %v704 = vunpack.c.h.b16 %v666
      %v705 = vunpack.c.l.b16 %v667
      %v706 = vpack.c.b16 %v681, %v681
      %v707 = vpack.c.b16 %v682, %v682
      %v708 = vpack.c.b16 %v683, %v683
      %v709 = vpack.c.b16 %v684, %v684
      %v710 = vpack.c.b16 %v685, %v685
      %v711 = vpack.c.b16 %v686, %v686
      %v712 = vpack.c.b16 %v687, %v687
      %v713 = vpack.c.b16 %v688, %v688
      %v714 = vpack.c.b16 %v689, %v689
      %v715 = vpack.c.b16 %v690, %v690
      %v716 = vpack.c.b16 %v691, %v691
      %v717 = vpack.c.b16 %v692, %v692
      %v718 = vpack.c.b16 %v693, %v693
      %v719 = vpack.c.b16 %v694, %v694
      %v720 = vpack.c.b16 %v695, %v695
      %v721 = vpack.c.b16 %v696, %v696
      %v722 = vpack.c.b16 %v697, %v697
      %v723 = vpack.c.b16 %v698, %v698
      %v724 = vpack.c.b16 %v699, %v699
      %v725 = vpack.c.b16 %v700, %v700
      %v726 = vpack.c.b16 %v701, %v701
      %v727 = vpack.c.b16 %v702, %v702
      %v728 = vpack.c.b16 %v703, %v703
      %v729 = vpack.c.b16 %v704, %v704
      %v730 = vpack.c.b16 %v705, %v705
      %756 = vst [vmem:[%s170] sm:$0xf] %v706
      %757 = vst [vmem:[%s170 + $0x4] sm:$0xf] %v707
      %758 = vst [vmem:[%s170 + $0x8] sm:$0xf] %v708
      %759 = vst [vmem:[%s170 + $0xc] sm:$0xf] %v709
      %760 = vst [vmem:[%s170 + $0x10] sm:$0xf] %v710
      %761 = vst [vmem:[%s170 + $0x14] sm:$0xf] %v711
      %762 = vst [vmem:[%s170 + $0x18] sm:$0xf] %v712
      %763 = vst [vmem:[%s170 + $0x1c] sm:$0xf] %v713
      %764 = vst [vmem:[%s170 + $0x20] sm:$0xf] %v714
      %765 = vst [vmem:[%s170 + $0x24] sm:$0xf] %v715
      %766 = vst [vmem:[%s170 + $0x28] sm:$0xf] %v716
      %767 = vst [vmem:[%s170 + $0x2c] sm:$0xf] %v717
      %768 = vst [vmem:[%s170 + $0x30] sm:$0xf] %v718
      %769 = vst [vmem:[%s170 + $0x34] sm:$0xf] %v719
      %770 = vst [vmem:[%s170 + $0x38] sm:$0xf] %v720
      %771 = vst [vmem:[%s170 + $0x3c] sm:$0xf] %v721
      %772 = vst [vmem:[%s170 + $0x40] sm:$0xf] %v722
      %773 = vst [vmem:[%s170 + $0x44] sm:$0xf] %v723
      %774 = vst [vmem:[%s170 + $0x48] sm:$0xf] %v724
      %775 = vst [vmem:[%s170 + $0x4c] sm:$0xf] %v725
      %776 = vst [vmem:[%s170 + $0x50] sm:$0xf] %v726
      %777 = vst [vmem:[%s170 + $0x54] sm:$0xf] %v727
      %778 = vst [vmem:[%s170 + $0x58] sm:$0xf] %v728
      %779 = vst [vmem:[%s170 + $0x5c] sm:$0xf] %v729
      %780 = vst [vmem:[%s170 + $0x60] sm:$0x3] %v730
      %p781 = scmp.lt.s32.totalorder %s14, 1
      %s782 = scalar_select %p781, %s14, 1
      %s783 = smul.addr %s782, 25
      %s784 = smul.addr %s783, 4
      %s785 = scalar_lea.vmem %s3, %s784
      // Predicated region
      $region33: #{net_forward.2} parent=31 // pred_check
        %p786 = pneg %p100
      $region34: #{net_forward.2} parent=31 // pred_check_branch
        %788 = sbr.rel (%p786) target = $region36
      $region35: #{net_forward.2} parent=31 // pred_region
        _
      $region36: #{net_forward.2} parent=31 // pred_fallthru
        _
    $region32: #{net_forward.2} parent=5 // pred_fallthru
      _
    %p789 = scmp.le.s32.totalorder 2, %s9
    // Predicated region
    $region37: #{net_forward.2} parent=5 // pred_check
      %p790 = pneg %p789
    $region38: #{net_forward.2} parent=5 // pred_check_branch
      %792 = sbr.rel (%p790) target = $region40
    $region39: #{net_forward.2} parent=5 // pred_region
      %s793 = ssub.s32 %s9, 2
      // Predicated region
      $region41: #{net_forward.2} parent=39 // pred_check
        %p794 = pneg %p106
      $region42: #{net_forward.2} parent=39 // pred_check_branch
        %796 = sbr.rel (%p794) target = $region44
      $region43: #{net_forward.2} parent=39 // pred_region
        %p797 = scmp.lt.s32.totalorder %s15, 1
        %s798 = scalar_select %p797, %s15, 1
        %s799 = smul.addr %s798, 25
        %s800 = smul.addr %s799, 4
        %s801 = scalar_lea.vmem %s3, %s800
      $region44: #{net_forward.2} parent=39 // pred_fallthru
        _
    $region40: #{net_forward.2} parent=5 // pred_fallthru
      _
  $region6: #{net_forward.2} parent=0 // loop_footer
    %s13 = sadd.s32 1, %s9
  $region7: #{net_forward.2} parent=0 // loop_footer_branch
    %8 = sbr.rel target = $region3
  $region8: #{net_forward.2} parent=0 // loop_exit
    _

// kernel: net_forward.3
$region0: #{net_forward.3}
  #allocation0 [shape = 'u32[]', space=smem, size = 0x4, offset = 0x4, fixed_abs, tag = 'smem constant byte address 0x4 - core index']
  #allocation1 [shape = 'u32[144,128]{1,0:T(1,128)}', space=vmem, size = 0x12000, scoped, tag = 'internal scratch']
  %s0 = inlined_call_operand.vmem [shape: bf16[2,25,256], index: 0, kind: input, shape index: {}]
  %s1 = inlined_call_operand.vmem [shape: bf16[256,128], index: 1, kind: input, shape index: {}]
  %s2 = inlined_call_operand.vmem [shape: f32[1,128], index: 2, kind: input, shape index: {}]
  %s3 = inlined_call_operand.vmem [shape: bf16[25,128,128], index: 3, kind: input, shape index: {}]
  %s4 = inlined_call_operand.vmem [shape: f32[1,128], index: 4, kind: input, shape index: {}]
  %s5 = inlined_call_operand.vmem [shape: bf16[128,128], index: 5, kind: input, shape index: {}]
  %s6 = inlined_call_operand.vmem [shape: f32[1,128], index: 6, kind: input, shape index: {}]
  %s7 = inlined_call_operand.vmem [shape: bf16[128,128], index: 7, kind: input, shape index: {}]
  %s8 = inlined_call_operand.vmem [shape: f32[1,128], index: 8, kind: input, shape index: {}]
  %s9 = inlined_call_operand.hbm [shape: f32[2,1,128], index: 9, kind: output, shape index: {}]
  %s10 = sld [smem:[#allocation0]]
  $region69: #{net_forward.3} parent=0
    _
  %s12 = ssub.s32 1, %s10
  %s13 = scalar_select 0, %s12, %s10
  $region1: #{net_forward.3} parent=0
    #allocation2 [shape = 'u8[1024]{0}', space=vmem, size = 0x400, scoped, tag = 'output window, operand 0']
    #allocation3 [shape = 's32[2]{0}', space=sflag, size = 0x8, scoped, tag = 'scoped memory for net_forward.3']
    %14 = vsyncpa [#allocation3], 0
    %s15 = scalar_lea.sflag [#allocation3], 1
    %16 = vsyncpa %s15, 0
    loop: start=0, step=1, limit=4
    $region2: #{net_forward.3} parent=1 // loop_pre_header
      _
    $region3: #{net_forward.3} parent=1 // loop_header
      %s18 = sphi 0, %s22
      %p19 = scmp.ge.s32.totalorder %s18, 4
      %s28 = sphi 0, %s30
      %s31 = sphi 0, %s28
      %s32 = sphi 0, %s31
      %s48 = sphi 0, %s32
      %s52 = sphi 0, %s52
      %s54 = sphi 0, %s52
      %s55 = sphi 0, %s54
      %s69 = sphi 0, %s55
      %s73 = sphi 0, %s73
      %s75 = sphi 0, %s73
      %s76 = sphi 0, %s75
      %s90 = sphi 0, %s76
      %s94 = sphi 0, %s94
      %s96 = sphi 0, %s94
      %s97 = sphi 0, %s96
      %s111 = sphi 0, %s97
      %s115 = sphi 0, %s115
      %s117 = sphi 0, %s115
      %s118 = sphi 0, %s117
      %s132 = sphi 0, %s118
      %s136 = sphi 0, %s136
      %s138 = sphi 0, %s136
      %s139 = sphi 0, %s138
      %s153 = sphi 0, %s139
      %s157 = sphi 0, %s157
      %s159 = sphi 0, %s157
      %s160 = sphi 0, %s159
      %s174 = sphi 0, %s160
      %s178 = sphi 0, %s178
      %s180 = sphi 0, %s178
      %s181 = sphi 0, %s180
      %s195 = sphi 0, %s181
      %s199 = sphi 0, %s199
      %s201 = sphi 0, %s199
      %s202 = sphi 0, %s201
      %s216 = sphi 0, %s202
      %s222 = sphi 0, %s224
      %s225 = sphi 0, %s222
      %s226 = sphi 0, %s225
      %s242 = sphi 0, %s226
    $region4: #{net_forward.3} parent=1 // loop_header_branch
      %21 = sbr.rel (%p19) target = $region8
    $region5: #{net_forward.3} parent=1 // loop_body
      %s23 = ssub.s32 %s18, 1
      %s24 = ssub.s32 %s18, 2
      %s25 = sadd.s32 %s18, 1
      %s26 = ssub.s32 %s18, %s25
      %p27 = scmp.eq.s32.totalorder %s26, 0
      %s29 = sadd.s32 %s28, 1
      %s30 = scalar_select %p27, %s28, %s29
      %p33 = pneg %p27
      %p34 = scmp.eq.s32.totalorder %s18, 1
      %p35 = por %p33, %p34
      %p36 = scmp.ne.s32.totalorder %s28, %s31
      %p37 = scmp.eq.s32.totalorder %s18, 0
      %p38 = por %p36, %p37
      %p39 = scmp.ne.s32.totalorder %s28, %s31
      %p40 = scmp.eq.s32.totalorder %s23, 1
      %p41 = por %p39, %p40
      %p42 = scmp.ne.s32.totalorder %s31, %s32
      %p43 = scmp.eq.s32.totalorder %s23, 0
      %p44 = por %p42, %p43
      %p45 = scmp.ne.s32.totalorder %s31, %s32
      %p46 = scmp.eq.s32.totalorder %s24, 1
      %p47 = por %p45, %p46
      %p49 = scmp.ne.s32.totalorder %s32, %s48
      %p50 = scmp.eq.s32.totalorder %s24, 0
      %p51 = por %p49, %p50
      %s53 = sadd.s32 %s52, 1
      %p56 = scmp.eq.s32.totalorder %s18, 1
      %p57 = scmp.ne.s32.totalorder %s52, %s54
      %p58 = scmp.eq.s32.totalorder %s18, 0
      %p59 = por %p57, %p58
      %p60 = scmp.ne.s32.totalorder %s52, %s54
      %p61 = scmp.eq.s32.totalorder %s23, 1
      %p62 = por %p60, %p61
      %p63 = scmp.ne.s32.totalorder %s54, %s55
      %p64 = scmp.eq.s32.totalorder %s23, 0
      %p65 = por %p63, %p64
      %p66 = scmp.ne.s32.totalorder %s54, %s55
      %p67 = scmp.eq.s32.totalorder %s24, 1
      %p68 = por %p66, %p67
      %p70 = scmp.ne.s32.totalorder %s55, %s69
      %p71 = scmp.eq.s32.totalorder %s24, 0
      %p72 = por %p70, %p71
      %s74 = sadd.s32 %s73, 1
      %p77 = scmp.eq.s32.totalorder %s18, 1
      %p78 = scmp.ne.s32.totalorder %s73, %s75
      %p79 = scmp.eq.s32.totalorder %s18, 0
      %p80 = por %p78, %p79
      %p81 = scmp.ne.s32.totalorder %s73, %s75
      %p82 = scmp.eq.s32.totalorder %s23, 1
      %p83 = por %p81, %p82
      %p84 = scmp.ne.s32.totalorder %s75, %s76
      %p85 = scmp.eq.s32.totalorder %s23, 0
      %p86 = por %p84, %p85
      %p87 = scmp.ne.s32.totalorder %s75, %s76
      %p88 = scmp.eq.s32.totalorder %s24, 1
      %p89 = por %p87, %p88
      %p91 = scmp.ne.s32.totalorder %s76, %s90
      %p92 = scmp.eq.s32.totalorder %s24, 0
      %p93 = por %p91, %p92
      %s95 = sadd.s32 %s94, 1
      %p98 = scmp.eq.s32.totalorder %s18, 1
      %p99 = scmp.ne.s32.totalorder %s94, %s96
      %p100 = scmp.eq.s32.totalorder %s18, 0
      %p101 = por %p99, %p100
      %p102 = scmp.ne.s32.totalorder %s94, %s96
      %p103 = scmp.eq.s32.totalorder %s23, 1
      %p104 = por %p102, %p103
      %p105 = scmp.ne.s32.totalorder %s96, %s97
      %p106 = scmp.eq.s32.totalorder %s23, 0
      %p107 = por %p105, %p106
      %p108 = scmp.ne.s32.totalorder %s96, %s97
      %p109 = scmp.eq.s32.totalorder %s24, 1
      %p110 = por %p108, %p109
      %p112 = scmp.ne.s32.totalorder %s97, %s111
      %p113 = scmp.eq.s32.totalorder %s24, 0
      %p114 = por %p112, %p113
      %s116 = sadd.s32 %s115, 1
      %p119 = scmp.eq.s32.totalorder %s18, 1
      %p120 = scmp.ne.s32.totalorder %s115, %s117
      %p121 = scmp.eq.s32.totalorder %s18, 0
      %p122 = por %p120, %p121
      %p123 = scmp.ne.s32.totalorder %s115, %s117
      %p124 = scmp.eq.s32.totalorder %s23, 1
      %p125 = por %p123, %p124
      %p126 = scmp.ne.s32.totalorder %s117, %s118
      %p127 = scmp.eq.s32.totalorder %s23, 0
      %p128 = por %p126, %p127
      %p129 = scmp.ne.s32.totalorder %s117, %s118
      %p130 = scmp.eq.s32.totalorder %s24, 1
      %p131 = por %p129, %p130
      %p133 = scmp.ne.s32.totalorder %s118, %s132
      %p134 = scmp.eq.s32.totalorder %s24, 0
      %p135 = por %p133, %p134
      %s137 = sadd.s32 %s136, 1
      %p140 = scmp.eq.s32.totalorder %s18, 1
      %p141 = scmp.ne.s32.totalorder %s136, %s138
      %p142 = scmp.eq.s32.totalorder %s18, 0
      %p143 = por %p141, %p142
      %p144 = scmp.ne.s32.totalorder %s136, %s138
      %p145 = scmp.eq.s32.totalorder %s23, 1
      %p146 = por %p144, %p145
      %p147 = scmp.ne.s32.totalorder %s138, %s139
      %p148 = scmp.eq.s32.totalorder %s23, 0
      %p149 = por %p147, %p148
      %p150 = scmp.ne.s32.totalorder %s138, %s139
      %p151 = scmp.eq.s32.totalorder %s24, 1
      %p152 = por %p150, %p151
      %p154 = scmp.ne.s32.totalorder %s139, %s153
      %p155 = scmp.eq.s32.totalorder %s24, 0
      %p156 = por %p154, %p155
      %s158 = sadd.s32 %s157, 1
      %p161 = scmp.eq.s32.totalorder %s18, 1
      %p162 = scmp.ne.s32.totalorder %s157, %s159
      %p163 = scmp.eq.s32.totalorder %s18, 0
      %p164 = por %p162, %p163
      %p165 = scmp.ne.s32.totalorder %s157, %s159
      %p166 = scmp.eq.s32.totalorder %s23, 1
      %p167 = por %p165, %p166
      %p168 = scmp.ne.s32.totalorder %s159, %s160
      %p169 = scmp.eq.s32.totalorder %s23, 0
      %p170 = por %p168, %p169
      %p171 = scmp.ne.s32.totalorder %s159, %s160
      %p172 = scmp.eq.s32.totalorder %s24, 1
      %p173 = por %p171, %p172
      %p175 = scmp.ne.s32.totalorder %s160, %s174
      %p176 = scmp.eq.s32.totalorder %s24, 0
      %p177 = por %p175, %p176
      %s179 = sadd.s32 %s178, 1
      %p182 = scmp.eq.s32.totalorder %s18, 1
      %p183 = scmp.ne.s32.totalorder %s178, %s180
      %p184 = scmp.eq.s32.totalorder %s18, 0
      %p185 = por %p183, %p184
      %p186 = scmp.ne.s32.totalorder %s178, %s180
      %p187 = scmp.eq.s32.totalorder %s23, 1
      %p188 = por %p186, %p187
      %p189 = scmp.ne.s32.totalorder %s180, %s181
      %p190 = scmp.eq.s32.totalorder %s23, 0
      %p191 = por %p189, %p190
      %p192 = scmp.ne.s32.totalorder %s180, %s181
      %p193 = scmp.eq.s32.totalorder %s24, 1
      %p194 = por %p192, %p193
      %p196 = scmp.ne.s32.totalorder %s181, %s195
      %p197 = scmp.eq.s32.totalorder %s24, 0
      %p198 = por %p196, %p197
      %s200 = sadd.s32 %s199, 1
      %p203 = scmp.eq.s32.totalorder %s18, 1
      %p204 = scmp.ne.s32.totalorder %s199, %s201
      %p205 = scmp.eq.s32.totalorder %s18, 0
      %p206 = por %p204, %p205
      %p207 = scmp.ne.s32.totalorder %s199, %s201
      %p208 = scmp.eq.s32.totalorder %s23, 1
      %p209 = por %p207, %p208
      %p210 = scmp.ne.s32.totalorder %s201, %s202
      %p211 = scmp.eq.s32.totalorder %s23, 0
      %p212 = por %p210, %p211
      %p213 = scmp.ne.s32.totalorder %s201, %s202
      %p214 = scmp.eq.s32.totalorder %s24, 1
      %p215 = por %p213, %p214
      %p217 = scmp.ne.s32.totalorder %s202, %s216
      %p218 = scmp.eq.s32.totalorder %s24, 0
      %p219 = por %p217, %p218
      %s220 = ssub.s32 %s18, %s25
      %p221 = scmp.eq.s32.totalorder %s220, 0
      %s223 = sadd.s32 %s222, 1
      %s224 = scalar_select %p221, %s222, %s223
      %p227 = pneg %p221
      %p228 = scmp.eq.s32.totalorder %s18, 1
      %p229 = por %p227, %p228
      %p230 = scmp.ne.s32.totalorder %s222, %s225
      %p231 = scmp.eq.s32.totalorder %s18, 0
      %p232 = por %p230, %p231
      %p233 = scmp.ne.s32.totalorder %s222, %s225
      %p234 = scmp.eq.s32.totalorder %s23, 1
      %p235 = por %p233, %p234
      %p236 = scmp.ne.s32.totalorder %s225, %s226
      %p237 = scmp.eq.s32.totalorder %s23, 0
      %p238 = por %p236, %p237
      %p239 = scmp.ne.s32.totalorder %s225, %s226
      %p240 = scmp.eq.s32.totalorder %s24, 1
      %p241 = por %p239, %p240
      %p243 = scmp.ne.s32.totalorder %s226, %s242
      %p244 = scmp.eq.s32.totalorder %s24, 0
      %p245 = por %p243, %p244
      %p246 = scmp.le.s32.totalorder 1, %s18
      %p247 = scmp.lt.s32.totalorder %s18, 3
      %p248 = pnand %p246, %p247
      %p249 = pneg %p248
      // Predicated region
      $region9: #{net_forward.3} parent=5 // pred_check
        _
      $region10: #{net_forward.3} parent=5 // pred_check_branch
        %251 = sbr.rel (%p248) target = $region12
      $region11: #{net_forward.3} parent=5 // pred_region
        %s252 = ssub.s32 %s18, 1
        // Predicated region
        $region13: #{net_forward.3} parent=11 // pred_check
          %p253 = pneg %p65
        $region14: #{net_forward.3} parent=11 // pred_check_branch
          %255 = sbr.rel (%p253) target = $region16
        $region15: #{net_forward.3} parent=11 // pred_region
          _
        $region16: #{net_forward.3} parent=11 // pred_fallthru
          _
        // Predicated region
        $region17: #{net_forward.3} parent=11 // pred_check
          %p256 = pneg %p86
        $region18: #{net_forward.3} parent=11 // pred_check_branch
          %258 = sbr.rel (%p256) target = $region20
        $region19: #{net_forward.3} parent=11 // pred_region
          _
        $region20: #{net_forward.3} parent=11 // pred_fallthru
          _
        // Predicated region
        $region21: #{net_forward.3} parent=11 // pred_check
          %p259 = pneg %p107
        $region22: #{net_forward.3} parent=11 // pred_check_branch
          %261 = sbr.rel (%p259) target = $region24
        $region23: #{net_forward.3} parent=11 // pred_region
          _
        $region24: #{net_forward.3} parent=11 // pred_fallthru
          _
        // Predicated region
        $region25: #{net_forward.3} parent=11 // pred_check
          %p262 = pneg %p128
        $region26: #{net_forward.3} parent=11 // pred_check_branch
          %264 = sbr.rel (%p262) target = $region28
        $region27: #{net_forward.3} parent=11 // pred_region
          _
        $region28: #{net_forward.3} parent=11 // pred_fallthru
          _
        // Predicated region
        $region29: #{net_forward.3} parent=11 // pred_check
          %p265 = pneg %p149
        $region30: #{net_forward.3} parent=11 // pred_check_branch
          %267 = sbr.rel (%p265) target = $region32
        $region31: #{net_forward.3} parent=11 // pred_region
          _
        $region32: #{net_forward.3} parent=11 // pred_fallthru
          _
        // Predicated region
        $region33: #{net_forward.3} parent=11 // pred_check
          %p268 = pneg %p170
        $region34: #{net_forward.3} parent=11 // pred_check_branch
          %270 = sbr.rel (%p268) target = $region36
        $region35: #{net_forward.3} parent=11 // pred_region
          _
        $region36: #{net_forward.3} parent=11 // pred_fallthru
          _
        // Predicated region
        $region37: #{net_forward.3} parent=11 // pred_check
          %p271 = pneg %p191
        $region38: #{net_forward.3} parent=11 // pred_check_branch
          %273 = sbr.rel (%p271) target = $region40
        $region39: #{net_forward.3} parent=11 // pred_region
          _
        $region40: #{net_forward.3} parent=11 // pred_fallthru
          _
        // Predicated region
        $region41: #{net_forward.3} parent=11 // pred_check
          %p274 = pneg %p212
        $region42: #{net_forward.3} parent=11 // pred_check_branch
          %276 = sbr.rel (%p274) target = $region44
        $region43: #{net_forward.3} parent=11 // pred_region
          _
        $region44: #{net_forward.3} parent=11 // pred_fallthru
          _
      $region12: #{net_forward.3} parent=5 // pred_fallthru
        _
      %p277 = scmp.lt.s32.totalorder %s18, 2
      // Predicated region
      $region45: #{net_forward.3} parent=5 // pred_check
        %p278 = pneg %p277
      $region46: #{net_forward.3} parent=5 // pred_check_branch
        %280 = sbr.rel (%p278) target = $region48
      $region47: #{net_forward.3} parent=5 // pred_region
        // Predicated region
        $region49: #{net_forward.3} parent=47 // pred_check
          %p281 = pneg %p38
        $region50: #{net_forward.3} parent=47 // pred_check_branch
          %283 = sbr.rel (%p281) target = $region52
        $region51: #{net_forward.3} parent=47 // pred_region
          %p284 = scmp.lt.s32.totalorder %s18, 1
          %s285 = scalar_select %p284, %s18, 1
          %s286 = smul.addr %s285, 8
          %s287 = smul.addr %s286, 4
          %s288 = scalar_lea.vmem %s0, %s287
        $region52: #{net_forward.3} parent=47 // pred_fallthru
          _
      $region48: #{net_forward.3} parent=5 // pred_fallthru
        _
      %p289 = scmp.le.s32.totalorder 1, %s18
      %p290 = scmp.lt.s32.totalorder %s18, 3
      %p291 = pnand %p289, %p290
      %p292 = pneg %p291
      // Predicated region
      $region53: #{net_forward.3} parent=5 // pred_check
        _
      $region54: #{net_forward.3} parent=5 // pred_check_branch
        %294 = sbr.rel (%p291) target = $region56
      $region55: #{net_forward.3} parent=5 // pred_region
        %s295 = ssub.s32 %s18, 1
        %p296 = scmp.lt.s32.totalorder %s23, 1
        %s297 = scalar_select %p296, %s23, 1
        %s298 = smul.addr %s297, 8
        %s299 = smul.addr %s298, 4
        %s300 = scalar_lea.vmem %s0, %s299
        %p301 = pneg %p44
        %p302 = pneg %p41
        %p303 = pneg %p65
        %p304 = pneg %p62
        %p305 = pneg %p86
        %p306 = pneg %p83
        %p307 = pneg %p107
        %p308 = pneg %p104
        %p309 = pneg %p128
        %p310 = pneg %p125
        %p311 = pneg %p149
        %p312 = pneg %p146
        %p313 = pneg %p170
        %p314 = pneg %p167
        %p315 = pneg %p191
        %p316 = pneg %p188
        %p317 = pneg %p212
        %p318 = pneg %p209
        %p319 = pneg %p238
        %p320 = pneg %p235
        %s321 = sand.u32 %s225, 1
        %s322 = scalar_lea.sflag [#allocation3], %s321
        %s323 = sand.u32 %s225, 1
        %s324 = scalar_lea.vmem [#allocation2], %s323
        %p325 = scmp.lt.s32.totalorder %s23, 1
        %s326 = scalar_select %p325, %s23, 1
        %s327 = smul.addr %s326, 8
        %s328 = smul.addr %s327, 4
        %s329 = scalar_lea.vmem %s0, %s328
        %v331 = vld [vmem:[%s329] sm:$0xff]
        %v332 = vld [vmem:[%s329 + $0x8] sm:$0xff]
        %v333 = vld [vmem:[%s329 + $0x10] sm:$0xff]
        %v334 = vld [vmem:[%s329 + $0x18] sm:$0x11]
        %v335 = vld [vmem:[%s1] sm:$0xf]
        %v336 = vld [vmem:[%s1 + $0x4] sm:$0xf]
        %v337 = vld [vmem:[%s1 + $0x8] sm:$0xf]
        %v338 = vld [vmem:[%s1 + $0xc] sm:$0xf]
        %v339 = vld [vmem:[%s1 + $0x10] sm:$0xf]
        %v340 = vld [vmem:[%s1 + $0x14] sm:$0xf]
        %v341 = vld [vmem:[%s1 + $0x18] sm:$0xf]
        %v342 = vld [vmem:[%s1 + $0x1c] sm:$0xf]
        %v343 = vld [vmem:[%s1 + $0x20] sm:$0xf]
        %v344 = vld [vmem:[%s1 + $0x24] sm:$0xf]
        %v345 = vld [vmem:[%s1 + $0x28] sm:$0xf]
        %v346 = vld [vmem:[%s1 + $0x2c] sm:$0xf]
        %v347 = vld [vmem:[%s1 + $0x30] sm:$0xf]
        %v348 = vld [vmem:[%s1 + $0x34] sm:$0xf]
        %v349 = vld [vmem:[%s1 + $0x38] sm:$0xf]
        %v350 = vld [vmem:[%s1 + $0x3c] sm:$0xf]
        %v351 = vld [vmem:[%s1 + $0x40] sm:$0xf]
        %v352 = vld [vmem:[%s1 + $0x44] sm:$0xf]
        %v353 = vld [vmem:[%s1 + $0x48] sm:$0xf]
        %v354 = vld [vmem:[%s1 + $0x4c] sm:$0xf]
        %v355 = vld [vmem:[%s1 + $0x50] sm:$0xf]
        %v356 = vld [vmem:[%s1 + $0x54] sm:$0xf]
        %v357 = vld [vmem:[%s1 + $0x58] sm:$0xf]
        %v358 = vld [vmem:[%s1 + $0x5c] sm:$0xf]
        %v359 = vld [vmem:[%s1 + $0x60] sm:$0xf]
        %v360 = vld [vmem:[%s1 + $0x64] sm:$0xf]
        %v361 = vld [vmem:[%s1 + $0x68] sm:$0xf]
        %v362 = vld [vmem:[%s1 + $0x6c] sm:$0xf]
        %v363 = vld [vmem:[%s1 + $0x70] sm:$0xf]
        %v364 = vld [vmem:[%s1 + $0x74] sm:$0xf]
        %v365 = vld [vmem:[%s1 + $0x78] sm:$0xf]
        %v366 = vld [vmem:[%s1 + $0x7c] sm:$0xf]
        %v367 = vld [vmem:[%s2] sm:$0x1]
        %v369 = vlaneseq
        %v370 = vshrl.u32 %v369, 7
        %v371 = vsub.s32 0, %v370
        %v372 = vrot.slane %v367, %v371
        %v378 = vunpack.c.l.b16 %v331
        %v379 = vunpack.c.h.b16 %v331
        %v380 = vunpack.c.l.b16 %v332
        %v381 = vunpack.c.h.b16 %v332
        %v382 = vunpack.c.l.b16 %v333
        %v383 = vunpack.c.h.b16 %v333
        %v384 = vunpack.c.l.b16 %v334
        %v385 = vunpack.c.h.b16 %v334
        %v386 = vpack.c.b16 %v380, %v378
        %v387 = vpack.c.b16 %v381, %v379
        %v388 = vpack.c.b16 %v384, %v382
        %v389 = vpack.c.b16 %v385, %v383
        %v426 = vunpack.c.l.b16 %v335
        %v427 = vunpack.c.l.b16 %v336
        %v428 = vunpack.c.l.b16 %v337
        %v429 = vunpack.c.l.b16 %v338
        %v430 = vunpack.c.l.b16 %v339
        %v431 = vunpack.c.l.b16 %v340
        %v432 = vunpack.c.l.b16 %v341
        %v433 = vunpack.c.l.b16 %v342
        %v434 = vunpack.c.l.b16 %v343
        %v435 = vunpack.c.l.b16 %v344
        %v436 = vunpack.c.l.b16 %v345
        %v437 = vunpack.c.l.b16 %v346
        %v438 = vunpack.c.l.b16 %v347
        %v439 = vunpack.c.l.b16 %v348
        %v440 = vunpack.c.l.b16 %v349
        %v441 = vunpack.c.l.b16 %v350
        %v442 = vunpack.c.l.b16 %v351
        %v443 = vunpack.c.l.b16 %v352
        %v444 = vunpack.c.l.b16 %v353
        %v445 = vunpack.c.l.b16 %v354
        %v446 = vunpack.c.l.b16 %v355
        %v447 = vunpack.c.l.b16 %v356
        %v448 = vunpack.c.l.b16 %v357
        %v449 = vunpack.c.l.b16 %v358
        %v450 = vunpack.c.l.b16 %v359
        %v451 = vunpack.c.l.b16 %v360
        %v452 = vunpack.c.l.b16 %v361
        %v453 = vunpack.c.l.b16 %v362
        %v454 = vunpack.c.l.b16 %v363
        %v455 = vunpack.c.l.b16 %v364
        %v456 = vunpack.c.l.b16 %v365
        %v457 = vunpack.c.l.b16 %v366
        %v458 = vpack.c.b16 %v427, %v426
        %v459 = vpack.c.b16 %v429, %v428
        %v460 = vpack.c.b16 %v431, %v430
        %v461 = vpack.c.b16 %v433, %v432
        %v462 = vpack.c.b16 %v435, %v434
        %v463 = vpack.c.b16 %v437, %v436
        %v464 = vpack.c.b16 %v439, %v438
        %v465 = vpack.c.b16 %v441, %v440
        %v466 = vpack.c.b16 %v443, %v442
        %v467 = vpack.c.b16 %v445, %v444
        %v468 = vpack.c.b16 %v447, %v446
        %v469 = vpack.c.b16 %v449, %v448
        %v470 = vpack.c.b16 %v451, %v450
        %v471 = vpack.c.b16 %v453, %v452
        %v472 = vpack.c.b16 %v455, %v454
        %v473 = vpack.c.b16 %v457, %v456
        %490 = vmatprep.subr.bf16.mxu0 0
        %491 = vmatpush1.bf16.msra.mxu0 %v465
        %492 = vmatprep.subr.bf16.mxu0 0
        %493 = vmatpush1.bf16.msra.mxu0 %v464
        %494 = vmatprep.subr.bf16.mxu0 0
        %495 = vmatpush1.bf16.msra.mxu0 %v463
        %496 = vmatprep.subr.bf16.mxu0 0
        %497 = vmatpush1.bf16.msra.mxu0 %v462
        %498 = vmatprep.subr.bf16.mxu0 0
        %499 = vmatpush1.bf16.msra.mxu0 %v461
        %500 = vmatprep.subr.bf16.mxu0 0
        %501 = vmatpush1.bf16.msra.mxu0 %v460
        %502 = vmatprep.subr.bf16.mxu0 0
        %503 = vmatpush1.bf16.msra.mxu0 %v459
        %504 = vmatprep.subr.bf16.mxu0 0
        %505 = vmatpush1.bf16.msra.mxu0 %v458
        %506 = vmatprep.subr.bf16.mxu0 0
        %507 = vmatpush2.bf16.msra.mxu0 %v473
        %508 = vmatprep.subr.bf16.mxu0 0
        %509 = vmatpush2.bf16.msra.mxu0 %v472
        %510 = vmatprep.subr.bf16.mxu0 0
        %511 = vmatpush2.bf16.msra.mxu0 %v471
        %512 = vmatprep.subr.bf16.mxu0 0
        %513 = vmatpush2.bf16.msra.mxu0 %v470
        %514 = vmatprep.subr.bf16.mxu0 0
        %515 = vmatpush2.bf16.msra.mxu0 %v469
        %516 = vmatprep.subr.bf16.mxu0 0
        %517 = vmatpush2.bf16.msra.mxu0 %v468
        %518 = vmatprep.subr.bf16.mxu0 0
        %519 = vmatpush2.bf16.msra.mxu0 %v467
        %520 = vmatprep.subr.bf16.mxu0 0
        %521 = vmatpush2.bf16.msra.mxu0 %v466
        %522 = vmatprep.mubr.bf16.mxu0 %v387
        %523 = vmatmul.mubr.bf16.gmra.mxu0 %v386
        %v524 = vpop.f32.mrf.mxu0
        %v525 = vadd.f32 %v372, %v524
        %v526 = vpop.f32.mrf.mxu0
        %v527 = vpop.f32.mrf.mxu0
        %v528 = vadd.f32 %v372, %v527
        %v529 = vpop.f32.mrf.mxu0
        %530 = vmatprep.mubr.bf16.mxu0 %v389
        %531 = vmatmul.mubr.bf16.gmra.mxu0 %v388
        %v532 = vpop.f32.mrf.mxu0
        %v533 = vadd.f32 %v372, %v532
        %v534 = vpop.f32.mrf.mxu0
        %v535 = vpop.f32.mrf.mxu0
        %v536 = vadd.f32 %v372, %v535
        %v537 = vpop.f32.mrf.mxu0
        %538 = vdwg.mxu0
        %v539 = vmax.f32 %v525, 0.0
        %v540 = vmax.f32 %v528, 0.0
        %v541 = vmax.f32 %v533, 0.0
        %v542 = vmax.f32 %v536, 0.0
        %543 = vrot.lane.b32.xlu0 %v539, 32
        %v544 = vpop.permute.xlu0 %543
        %545 = vrot.lane.b32.xlu0 %v540, 32
        %v546 = vpop.permute.xlu0 %545
        %547 = vrot.lane.b32.xlu0 %v541, 32
        %v548 = vpop.permute.xlu0 %547
        %549 = vrot.lane.b32.xlu0 %v542, 32
        %v550 = vpop.permute.xlu0 %549
        %v551 = vmax.f32 %v539, %v544
        %v552 = vmax.f32 %v540, %v546
        %v553 = vmax.f32 %v541, %v548
        %v554 = vmax.f32 %v542, %v550
        %555 = vrot.lane.b32.xlu0 %v551, 64
        %v556 = vpop.permute.xlu0 %555
        %557 = vrot.lane.b32.xlu0 %v552, 64
        %v558 = vpop.permute.xlu0 %557
        %559 = vrot.lane.b32.xlu0 %v553, 64
        %v560 = vpop.permute.xlu0 %559
        %561 = vrot.lane.b32.xlu0 %v554, 64
        %v562 = vpop.permute.xlu0 %561
        %v563 = vmax.f32 %v551, %v556
        %v564 = vmax.f32 %v552, %v558
        %v565 = vmax.f32 %v553, %v560
        %v566 = vmax.f32 %v554, %v562
        %v567 = vld [vmem:[%s4] sm:$0x1]
        %v568 = vpack.c.bf16 %v563, %v563
        %v569 = vld [vmem:[%s3] sm:$0xf]
        %v570 = vld [vmem:[%s3 + $0x4] sm:$0xf]
        %v571 = vld [vmem:[%s3 + $0x8] sm:$0xf]
        %v572 = vld [vmem:[%s3 + $0xc] sm:$0xf]
        %v573 = vld [vmem:[%s3 + $0x10] sm:$0xf]
        %v574 = vld [vmem:[%s3 + $0x14] sm:$0xf]
        %v575 = vld [vmem:[%s3 + $0x18] sm:$0xf]
        %v576 = vld [vmem:[%s3 + $0x1c] sm:$0xf]
        %v577 = vld [vmem:[%s3 + $0x20] sm:$0xf]
        %v578 = vld [vmem:[%s3 + $0x24] sm:$0xf]
        %v579 = vld [vmem:[%s3 + $0x28] sm:$0xf]
        %v580 = vld [vmem:[%s3 + $0x2c] sm:$0xf]
        %v581 = vld [vmem:[%s3 + $0x30] sm:$0xf]
        %v582 = vld [vmem:[%s3 + $0x34] sm:$0xf]
        %v583 = vld [vmem:[%s3 + $0x38] sm:$0xf]
        %v584 = vld [vmem:[%s3 + $0x3c] sm:$0xf]
        %v601 = vunpack.c.l.b16 %v569
        %v602 = vunpack.c.l.b16 %v570
        %v603 = vunpack.c.l.b16 %v571
        %v604 = vunpack.c.l.b16 %v572
        %v605 = vunpack.c.l.b16 %v573
        %v606 = vunpack.c.l.b16 %v574
        %v607 = vunpack.c.l.b16 %v575
        %v608 = vunpack.c.l.b16 %v576
        %v609 = vunpack.c.l.b16 %v577
        %v610 = vunpack.c.l.b16 %v578
        %v611 = vunpack.c.l.b16 %v579
        %v612 = vunpack.c.l.b16 %v580
        %v613 = vunpack.c.l.b16 %v581
        %v614 = vunpack.c.l.b16 %v582
        %v615 = vunpack.c.l.b16 %v583
        %v616 = vunpack.c.l.b16 %v584
        %v617 = vpack.c.b16 %v602, %v601
        %v618 = vpack.c.b16 %v604, %v603
        %v619 = vpack.c.b16 %v606, %v605
        %v620 = vpack.c.b16 %v608, %v607
        %v621 = vpack.c.b16 %v610, %v609
        %v622 = vpack.c.b16 %v612, %v611
        %v623 = vpack.c.b16 %v614, %v613
        %v624 = vpack.c.b16 %v616, %v615
        %633 = vmatprep.subr.bf16.mxu0 0
        %634 = vmatpush1.bf16.msra.mxu0 %v624
        %635 = vmatprep.subr.bf16.mxu0 0
        %636 = vmatpush1.bf16.msra.mxu0 %v623
        %637 = vmatprep.subr.bf16.mxu0 0
        %638 = vmatpush1.bf16.msra.mxu0 %v622
        %639 = vmatprep.subr.bf16.mxu0 0
        %640 = vmatpush1.bf16.msra.mxu0 %v621
        %641 = vmatprep.subr.bf16.mxu0 0
        %642 = vmatpush1.bf16.msra.mxu0 %v620
        %643 = vmatprep.subr.bf16.mxu0 0
        %644 = vmatpush1.bf16.msra.mxu0 %v619
        %645 = vmatprep.subr.bf16.mxu0 0
        %646 = vmatpush1.bf16.msra.mxu0 %v618
        %647 = vmatprep.subr.bf16.mxu0 0
        %648 = vmatpush1.bf16.msra.mxu0 %v617
        %649 = vmatprep.subr.bf16.mxu0 0
        %650 = vmatpush2.bf16.msra.mxu0 0
        %651 = vmatprep.subr.bf16.mxu0 0
        %652 = vmatpush2.bf16.msra.mxu0 0
        %653 = vmatprep.subr.bf16.mxu0 0
        %654 = vmatpush2.bf16.msra.mxu0 0
        %655 = vmatprep.subr.bf16.mxu0 0
        %656 = vmatpush2.bf16.msra.mxu0 0
        %657 = vmatprep.subr.bf16.mxu0 0
        %658 = vmatpush2.bf16.msra.mxu0 0
        %659 = vmatprep.subr.bf16.mxu0 0
        %660 = vmatpush2.bf16.msra.mxu0 0
        %661 = vmatprep.subr.bf16.mxu0 0
        %662 = vmatpush2.bf16.msra.mxu0 0
        %663 = vmatprep.subr.bf16.mxu0 0
        %664 = vmatpush2.bf16.msra.mxu0 0
        %665 = vmatprep.mubr.bf16.mxu0 0
        %666 = vmatmul.mubr.bf16.gmra.mxu0 %v568
        %v667 = vpop.f32.mrf.mxu0
        %v668 = vadd.f32 0.0, %v667
        %v669 = vpop.f32.mrf.mxu0
        %v670 = vpop.f32.mrf.mxu0
        %v671 = vpop.f32.mrf.mxu0
        %672 = vdwg.mxu0
        %v673 = vadd.f32 %v567, %v668
        %s674 = scalar_lea.vmem %s3, 64
        %v675 = vld [vmem:[%s674] sm:$0xf]
        %v676 = vld [vmem:[%s674 + $0x4] sm:$0xf]
        %v677 = vld [vmem:[%s674 + $0x8] sm:$0xf]
        %v678 = vld [vmem:[%s674 + $0xc] sm:$0xf]
        %v679 = vld [vmem:[%s674 + $0x10] sm:$0xf]
        %v680 = vld [vmem:[%s674 + $0x14] sm:$0xf]
        %v681 = vld [vmem:[%s674 + $0x18] sm:$0xf]
        %v682 = vld [vmem:[%s674 + $0x1c] sm:$0xf]
        %v683 = vld [vmem:[%s674 + $0x20] sm:$0xf]
        %v684 = vld [vmem:[%s674 + $0x24] sm:$0xf]
        %v685 = vld [vmem:[%s674 + $0x28] sm:$0xf]
        %v686 = vld [vmem:[%s674 + $0x2c] sm:$0xf]
        %v687 = vld [vmem:[%s674 + $0x30] sm:$0xf]
        %v688 = vld [vmem:[%s674 + $0x34] sm:$0xf]
        %v689 = vld [vmem:[%s674 + $0x38] sm:$0xf]
        %v690 = vld [vmem:[%s674 + $0x3c] sm:$0xf]
        %v692 = vshrl.u32 %v568, 16
        %v711 = vunpack.c.l.b16 %v675
        %v712 = vunpack.c.l.b16 %v676
        %v713 = vunpack.c.l.b16 %v677
        %v714 = vunpack.c.l.b16 %v678
        %v715 = vunpack.c.l.b16 %v679
        %v716 = vunpack.c.l.b16 %v680
        %v717 = vunpack.c.l.b16 %v681
        %v718 = vunpack.c.l.b16 %v682
        %v719 = vunpack.c.l.b16 %v683
        %v720 = vunpack.c.l.b16 %v684
        %v721 = vunpack.c.l.b16 %v685
        %v722 = vunpack.c.l.b16 %v686
        %v723 = vunpack.c.l.b16 %v687
        %v724 = vunpack.c.l.b16 %v688
        %v725 = vunpack.c.l.b16 %v689
        %v726 = vunpack.c.l.b16 %v690
        %v727 = vpack.c.b16 %v712, %v711
        %v728 = vpack.c.b16 %v714, %v713
        %v729 = vpack.c.b16 %v716, %v715
        %v730 = vpack.c.b16 %v718, %v717
        %v731 = vpack.c.b16 %v720, %v719
        %v732 = vpack.c.b16 %v722, %v721
        %v733 = vpack.c.b16 %v724, %v723
        %v734 = vpack.c.b16 %v726, %v725
        %743 = vmatprep.subr.bf16.mxu0 0
        %744 = vmatpush1.bf16.msra.mxu0 %v734
        %745 = vmatprep.subr.bf16.mxu0 0
        %746 = vmatpush1.bf16.msra.mxu0 %v733
        %747 = vmatprep.subr.bf16.mxu0 0
        %748 = vmatpush1.bf16.msra.mxu0 %v732
        %749 = vmatprep.subr.bf16.mxu0 0
        %750 = vmatpush1.bf16.msra.mxu0 %v731
        %751 = vmatprep.subr.bf16.mxu0 0
        %752 = vmatpush1.bf16.msra.mxu0 %v730
        %753 = vmatprep.subr.bf16.mxu0 0
        %754 = vmatpush1.bf16.msra.mxu0 %v729
        %755 = vmatprep.subr.bf16.mxu0 0
        %756 = vmatpush1.bf16.msra.mxu0 %v728
        %757 = vmatprep.subr.bf16.mxu0 0
        %758 = vmatpush1.bf16.msra.mxu0 %v727
        %759 = vmatprep.subr.bf16.mxu0 0
        %760 = vmatpush2.bf16.msra.mxu0 0
        %761 = vmatprep.subr.bf16.mxu0 0
        %762 = vmatpush2.bf16.msra.mxu0 0
        %763 = vmatprep.subr.bf16.mxu0 0
        %764 = vmatpush2.bf16.msra.mxu0 0
        %765 = vmatprep.subr.bf16.mxu0 0
        %766 = vmatpush2.bf16.msra.mxu0 0
        %767 = vmatprep.subr.bf16.mxu0 0
        %768 = vmatpush2.bf16.msra.mxu0 0
        %769 = vmatprep.subr.bf16.mxu0 0
        %770 = vmatpush2.bf16.msra.mxu0 0
        %771 = vmatprep.subr.bf16.mxu0 0
        %772 = vmatpush2.bf16.msra.mxu0 0
        %773 = vmatprep.subr.bf16.mxu0 0
        %774 = vmatpush2.bf16.msra.mxu0 0
        %775 = vmatprep.mubr.bf16.mxu0 0
        %776 = vmatmul.mubr.bf16.gmra.mxu0 %v692
        %v777 = vpop.f32.mrf.mxu0
        %v778 = vadd.f32 0.0, %v777
        %v779 = vpop.f32.mrf.mxu0
        %v780 = vpop.f32.mrf.mxu0
        %v781 = vpop.f32.mrf.mxu0
        %782 = vdwg.mxu0
        %v783 = vadd.f32 %v673, %v778
        %s784 = scalar_lea.vmem %s3, 128
        %v785 = vld [vmem:[%s784] sm:$0xf]
        %v786 = vld [vmem:[%s784 + $0x4] sm:$0xf]
        %v787 = vld [vmem:[%s784 + $0x8] sm:$0xf]
        %v788 = vld [vmem:[%s784 + $0xc] sm:$0xf]
        %v789 = vld [vmem:[%s784 + $0x10] sm:$0xf]
        %v790 = vld [vmem:[%s784 + $0x14] sm:$0xf]
        %v791 = vld [vmem:[%s784 + $0x18] sm:$0xf]
        %v792 = vld [vmem:[%s784 + $0x1c] sm:$0xf]
        %v793 = vld [vmem:[%s784 + $0x20] sm:$0xf]
        %v794 = vld [vmem:[%s784 + $0x24] sm:$0xf]
        %v795 = vld [vmem:[%s784 + $0x28] sm:$0xf]
        %v796 = vld [vmem:[%s784 + $0x2c] sm:$0xf]
        %v797 = vld [vmem:[%s784 + $0x30] sm:$0xf]
        %v798 = vld [vmem:[%s784 + $0x34] sm:$0xf]
        %v799 = vld [vmem:[%s784 + $0x38] sm:$0xf]
        %v800 = vld [vmem:[%s784 + $0x3c] sm:$0xf]
        %v802 = vrot.slane %v568, 1
        %v820 = vunpack.c.l.b16 %v785
        %v821 = vunpack.c.l.b16 %v786
        %v822 = vunpack.c.l.b16 %v787
        %v823 = vunpack.c.l.b16 %v788
        %v824 = vunpack.c.l.b16 %v789
        %v825 = vunpack.c.l.b16 %v790
        %v826 = vunpack.c.l.b16 %v791
        %v827 = vunpack.c.l.b16 %v792
        %v828 = vunpack.c.l.b16 %v793
        %v829 = vunpack.c.l.b16 %v794
        %v830 = vunpack.c.l.b16 %v795
        %v831 = vunpack.c.l.b16 %v796
        %v832 = vunpack.c.l.b16 %v797
        %v833 = vunpack.c.l.b16 %v798
        %v834 = vunpack.c.l.b16 %v799
        %v835 = vunpack.c.l.b16 %v800
        %v836 = vpack.c.b16 %v821, %v820
        %v837 = vpack.c.b16 %v823, %v822
        %v838 = vpack.c.b16 %v825, %v824
        %v839 = vpack.c.b16 %v827, %v826
        %v840 = vpack.c.b16 %v829, %v828
        %v841 = vpack.c.b16 %v831, %v830
        %v842 = vpack.c.b16 %v833, %v832
        %v843 = vpack.c.b16 %v835, %v834
        %852 = vmatprep.subr.bf16.mxu0 0
        %853 = vmatpush1.bf16.msra.mxu0 %v843
        %854 = vmatprep.subr.bf16.mxu0 0
        %855 = vmatpush1.bf16.msra.mxu0 %v842
        %856 = vmatprep.subr.bf16.mxu0 0
        %857 = vmatpush1.bf16.msra.mxu0 %v841
        %858 = vmatprep.subr.bf16.mxu0 0
        %859 = vmatpush1.bf16.msra.mxu0 %v840
        %860 = vmatprep.subr.bf16.mxu0 0
        %861 = vmatpush1.bf16.msra.mxu0 %v839
        %862 = vmatprep.subr.bf16.mxu0 0
        %863 = vmatpush1.bf16.msra.mxu0 %v838
        %864 = vmatprep.subr.bf16.mxu0 0
        %865 = vmatpush1.bf16.msra.mxu0 %v837
        %866 = vmatprep.subr.bf16.mxu0 0
        %867 = vmatpush1.bf16.msra.mxu0 %v836
        %868 = vmatprep.subr.bf16.mxu0 0
        %869 = vmatpush2.bf16.msra.mxu0 0
        %870 = vmatprep.subr.bf16.mxu0 0
        %871 = vmatpush2.bf16.msra.mxu0 0
        %872 = vmatprep.subr.bf16.mxu0 0
        %873 = vmatpush2.bf16.msra.mxu0 0
        %874 = vmatprep.subr.bf16.mxu0 0
        %875 = vmatpush2.bf16.msra.mxu0 0
        %876 = vmatprep.subr.bf16.mxu0 0
        %877 = vmatpush2.bf16.msra.mxu0 0
        %878 = vmatprep.subr.bf16.mxu0 0
        %879 = vmatpush2.bf16.msra.mxu0 0
        %880 = vmatprep.subr.bf16.mxu0 0
        %881 = vmatpush2.bf16.msra.mxu0 0
        %882 = vmatprep.subr.bf16.mxu0 0
        %883 = vmatpush2.bf16.msra.mxu0 0
        %884 = vmatprep.mubr.bf16.mxu0 0
        %885 = vmatmul.mubr.bf16.gmra.mxu0 %v802
        %v886 = vpop.f32.mrf.mxu0
        %v887 = vadd.f32 0.0, %v886
        %v888 = vpop.f32.mrf.mxu0
        %v889 = vpop.f32.mrf.mxu0
        %v890 = vpop.f32.mrf.mxu0
        %891 = vdwg.mxu0
        %v892 = vadd.f32 %v783, %v887
        %s893 = scalar_lea.vmem %s3, 192
        %v894 = vld [vmem:[%s893] sm:$0xf]
        %v895 = vld [vmem:[%s893 + $0x4] sm:$0xf]
        %v896 = vld [vmem:[%s893 + $0x8] sm:$0xf]
        %v897 = vld [vmem:[%s893 + $0xc] sm:$0xf]
        %v898 = vld [vmem:[%s893 + $0x10] sm:$0xf]
        %v899 = vld [vmem:[%s893 + $0x14] sm:$0xf]
        %v900 = vld [vmem:[%s893 + $0x18] sm:$0xf]
        %v901 = vld [vmem:[%s893 + $0x1c] sm:$0xf]
        %v902 = vld [vmem:[%s893 + $0x20] sm:$0xf]
        %v903 = vld [vmem:[%s893 + $0x24] sm:$0xf]
        %v904 = vld [vmem:[%s893 + $0x28] sm:$0xf]
        %v905 = vld [vmem:[%s893 + $0x2c] sm:$0xf]
        %v906 = vld [vmem:[%s893 + $0x30] sm:$0xf]
        %v907 = vld [vmem:[%s893 + $0x34] sm:$0xf]
        %v908 = vld [vmem:[%s893 + $0x38] sm:$0xf]
        %v909 = vld [vmem:[%s893 + $0x3c] sm:$0xf]
        %v910 = vrot.slane %v692, 1
        %v928 = vunpack.c.l.b16 %v894
        %v929 = vunpack.c.l.b16 %v895
        %v930 = vunpack.c.l.b16 %v896
        %v931 = vunpack.c.l.b16 %v897
        %v932 = vunpack.c.l.b16 %v898
        %v933 = vunpack.c.l.b16 %v899
        %v934 = vunpack.c.l.b16 %v900
        %v935 = vunpack.c.l.b16 %v901
        %v936 = vunpack.c.l.b16 %v902
        %v937 = vunpack.c.l.b16 %v903
        %v938 = vunpack.c.l.b16 %v904
        %v939 = vunpack.c.l.b16 %v905
        %v940 = vunpack.c.l.b16 %v906
        %v941 = vunpack.c.l.b16 %v907
        %v942 = vunpack.c.l.b16 %v908
        %v943 = vunpack.c.l.b16 %v909
        %v944 = vpack.c.b16 %v929, %v928
        %v945 = vpack.c.b16 %v931, %v930
        %v946 = vpack.c.b16 %v933, %v932
        %v947 = vpack.c.b16 %v935, %v934
        %v948 = vpack.c.b16 %v937, %v936
        %v949 = vpack.c.b16 %v939, %v938
        %v950 = vpack.c.b16 %v941, %v940
        %v951 = vpack.c.b16 %v943, %v942
        %960 = vmatprep.subr.bf16.mxu0 0
        %961 = vmatpush1.bf16.msra.mxu0 %v951
        %962 = vmatprep.subr.bf16.mxu0 0
        %963 = vmatpush1.bf16.msra.mxu0 %v950
        %964 = vmatprep.subr.bf16.mxu0 0
        %965 = vmatpush1.bf16.msra.mxu0 %v949
        %966 = vmatprep.subr.bf16.mxu0 0
        %967 = vmatpush1.bf16.msra.mxu0 %v948
        %968 = vmatprep.subr.bf16.mxu0 0
        %969 = vmatpush1.bf16.msra.mxu0 %v947
        %970 = vmatprep.subr.bf16.mxu0 0
        %971 = vmatpush1.bf16.msra.mxu0 %v946
        %972 = vmatprep.subr.bf16.mxu0 0
        %973 = vmatpush1.bf16.msra.mxu0 %v945
        %974 = vmatprep.subr.bf16.mxu0 0
        %975 = vmatpush1.bf16.msra.mxu0 %v944
        %976 = vmatprep.subr.bf16.mxu0 0
        %977 = vmatpush2.bf16.msra.mxu0 0
        %978 = vmatprep.subr.bf16.mxu0 0
        %979 = vmatpush2.bf16.msra.mxu0 0
        %980 = vmatprep.subr.bf16.mxu0 0
        %981 = vmatpush2.bf16.msra.mxu0 0
        %982 = vmatprep.subr.bf16.mxu0 0
        %983 = vmatpush2.bf16.msra.mxu0 0
        %984 = vmatprep.subr.bf16.mxu0 0
        %985 = vmatpush2.bf16.msra.mxu0 0
        %986 = vmatprep.subr.bf16.mxu0 0
        %987 = vmatpush2.bf16.msra.mxu0 0
        %988 = vmatprep.subr.bf16.mxu0 0
        %989 = vmatpush2.bf16.msra.mxu0 0
        %990 = vmatprep.subr.bf16.mxu0 0
        %991 = vmatpush2.bf16.msra.mxu0 0
        %992 = vmatprep.mubr.bf16.mxu0 0
        %993 = vmatmul.mubr.bf16.gmra.mxu0 %v910
        %v994 = vpop.f32.mrf.mxu0
        %v995 = vadd.f32 0.0, %v994
        %v996 = vpop.f32.mrf.mxu0
        %v997 = vpop.f32.mrf.mxu0
        %v998 = vpop.f32.mrf.mxu0
        %999 = vdwg.mxu0
        %v1000 = vadd.f32 %v892, %v995
        %s1001 = scalar_lea.vmem %s3, 256
        %v1002 = vld [vmem:[%s1001] sm:$0xf]
        %v1003 = vld [vmem:[%s1001 + $0x4] sm:$0xf]
        %v1004 = vld [vmem:[%s1001 + $0x8] sm:$0xf]
        %v1005 = vld [vmem:[%s1001 + $0xc] sm:$0xf]
        %v1006 = vld [vmem:[%s1001 + $0x10] sm:$0xf]
        %v1007 = vld [vmem:[%s1001 + $0x14] sm:$0xf]
        %v1008 = vld [vmem:[%s1001 + $0x18] sm:$0xf]
        %v1009 = vld [vmem:[%s1001 + $0x1c] sm:$0xf]
        %v1010 = vld [vmem:[%s1001 + $0x20] sm:$0xf]
        %v1011 = vld [vmem:[%s1001 + $0x24] sm:$0xf]
        %v1012 = vld [vmem:[%s1001 + $0x28] sm:$0xf]
        %v1013 = vld [vmem:[%s1001 + $0x2c] sm:$0xf]
        %v1014 = vld [vmem:[%s1001 + $0x30] sm:$0xf]
        %v1015 = vld [vmem:[%s1001 + $0x34] sm:$0xf]
        %v1016 = vld [vmem:[%s1001 + $0x38] sm:$0xf]
        %v1017 = vld [vmem:[%s1001 + $0x3c] sm:$0xf]
        %v1018 = vrot.slane %v568, 2
        %v1036 = vunpack.c.l.b16 %v1002
        %v1037 = vunpack.c.l.b16 %v1003
        %v1038 = vunpack.c.l.b16 %v1004
        %v1039 = vunpack.c.l.b16 %v1005
        %v1040 = vunpack.c.l.b16 %v1006
        %v1041 = vunpack.c.l.b16 %v1007
        %v1042 = vunpack.c.l.b16 %v1008
        %v1043 = vunpack.c.l.b16 %v1009
        %v1044 = vunpack.c.l.b16 %v1010
        %v1045 = vunpack.c.l.b16 %v1011
        %v1046 = vunpack.c.l.b16 %v1012
        %v1047 = vunpack.c.l.b16 %v1013
        %v1048 = vunpack.c.l.b16 %v1014
        %v1049 = vunpack.c.l.b16 %v1015
        %v1050 = vunpack.c.l.b16 %v1016
        %v1051 = vunpack.c.l.b16 %v1017
        %v1052 = vpack.c.b16 %v1037, %v1036
        %v1053 = vpack.c.b16 %v1039, %v1038
        %v1054 = vpack.c.b16 %v1041, %v1040
        %v1055 = vpack.c.b16 %v1043, %v1042
        %v1056 = vpack.c.b16 %v1045, %v1044
        %v1057 = vpack.c.b16 %v1047, %v1046
        %v1058 = vpack.c.b16 %v1049, %v1048
        %v1059 = vpack.c.b16 %v1051, %v1050
        %1068 = vmatprep.subr.bf16.mxu0 0
        %1069 = vmatpush1.bf16.msra.mxu0 %v1059
        %1070 = vmatprep.subr.bf16.mxu0 0
        %1071 = vmatpush1.bf16.msra.mxu0 %v1058
        %1072 = vmatprep.subr.bf16.mxu0 0
        %1073 = vmatpush1.bf16.msra.mxu0 %v1057
        %1074 = vmatprep.subr.bf16.mxu0 0
        %1075 = vmatpush1.bf16.msra.mxu0 %v1056
        %1076 = vmatprep.subr.bf16.mxu0 0
        %1077 = vmatpush1.bf16.msra.mxu0 %v1055
        %1078 = vmatprep.subr.bf16.mxu0 0
        %1079 = vmatpush1.bf16.msra.mxu0 %v1054
        %1080 = vmatprep.subr.bf16.mxu0 0
        %1081 = vmatpush1.bf16.msra.mxu0 %v1053
        %1082 = vmatprep.subr.bf16.mxu0 0
        %1083 = vmatpush1.bf16.msra.mxu0 %v1052
        %1084 = vmatprep.subr.bf16.mxu0 0
        %1085 = vmatpush2.bf16.msra.mxu0 0
        %1086 = vmatprep.subr.bf16.mxu0 0
        %1087 = vmatpush2.bf16.msra.mxu0 0
        %1088 = vmatprep.subr.bf16.mxu0 0
        %1089 = vmatpush2.bf16.msra.mxu0 0
        %1090 = vmatprep.subr.bf16.mxu0 0
        %1091 = vmatpush2.bf16.msra.mxu0 0
        %1092 = vmatprep.subr.bf16.mxu0 0
        %1093 = vmatpush2.bf16.msra.mxu0 0
        %1094 = vmatprep.subr.bf16.mxu0 0
        %1095 = vmatpush2.bf16.msra.mxu0 0
        %1096 = vmatprep.subr.bf16.mxu0 0
        %1097 = vmatpush2.bf16.msra.mxu0 0
        %1098 = vmatprep.subr.bf16.mxu0 0
        %1099 = vmatpush2.bf16.msra.mxu0 0
        %1100 = vmatprep.mubr.bf16.mxu0 0
        %1101 = vmatmul.mubr.bf16.gmra.mxu0 %v1018
        %v1102 = vpop.f32.mrf.mxu0
        %v1103 = vadd.f32 0.0, %v1102
        %v1104 = vpop.f32.mrf.mxu0
        %v1105 = vpop.f32.mrf.mxu0
        %v1106 = vpop.f32.mrf.mxu0
        %1107 = vdwg.mxu0
        %v1108 = vadd.f32 %v1000, %v1103
        %s1109 = scalar_lea.vmem %s3, 320
        %v1110 = vld [vmem:[%s1109] sm:$0xf]
        %v1111 = vld [vmem:[%s1109 + $0x4] sm:$0xf]
        %v1112 = vld [vmem:[%s1109 + $0x8] sm:$0xf]
        %v1113 = vld [vmem:[%s1109 + $0xc] sm:$0xf]
        %v1114 = vld [vmem:[%s1109 + $0x10] sm:$0xf]
        %v1115 = vld [vmem:[%s1109 + $0x14] sm:$0xf]
        %v1116 = vld [vmem:[%s1109 + $0x18] sm:$0xf]
        %v1117 = vld [vmem:[%s1109 + $0x1c] sm:$0xf]
        %v1118 = vld [vmem:[%s1109 + $0x20] sm:$0xf]
        %v1119 = vld [vmem:[%s1109 + $0x24] sm:$0xf]
        %v1120 = vld [vmem:[%s1109 + $0x28] sm:$0xf]
        %v1121 = vld [vmem:[%s1109 + $0x2c] sm:$0xf]
        %v1122 = vld [vmem:[%s1109 + $0x30] sm:$0xf]
        %v1123 = vld [vmem:[%s1109 + $0x34] sm:$0xf]
        %v1124 = vld [vmem:[%s1109 + $0x38] sm:$0xf]
        %v1125 = vld [vmem:[%s1109 + $0x3c] sm:$0xf]
        %v1126 = vrot.slane %v692, 2
        %v1144 = vunpack.c.l.b16 %v1110
        %v1145 = vunpack.c.l.b16 %v1111
        %v1146 = vunpack.c.l.b16 %v1112
        %v1147 = vunpack.c.l.b16 %v1113
        %v1148 = vunpack.c.l.b16 %v1114
        %v1149 = vunpack.c.l.b16 %v1115
        %v1150 = vunpack.c.l.b16 %v1116
        %v1151 = vunpack.c.l.b16 %v1117
        %v1152 = vunpack.c.l.b16 %v1118
        %v1153 = vunpack.c.l.b16 %v1119
        %v1154 = vunpack.c.l.b16 %v1120
        %v1155 = vunpack.c.l.b16 %v1121
        %v1156 = vunpack.c.l.b16 %v1122
        %v1157 = vunpack.c.l.b16 %v1123
        %v1158 = vunpack.c.l.b16 %v1124
        %v1159 = vunpack.c.l.b16 %v1125
        %v1160 = vpack.c.b16 %v1145, %v1144
        %v1161 = vpack.c.b16 %v1147, %v1146
        %v1162 = vpack.c.b16 %v1149, %v1148
        %v1163 = vpack.c.b16 %v1151, %v1150
        %v1164 = vpack.c.b16 %v1153, %v1152
        %v1165 = vpack.c.b16 %v1155, %v1154
        %v1166 = vpack.c.b16 %v1157, %v1156
        %v1167 = vpack.c.b16 %v1159, %v1158
        %1176 = vmatprep.subr.bf16.mxu0 0
        %1177 = vmatpush1.bf16.msra.mxu0 %v1167
        %1178 = vmatprep.subr.bf16.mxu0 0
        %1179 = vmatpush1.bf16.msra.mxu0 %v1166
        %1180 = vmatprep.subr.bf16.mxu0 0
        %1181 = vmatpush1.bf16.msra.mxu0 %v1165
        %1182 = vmatprep.subr.bf16.mxu0 0
        %1183 = vmatpush1.bf16.msra.mxu0 %v1164
        %1184 = vmatprep.subr.bf16.mxu0 0
        %1185 = vmatpush1.bf16.msra.mxu0 %v1163
        %1186 = vmatprep.subr.bf16.mxu0 0
        %1187 = vmatpush1.bf16.msra.mxu0 %v1162
        %1188 = vmatprep.subr.bf16.mxu0 0
        %1189 = vmatpush1.bf16.msra.mxu0 %v1161
        %1190 = vmatprep.subr.bf16.mxu0 0
        %1191 = vmatpush1.bf16.msra.mxu0 %v1160
        %1192 = vmatprep.subr.bf16.mxu0 0
        %1193 = vmatpush2.bf16.msra.mxu0 0
        %1194 = vmatprep.subr.bf16.mxu0 0
        %1195 = vmatpush2.bf16.msra.mxu0 0
        %1196 = vmatprep.subr.bf16.mxu0 0
        %1197 = vmatpush2.bf16.msra.mxu0 0
        %1198 = vmatprep.subr.bf16.mxu0 0
        %1199 = vmatpush2.bf16.msra.mxu0 0
        %1200 = vmatprep.subr.bf16.mxu0 0
        %1201 = vmatpush2.bf16.msra.mxu0 0
        %1202 = vmatprep.subr.bf16.mxu0 0
        %1203 = vmatpush2.bf16.msra.mxu0 0
        %1204 = vmatprep.subr.bf16.mxu0 0
        %1205 = vmatpush2.bf16.msra.mxu0 0
        %1206 = vmatprep.subr.bf16.mxu0 0
        %1207 = vmatpush2.bf16.msra.mxu0 0
        %1208 = vmatprep.mubr.bf16.mxu0 0
        %1209 = vmatmul.mubr.bf16.gmra.mxu0 %v1126
        %v1210 = vpop.f32.mrf.mxu0
        %v1211 = vadd.f32 0.0, %v1210
        %v1212 = vpop.f32.mrf.mxu0
        %v1213 = vpop.f32.mrf.mxu0
        %v1214 = vpop.f32.mrf.mxu0
        %1215 = vdwg.mxu0
        %v1216 = vadd.f32 %v1108, %v1211
        %s1217 = scalar_lea.vmem %s3, 384
        %v1218 = vld [vmem:[%s1217] sm:$0xf]
        %v1219 = vld [vmem:[%s1217 + $0x4] sm:$0xf]
        %v1220 = vld [vmem:[%s1217 + $0x8] sm:$0xf]
        %v1221 = vld [vmem:[%s1217 + $0xc] sm:$0xf]
        %v1222 = vld [vmem:[%s1217 + $0x10] sm:$0xf]
        %v1223 = vld [vmem:[%s1217 + $0x14] sm:$0xf]
        %v1224 = vld [vmem:[%s1217 + $0x18] sm:$0xf]
        %v1225 = vld [vmem:[%s1217 + $0x1c] sm:$0xf]
        %v1226 = vld [vmem:[%s1217 + $0x20] sm:$0xf]
        %v1227 = vld [vmem:[%s1217 + $0x24] sm:$0xf]
        %v1228 = vld [vmem:[%s1217 + $0x28] sm:$0xf]
        %v1229 = vld [vmem:[%s1217 + $0x2c] sm:$0xf]
        %v1230 = vld [vmem:[%s1217 + $0x30] sm:$0xf]
        %v1231 = vld [vmem:[%s1217 + $0x34] sm:$0xf]
        %v1232 = vld [vmem:[%s1217 + $0x38] sm:$0xf]
        %v1233 = vld [vmem:[%s1217 + $0x3c] sm:$0xf]
        %v1234 = vrot.slane %v568, 3
        %v1252 = vunpack.c.l.b16 %v1218
        %v1253 = vunpack.c.l.b16 %v1219
        %v1254 = vunpack.c.l.b16 %v1220
        %v1255 = vunpack.c.l.b16 %v1221
        %v1256 = vunpack.c.l.b16 %v1222
        %v1257 = vunpack.c.l.b16 %v1223
        %v1258 = vunpack.c.l.b16 %v1224
        %v1259 = vunpack.c.l.b16 %v1225
        %v1260 = vunpack.c.l.b16 %v1226
        %v1261 = vunpack.c.l.b16 %v1227
        %v1262 = vunpack.c.l.b16 %v1228
        %v1263 = vunpack.c.l.b16 %v1229
        %v1264 = vunpack.c.l.b16 %v1230
        %v1265 = vunpack.c.l.b16 %v1231
        %v1266 = vunpack.c.l.b16 %v1232
        %v1267 = vunpack.c.l.b16 %v1233
        %v1268 = vpack.c.b16 %v1253, %v1252
        %v1269 = vpack.c.b16 %v1255, %v1254
        %v1270 = vpack.c.b16 %v1257, %v1256
        %v1271 = vpack.c.b16 %v1259, %v1258
        %v1272 = vpack.c.b16 %v1261, %v1260
        %v1273 = vpack.c.b16 %v1263, %v1262
        %v1274 = vpack.c.b16 %v1265, %v1264
        %v1275 = vpack.c.b16 %v1267, %v1266
        %1284 = vmatprep.subr.bf16.mxu0 0
        %1285 = vmatpush1.bf16.msra.mxu0 %v1275
        %1286 = vmatprep.subr.bf16.mxu0 0
        %1287 = vmatpush1.bf16.msra.mxu0 %v1274
        %1288 = vmatprep.subr.bf16.mxu0 0
        %1289 = vmatpush1.bf16.msra.mxu0 %v1273
        %1290 = vmatprep.subr.bf16.mxu0 0
        %1291 = vmatpush1.bf16.msra.mxu0 %v1272
        %1292 = vmatprep.subr.bf16.mxu0 0
        %1293 = vmatpush1.bf16.msra.mxu0 %v1271
        %1294 = vmatprep.subr.bf16.mxu0 0
        %1295 = vmatpush1.bf16.msra.mxu0 %v1270
        %1296 = vmatprep.subr.bf16.mxu0 0
        %1297 = vmatpush1.bf16.msra.mxu0 %v1269
        %1298 = vmatprep.subr.bf16.mxu0 0
        %1299 = vmatpush1.bf16.msra.mxu0 %v1268
        %1300 = vmatprep.subr.bf16.mxu0 0
        %1301 = vmatpush2.bf16.msra.mxu0 0
        %1302 = vmatprep.subr.bf16.mxu0 0
        %1303 = vmatpush2.bf16.msra.mxu0 0
        %1304 = vmatprep.subr.bf16.mxu0 0
        %1305 = vmatpush2.bf16.msra.mxu0 0
        %1306 = vmatprep.subr.bf16.mxu0 0
        %1307 = vmatpush2.bf16.msra.mxu0 0
        %1308 = vmatprep.subr.bf16.mxu0 0
        %1309 = vmatpush2.bf16.msra.mxu0 0
        %1310 = vmatprep.subr.bf16.mxu0 0
        %1311 = vmatpush2.bf16.msra.mxu0 0
        %1312 = vmatprep.subr.bf16.mxu0 0
        %1313 = vmatpush2.bf16.msra.mxu0 0
        %1314 = vmatprep.subr.bf16.mxu0 0
        %1315 = vmatpush2.bf16.msra.mxu0 0
        %1316 = vmatprep.mubr.bf16.mxu0 0
        %1317 = vmatmul.mubr.bf16.gmra.mxu0 %v1234
        %v1318 = vpop.f32.mrf.mxu0
        %v1319 = vadd.f32 0.0, %v1318
        %v1320 = vpop.f32.mrf.mxu0
        %v1321 = vpop.f32.mrf.mxu0
        %v1322 = vpop.f32.mrf.mxu0
        %1323 = vdwg.mxu0
        %v1324 = vadd.f32 %v1216, %v1319
        %s1325 = scalar_lea.vmem %s3, 448
        %v1326 = vld [vmem:[%s1325] sm:$0xf]
        %v1327 = vld [vmem:[%s1325 + $0x4] sm:$0xf]
        %v1328 = vld [vmem:[%s1325 + $0x8] sm:$0xf]
        %v1329 = vld [vmem:[%s1325 + $0xc] sm:$0xf]
        %v1330 = vld [vmem:[%s1325 + $0x10] sm:$0xf]
        %v1331 = vld [vmem:[%s1325 + $0x14] sm:$0xf]
        %v1332 = vld [vmem:[%s1325 + $0x18] sm:$0xf]
        %v1333 = vld [vmem:[%s1325 + $0x1c] sm:$0xf]
        %v1334 = vld [vmem:[%s1325 + $0x20] sm:$0xf]
        %v1335 = vld [vmem:[%s1325 + $0x24] sm:$0xf]
        %v1336 = vld [vmem:[%s1325 + $0x28] sm:$0xf]
        %v1337 = vld [vmem:[%s1325 + $0x2c] sm:$0xf]
        %v1338 = vld [vmem:[%s1325 + $0x30] sm:$0xf]
        %v1339 = vld [vmem:[%s1325 + $0x34] sm:$0xf]
        %v1340 = vld [vmem:[%s1325 + $0x38] sm:$0xf]
        %v1341 = vld [vmem:[%s1325 + $0x3c] sm:$0xf]
        %v1342 = vrot.slane %v692, 3
        %v1360 = vunpack.c.l.b16 %v1326
        %v1361 = vunpack.c.l.b16 %v1327
        %v1362 = vunpack.c.l.b16 %v1328
        %v1363 = vunpack.c.l.b16 %v1329
        %v1364 = vunpack.c.l.b16 %v1330
        %v1365 = vunpack.c.l.b16 %v1331
        %v1366 = vunpack.c.l.b16 %v1332
        %v1367 = vunpack.c.l.b16 %v1333
        %v1368 = vunpack.c.l.b16 %v1334
        %v1369 = vunpack.c.l.b16 %v1335
        %v1370 = vunpack.c.l.b16 %v1336
        %v1371 = vunpack.c.l.b16 %v1337
        %v1372 = vunpack.c.l.b16 %v1338
        %v1373 = vunpack.c.l.b16 %v1339
        %v1374 = vunpack.c.l.b16 %v1340
        %v1375 = vunpack.c.l.b16 %v1341
        %v1376 = vpack.c.b16 %v1361, %v1360
        %v1377 = vpack.c.b16 %v1363, %v1362
        %v1378 = vpack.c.b16 %v1365, %v1364
        %v1379 = vpack.c.b16 %v1367, %v1366
        %v1380 = vpack.c.b16 %v1369, %v1368
        %v1381 = vpack.c.b16 %v1371, %v1370
        %v1382 = vpack.c.b16 %v1373, %v1372
        %v1383 = vpack.c.b16 %v1375, %v1374
        %1392 = vmatprep.subr.bf16.mxu0 0
        %1393 = vmatpush1.bf16.msra.mxu0 %v1383
        %1394 = vmatprep.subr.bf16.mxu0 0
        %1395 = vmatpush1.bf16.msra.mxu0 %v1382
        %1396 = vmatprep.subr.bf16.mxu0 0
        %1397 = vmatpush1.bf16.msra.mxu0 %v1381
        %1398 = vmatprep.subr.bf16.mxu0 0
        %1399 = vmatpush1.bf16.msra.mxu0 %v1380
        %1400 = vmatprep.subr.bf16.mxu0 0
        %1401 = vmatpush1.bf16.msra.mxu0 %v1379
        %1402 = vmatprep.subr.bf16.mxu0 0
        %1403 = vmatpush1.bf16.msra.mxu0 %v1378
        %1404 = vmatprep.subr.bf16.mxu0 0
        %1405 = vmatpush1.bf16.msra.mxu0 %v1377
        %1406 = vmatprep.subr.bf16.mxu0 0
        %1407 = vmatpush1.bf16.msra.mxu0 %v1376
        %1408 = vmatprep.subr.bf16.mxu0 0
        %1409 = vmatpush2.bf16.msra.mxu0 0
        %1410 = vmatprep.subr.bf16.mxu0 0
        %1411 = vmatpush2.bf16.msra.mxu0 0
        %1412 = vmatprep.subr.bf16.mxu0 0
        %1413 = vmatpush2.bf16.msra.mxu0 0
        %1414 = vmatprep.subr.bf16.mxu0 0
        %1415 = vmatpush2.bf16.msra.mxu0 0
        %1416 = vmatprep.subr.bf16.mxu0 0
        %1417 = vmatpush2.bf16.msra.mxu0 0
        %1418 = vmatprep.subr.bf16.mxu0 0
        %1419 = vmatpush2.bf16.msra.mxu0 0
        %1420 = vmatprep.subr.bf16.mxu0 0
        %1421 = vmatpush2.bf16.msra.mxu0 0
        %1422 = vmatprep.subr.bf16.mxu0 0
        %1423 = vmatpush2.bf16.msra.mxu0 0
        %1424 = vmatprep.mubr.bf16.mxu0 0
        %1425 = vmatmul.mubr.bf16.gmra.mxu0 %v1342
        %v1426 = vpop.f32.mrf.mxu0
        %v1427 = vadd.f32 0.0, %v1426
        %v1428 = vpop.f32.mrf.mxu0
        %v1429 = vpop.f32.mrf.mxu0
        %v1430 = vpop.f32.mrf.mxu0
        %1431 = vdwg.mxu0
        %v1432 = vadd.f32 %v1324, %v1427
        %v1433 = vpack.c.bf16 %v564, %v564
        %s1434 = scalar_lea.vmem %s3, 512
        %v1435 = vld [vmem:[%s1434] sm:$0xf]
        %v1436 = vld [vmem:[%s1434 + $0x4] sm:$0xf]
        %v1437 = vld [vmem:[%s1434 + $0x8] sm:$0xf]
        %v1438 = vld [vmem:[%s1434 + $0xc] sm:$0xf]
        %v1439 = vld [vmem:[%s1434 + $0x10] sm:$0xf]
        %v1440 = vld [vmem:[%s1434 + $0x14] sm:$0xf]
        %v1441 = vld [vmem:[%s1434 + $0x18] sm:$0xf]
        %v1442 = vld [vmem:[%s1434 + $0x1c] sm:$0xf]
        %v1443 = vld [vmem:[%s1434 + $0x20] sm:$0xf]
        %v1444 = vld [vmem:[%s1434 + $0x24] sm:$0xf]
        %v1445 = vld [vmem:[%s1434 + $0x28] sm:$0xf]
        %v1446 = vld [vmem:[%s1434 + $0x2c] sm:$0xf]
        %v1447 = vld [vmem:[%s1434 + $0x30] sm:$0xf]
        %v1448 = vld [vmem:[%s1434 + $0x34] sm:$0xf]
        %v1449 = vld [vmem:[%s1434 + $0x38] sm:$0xf]
        %v1450 = vld [vmem:[%s1434 + $0x3c] sm:$0xf]
        %v1467 = vunpack.c.l.b16 %v1435
        %v1468 = vunpack.c.l.b16 %v1436
        %v1469 = vunpack.c.l.b16 %v1437
        %v1470 = vunpack.c.l.b16 %v1438
        %v1471 = vunpack.c.l.b16 %v1439
        %v1472 = vunpack.c.l.b16 %v1440
        %v1473 = vunpack.c.l.b16 %v1441
        %v1474 = vunpack.c.l.b16 %v1442
        %v1475 = vunpack.c.l.b16 %v1443
        %v1476 = vunpack.c.l.b16 %v1444
        %v1477 = vunpack.c.l.b16 %v1445
        %v1478 = vunpack.c.l.b16 %v1446
        %v1479 = vunpack.c.l.b16 %v1447
        %v1480 = vunpack.c.l.b16 %v1448
        %v1481 = vunpack.c.l.b16 %v1449
        %v1482 = vunpack.c.l.b16 %v1450
        %v1483 = vpack.c.b16 %v1468, %v1467
        %v1484 = vpack.c.b16 %v1470, %v1469
        %v1485 = vpack.c.b16 %v1472, %v1471
        %v1486 = vpack.c.b16 %v1474, %v1473
        %v1487 = vpack.c.b16 %v1476, %v1475
        %v1488 = vpack.c.b16 %v1478, %v1477
        %v1489 = vpack.c.b16 %v1480, %v1479
        %v1490 = vpack.c.b16 %v1482, %v1481
        %1499 = vmatprep.subr.bf16.mxu0 0
        %1500 = vmatpush1.bf16.msra.mxu0 %v1490
        %1501 = vmatprep.subr.bf16.mxu0 0
        %1502 = vmatpush1.bf16.msra.mxu0 %v1489
        %1503 = vmatprep.subr.bf16.mxu0 0
        %1504 = vmatpush1.bf16.msra.mxu0 %v1488
        %1505 = vmatprep.subr.bf16.mxu0 0
        %1506 = vmatpush1.bf16.msra.mxu0 %v1487
        %1507 = vmatprep.subr.bf16.mxu0 0
        %1508 = vmatpush1.bf16.msra.mxu0 %v1486
        %1509 = vmatprep.subr.bf16.mxu0 0
        %1510 = vmatpush1.bf16.msra.mxu0 %v1485
        %1511 = vmatprep.subr.bf16.mxu0 0
        %1512 = vmatpush1.bf16.msra.mxu0 %v1484
        %1513 = vmatprep.subr.bf16.mxu0 0
        %1514 = vmatpush1.bf16.msra.mxu0 %v1483
        %1515 = vmatprep.subr.bf16.mxu0 0
        %1516 = vmatpush2.bf16.msra.mxu0 0
        %1517 = vmatprep.subr.bf16.mxu0 0
        %1518 = vmatpush2.bf16.msra.mxu0 0
        %1519 = vmatprep.subr.bf16.mxu0 0
        %1520 = vmatpush2.bf16.msra.mxu0 0
        %1521 = vmatprep.subr.bf16.mxu0 0
        %1522 = vmatpush2.bf16.msra.mxu0 0
        %1523 = vmatprep.subr.bf16.mxu0 0
        %1524 = vmatpush2.bf16.msra.mxu0 0
        %1525 = vmatprep.subr.bf16.mxu0 0
        %1526 = vmatpush2.bf16.msra.mxu0 0
        %1527 = vmatprep.subr.bf16.mxu0 0
        %1528 = vmatpush2.bf16.msra.mxu0 0
        %1529 = vmatprep.subr.bf16.mxu0 0
        %1530 = vmatpush2.bf16.msra.mxu0 0
        %1531 = vmatprep.mubr.bf16.mxu0 0
        %1532 = vmatmul.mubr.bf16.gmra.mxu0 %v1433
        %v1533 = vpop.f32.mrf.mxu0
        %v1534 = vadd.f32 0.0, %v1533
        %v1535 = vpop.f32.mrf.mxu0
        %v1536 = vpop.f32.mrf.mxu0
        %v1537 = vpop.f32.mrf.mxu0
        %1538 = vdwg.mxu0
        %v1539 = vadd.f32 %v1432, %v1534
        %s1540 = scalar_lea.vmem %s3, 576
        %v1541 = vld [vmem:[%s1540] sm:$0xf]
        %v1542 = vld [vmem:[%s1540 + $0x4] sm:$0xf]
        %v1543 = vld [vmem:[%s1540 + $0x8] sm:$0xf]
        %v1544 = vld [vmem:[%s1540 + $0xc] sm:$0xf]
        %v1545 = vld [vmem:[%s1540 + $0x10] sm:$0xf]
        %v1546 = vld [vmem:[%s1540 + $0x14] sm:$0xf]
        %v1547 = vld [vmem:[%s1540 + $0x18] sm:$0xf]
        %v1548 = vld [vmem:[%s1540 + $0x1c] sm:$0xf]
        %v1549 = vld [vmem:[%s1540 + $0x20] sm:$0xf]
        %v1550 = vld [vmem:[%s1540 + $0x24] sm:$0xf]
        %v1551 = vld [vmem:[%s1540 + $0x28] sm:$0xf]
        %v1552 = vld [vmem:[%s1540 + $0x2c] sm:$0xf]
        %v1553 = vld [vmem:[%s1540 + $0x30] sm:$0xf]
        %v1554 = vld [vmem:[%s1540 + $0x34] sm:$0xf]
        %v1555 = vld [vmem:[%s1540 + $0x38] sm:$0xf]
        %v1556 = vld [vmem:[%s1540 + $0x3c] sm:$0xf]
        %v1558 = vshrl.u32 %v1433, 16
        %v1577 = vunpack.c.l.b16 %v1541
        %v1578 = vunpack.c.l.b16 %v1542
        %v1579 = vunpack.c.l.b16 %v1543
        %v1580 = vunpack.c.l.b16 %v1544
        %v1581 = vunpack.c.l.b16 %v1545
        %v1582 = vunpack.c.l.b16 %v1546
        %v1583 = vunpack.c.l.b16 %v1547
        %v1584 = vunpack.c.l.b16 %v1548
        %v1585 = vunpack.c.l.b16 %v1549
        %v1586 = vunpack.c.l.b16 %v1550
        %v1587 = vunpack.c.l.b16 %v1551
        %v1588 = vunpack.c.l.b16 %v1552
        %v1589 = vunpack.c.l.b16 %v1553
        %v1590 = vunpack.c.l.b16 %v1554
        %v1591 = vunpack.c.l.b16 %v1555
        %v1592 = vunpack.c.l.b16 %v1556
        %v1593 = vpack.c.b16 %v1578, %v1577
        %v1594 = vpack.c.b16 %v1580, %v1579
        %v1595 = vpack.c.b16 %v1582, %v1581
        %v1596 = vpack.c.b16 %v1584, %v1583
        %v1597 = vpack.c.b16 %v1586, %v1585
        %v1598 = vpack.c.b16 %v1588, %v1587
        %v1599 = vpack.c.b16 %v1590, %v1589
        %v1600 = vpack.c.b16 %v1592, %v1591
        %1609 = vmatprep.subr.bf16.mxu0 0
        %1610 = vmatpush1.bf16.msra.mxu0 %v1600
        %1611 = vmatprep.subr.bf16.mxu0 0
        %1612 = vmatpush1.bf16.msra.mxu0 %v1599
        %1613 = vmatprep.subr.bf16.mxu0 0
        %1614 = vmatpush1.bf16.msra.mxu0 %v1598
        %1615 = vmatprep.subr.bf16.mxu0 0
        %1616 = vmatpush1.bf16.msra.mxu0 %v1597
        %1617 = vmatprep.subr.bf16.mxu0 0
        %1618 = vmatpush1.bf16.msra.mxu0 %v1596
        %1619 = vmatprep.subr.bf16.mxu0 0
        %1620 = vmatpush1.bf16.msra.mxu0 %v1595
        %1621 = vmatprep.subr.bf16.mxu0 0
        %1622 = vmatpush1.bf16.msra.mxu0 %v1594
        %1623 = vmatprep.subr.bf16.mxu0 0
        %1624 = vmatpush1.bf16.msra.mxu0 %v1593
        %1625 = vmatprep.subr.bf16.mxu0 0
        %1626 = vmatpush2.bf16.msra.mxu0 0
        %1627 = vmatprep.subr.bf16.mxu0 0
        %1628 = vmatpush2.bf16.msra.mxu0 0
        %1629 = vmatprep.subr.bf16.mxu0 0
        %1630 = vmatpush2.bf16.msra.mxu0 0
        %1631 = vmatprep.subr.bf16.mxu0 0
        %1632 = vmatpush2.bf16.msra.mxu0 0
        %1633 = vmatprep.subr.bf16.mxu0 0
        %1634 = vmatpush2.bf16.msra.mxu0 0
        %1635 = vmatprep.subr.bf16.mxu0 0
        %1636 = vmatpush2.bf16.msra.mxu0 0
        %1637 = vmatprep.subr.bf16.mxu0 0
        %1638 = vmatpush2.bf16.msra.mxu0 0
        %1639 = vmatprep.subr.bf16.mxu0 0
        %1640 = vmatpush2.bf16.msra.mxu0 0
        %1641 = vmatprep.mubr.bf16.mxu0 0
        %1642 = vmatmul.mubr.bf16.gmra.mxu0 %v1558
        %v1643 = vpop.f32.mrf.mxu0
        %v1644 = vadd.f32 0.0, %v1643
        %v1645 = vpop.f32.mrf.mxu0
        %v1646 = vpop.f32.mrf.mxu0
        %v1647 = vpop.f32.mrf.mxu0
        %1648 = vdwg.mxu0
        %v1649 = vadd.f32 %v1539, %v1644
        %s1650 = scalar_lea.vmem %s3, 640
        %v1651 = vld [vmem:[%s1650] sm:$0xf]
        %v1652 = vld [vmem:[%s1650 + $0x4] sm:$0xf]
        %v1653 = vld [vmem:[%s1650 + $0x8] sm:$0xf]
        %v1654 = vld [vmem:[%s1650 + $0xc] sm:$0xf]
        %v1655 = vld [vmem:[%s1650 + $0x10] sm:$0xf]
        %v1656 = vld [vmem:[%s1650 + $0x14] sm:$0xf]
        %v1657 = vld [vmem:[%s1650 + $0x18] sm:$0xf]
        %v1658 = vld [vmem:[%s1650 + $0x1c] sm:$0xf]
        %v1659 = vld [vmem:[%s1650 + $0x20] sm:$0xf]
        %v1660 = vld [vmem:[%s1650 + $0x24] sm:$0xf]
        %v1661 = vld [vmem:[%s1650 + $0x28] sm:$0xf]
        %v1662 = vld [vmem:[%s1650 + $0x2c] sm:$0xf]
        %v1663 = vld [vmem:[%s1650 + $0x30] sm:$0xf]
        %v1664 = vld [vmem:[%s1650 + $0x34] sm:$0xf]
        %v1665 = vld [vmem:[%s1650 + $0x38] sm:$0xf]
        %v1666 = vld [vmem:[%s1650 + $0x3c] sm:$0xf]
        %v1668 = vrot.slane %v1433, 1
        %v1686 = vunpack.c.l.b16 %v1651
        %v1687 = vunpack.c.l.b16 %v1652
        %v1688 = vunpack.c.l.b16 %v1653
        %v1689 = vunpack.c.l.b16 %v1654
        %v1690 = vunpack.c.l.b16 %v1655
        %v1691 = vunpack.c.l.b16 %v1656
        %v1692 = vunpack.c.l.b16 %v1657
        %v1693 = vunpack.c.l.b16 %v1658
        %v1694 = vunpack.c.l.b16 %v1659
        %v1695 = vunpack.c.l.b16 %v1660
        %v1696 = vunpack.c.l.b16 %v1661
        %v1697 = vunpack.c.l.b16 %v1662
        %v1698 = vunpack.c.l.b16 %v1663
        %v1699 = vunpack.c.l.b16 %v1664
        %v1700 = vunpack.c.l.b16 %v1665
        %v1701 = vunpack.c.l.b16 %v1666
        %v1702 = vpack.c.b16 %v1687, %v1686
        %v1703 = vpack.c.b16 %v1689, %v1688
        %v1704 = vpack.c.b16 %v1691, %v1690
        %v1705 = vpack.c.b16 %v1693, %v1692
        %v1706 = vpack.c.b16 %v1695, %v1694
        %v1707 = vpack.c.b16 %v1697, %v1696
        %v1708 = vpack.c.b16 %v1699, %v1698
        %v1709 = vpack.c.b16 %v1701, %v1700
        %1718 = vmatprep.subr.bf16.mxu0 0
        %1719 = vmatpush1.bf16.msra.mxu0 %v1709
        %1720 = vmatprep.subr.bf16.mxu0 0
        %1721 = vmatpush1.bf16.msra.mxu0 %v1708
        %1722 = vmatprep.subr.bf16.mxu0 0
        %1723 = vmatpush1.bf16.msra.mxu0 %v1707
        %1724 = vmatprep.subr.bf16.mxu0 0
        %1725 = vmatpush1.bf16.msra.mxu0 %v1706
        %1726 = vmatprep.subr.bf16.mxu0 0
        %1727 = vmatpush1.bf16.msra.mxu0 %v1705
        %1728 = vmatprep.subr.bf16.mxu0 0
        %1729 = vmatpush1.bf16.msra.mxu0 %v1704
        %1730 = vmatprep.subr.bf16.mxu0 0
        %1731 = vmatpush1.bf16.msra.mxu0 %v1703
        %1732 = vmatprep.subr.bf16.mxu0 0
        %1733 = vmatpush1.bf16.msra.mxu0 %v1702
        %1734 = vmatprep.subr.bf16.mxu0 0
        %1735 = vmatpush2.bf16.msra.mxu0 0
        %1736 = vmatprep.subr.bf16.mxu0 0
        %1737 = vmatpush2.bf16.msra.mxu0 0
        %1738 = vmatprep.subr.bf16.mxu0 0
        %1739 = vmatpush2.bf16.msra.mxu0 0
        %1740 = vmatprep.subr.bf16.mxu0 0
        %1741 = vmatpush2.bf16.msra.mxu0 0
        %1742 = vmatprep.subr.bf16.mxu0 0
        %1743 = vmatpush2.bf16.msra.mxu0 0
        %1744 = vmatprep.subr.bf16.mxu0 0
        %1745 = vmatpush2.bf16.msra.mxu0 0
        %1746 = vmatprep.subr.bf16.mxu0 0
        %1747 = vmatpush2.bf16.msra.mxu0 0
        %1748 = vmatprep.subr.bf16.mxu0 0
        %1749 = vmatpush2.bf16.msra.mxu0 0
        %1750 = vmatprep.mubr.bf16.mxu0 0
        %1751 = vmatmul.mubr.bf16.gmra.mxu0 %v1668
        %v1752 = vpop.f32.mrf.mxu0
        %v1753 = vadd.f32 0.0, %v1752
        %v1754 = vpop.f32.mrf.mxu0
        %v1755 = vpop.f32.mrf.mxu0
        %v1756 = vpop.f32.mrf.mxu0
        %1757 = vdwg.mxu0
        %v1758 = vadd.f32 %v1649, %v1753
        %s1759 = scalar_lea.vmem %s3, 704
        %v1760 = vld [vmem:[%s1759] sm:$0xf]
        %v1761 = vld [vmem:[%s1759 + $0x4] sm:$0xf]
        %v1762 = vld [vmem:[%s1759 + $0x8] sm:$0xf]
        %v1763 = vld [vmem:[%s1759 + $0xc] sm:$0xf]
        %v1764 = vld [vmem:[%s1759 + $0x10] sm:$0xf]
        %v1765 = vld [vmem:[%s1759 + $0x14] sm:$0xf]
        %v1766 = vld [vmem:[%s1759 + $0x18] sm:$0xf]
        %v1767 = vld [vmem:[%s1759 + $0x1c] sm:$0xf]
        %v1768 = vld [vmem:[%s1759 + $0x20] sm:$0xf]
        %v1769 = vld [vmem:[%s1759 + $0x24] sm:$0xf]
        %v1770 = vld [vmem:[%s1759 + $0x28] sm:$0xf]
        %v1771 = vld [vmem:[%s1759 + $0x2c] sm:$0xf]
        %v1772 = vld [vmem:[%s1759 + $0x30] sm:$0xf]
        %v1773 = vld [vmem:[%s1759 + $0x34] sm:$0xf]
        %v1774 = vld [vmem:[%s1759 + $0x38] sm:$0xf]
        %v1775 = vld [vmem:[%s1759 + $0x3c] sm:$0xf]
        %v1776 = vrot.slane %v1558, 1
        %v1794 = vunpack.c.l.b16 %v1760
        %v1795 = vunpack.c.l.b16 %v1761
        %v1796 = vunpack.c.l.b16 %v1762
        %v1797 = vunpack.c.l.b16 %v1763
        %v1798 = vunpack.c.l.b16 %v1764
        %v1799 = vunpack.c.l.b16 %v1765
        %v1800 = vunpack.c.l.b16 %v1766
        %v1801 = vunpack.c.l.b16 %v1767
        %v1802 = vunpack.c.l.b16 %v1768
        %v1803 = vunpack.c.l.b16 %v1769
        %v1804 = vunpack.c.l.b16 %v1770
        %v1805 = vunpack.c.l.b16 %v1771
        %v1806 = vunpack.c.l.b16 %v1772
        %v1807 = vunpack.c.l.b16 %v1773
        %v1808 = vunpack.c.l.b16 %v1774
        %v1809 = vunpack.c.l.b16 %v1775
        %v1810 = vpack.c.b16 %v1795, %v1794
        %v1811 = vpack.c.b16 %v1797, %v1796
        %v1812 = vpack.c.b16 %v1799, %v1798
        %v1813 = vpack.c.b16 %v1801, %v1800
        %v1814 = vpack.c.b16 %v1803, %v1802
        %v1815 = vpack.c.b16 %v1805, %v1804
        %v1816 = vpack.c.b16 %v1807, %v1806
        %v1817 = vpack.c.b16 %v1809, %v1808
        %1826 = vmatprep.subr.bf16.mxu0 0
        %1827 = vmatpush1.bf16.msra.mxu0 %v1817
        %1828 = vmatprep.subr.bf16.mxu0 0
        %1829 = vmatpush1.bf16.msra.mxu0 %v1816
        %1830 = vmatprep.subr.bf16.mxu0 0
        %1831 = vmatpush1.bf16.msra.mxu0 %v1815
        %1832 = vmatprep.subr.bf16.mxu0 0
        %1833 = vmatpush1.bf16.msra.mxu0 %v1814
        %1834 = vmatprep.subr.bf16.mxu0 0
        %1835 = vmatpush1.bf16.msra.mxu0 %v1813
        %1836 = vmatprep.subr.bf16.mxu0 0
        %1837 = vmatpush1.bf16.msra.mxu0 %v1812
        %1838 = vmatprep.subr.bf16.mxu0 0
        %1839 = vmatpush1.bf16.msra.mxu0 %v1811
        %1840 = vmatprep.subr.bf16.mxu0 0
        %1841 = vmatpush1.bf16.msra.mxu0 %v1810
        %1842 = vmatprep.subr.bf16.mxu0 0
        %1843 = vmatpush2.bf16.msra.mxu0 0
        %1844 = vmatprep.subr.bf16.mxu0 0
        %1845 = vmatpush2.bf16.msra.mxu0 0
        %1846 = vmatprep.subr.bf16.mxu0 0
        %1847 = vmatpush2.bf16.msra.mxu0 0
        %1848 = vmatprep.subr.bf16.mxu0 0
        %1849 = vmatpush2.bf16.msra.mxu0 0
        %1850 = vmatprep.subr.bf16.mxu0 0
        %1851 = vmatpush2.bf16.msra.mxu0 0
        %1852 = vmatprep.subr.bf16.mxu0 0
        %1853 = vmatpush2.bf16.msra.mxu0 0
        %1854 = vmatprep.subr.bf16.mxu0 0
        %1855 = vmatpush2.bf16.msra.mxu0 0
        %1856 = vmatprep.subr.bf16.mxu0 0
        %1857 = vmatpush2.bf16.msra.mxu0 0
        %1858 = vmatprep.mubr.bf16.mxu0 0
        %1859 = vmatmul.mubr.bf16.gmra.mxu0 %v1776
        %v1860 = vpop.f32.mrf.mxu0
        %v1861 = vadd.f32 0.0, %v1860
        %v1862 = vpop.f32.mrf.mxu0
        %v1863 = vpop.f32.mrf.mxu0
        %v1864 = vpop.f32.mrf.mxu0
        %1865 = vdwg.mxu0
        %v1866 = vadd.f32 %v1758, %v1861
        %s1867 = scalar_lea.vmem %s3, 768
        %v1868 = vld [vmem:[%s1867] sm:$0xf]
        %v1869 = vld [vmem:[%s1867 + $0x4] sm:$0xf]
        %v1870 = vld [vmem:[%s1867 + $0x8] sm:$0xf]
        %v1871 = vld [vmem:[%s1867 + $0xc] sm:$0xf]
        %v1872 = vld [vmem:[%s1867 + $0x10] sm:$0xf]
        %v1873 = vld [vmem:[%s1867 + $0x14] sm:$0xf]
        %v1874 = vld [vmem:[%s1867 + $0x18] sm:$0xf]
        %v1875 = vld [vmem:[%s1867 + $0x1c] sm:$0xf]
        %v1876 = vld [vmem:[%s1867 + $0x20] sm:$0xf]
        %v1877 = vld [vmem:[%s1867 + $0x24] sm:$0xf]
        %v1878 = vld [vmem:[%s1867 + $0x28] sm:$0xf]
        %v1879 = vld [vmem:[%s1867 + $0x2c] sm:$0xf]
        %v1880 = vld [vmem:[%s1867 + $0x30] sm:$0xf]
        %v1881 = vld [vmem:[%s1867 + $0x34] sm:$0xf]
        %v1882 = vld [vmem:[%s1867 + $0x38] sm:$0xf]
        %v1883 = vld [vmem:[%s1867 + $0x3c] sm:$0xf]
        %v1884 = vrot.slane %v1433, 2
        %v1902 = vunpack.c.l.b16 %v1868
        %v1903 = vunpack.c.l.b16 %v1869
        %v1904 = vunpack.c.l.b16 %v1870
        %v1905 = vunpack.c.l.b16 %v1871
        %v1906 = vunpack.c.l.b16 %v1872
        %v1907 = vunpack.c.l.b16 %v1873
        %v1908 = vunpack.c.l.b16 %v1874
        %v1909 = vunpack.c.l.b16 %v1875
        %v1910 = vunpack.c.l.b16 %v1876
        %v1911 = vunpack.c.l.b16 %v1877
        %v1912 = vunpack.c.l.b16 %v1878
        %v1913 = vunpack.c.l.b16 %v1879
        %v1914 = vunpack.c.l.b16 %v1880
        %v1915 = vunpack.c.l.b16 %v1881
        %v1916 = vunpack.c.l.b16 %v1882
        %v1917 = vunpack.c.l.b16 %v1883
        %v1918 = vpack.c.b16 %v1903, %v1902
        %v1919 = vpack.c.b16 %v1905, %v1904
        %v1920 = vpack.c.b16 %v1907, %v1906
        %v1921 = vpack.c.b16 %v1909, %v1908
        %v1922 = vpack.c.b16 %v1911, %v1910
        %v1923 = vpack.c.b16 %v1913, %v1912
        %v1924 = vpack.c.b16 %v1915, %v1914
        %v1925 = vpack.c.b16 %v1917, %v1916
        %1934 = vmatprep.subr.bf16.mxu0 0
        %1935 = vmatpush1.bf16.msra.mxu0 %v1925
        %1936 = vmatprep.subr.bf16.mxu0 0
        %1937 = vmatpush1.bf16.msra.mxu0 %v1924
        %1938 = vmatprep.subr.bf16.mxu0 0
        %1939 = vmatpush1.bf16.msra.mxu0 %v1923
        %1940 = vmatprep.subr.bf16.mxu0 0
        %1941 = vmatpush1.bf16.msra.mxu0 %v1922
        %1942 = vmatprep.subr.bf16.mxu0 0
        %1943 = vmatpush1.bf16.msra.mxu0 %v1921
        %1944 = vmatprep.subr.bf16.mxu0 0
        %1945 = vmatpush1.bf16.msra.mxu0 %v1920
        %1946 = vmatprep.subr.bf16.mxu0 0
        %1947 = vmatpush1.bf16.msra.mxu0 %v1919
        %1948 = vmatprep.subr.bf16.mxu0 0
        %1949 = vmatpush1.bf16.msra.mxu0 %v1918
        %1950 = vmatprep.subr.bf16.mxu0 0
        %1951 = vmatpush2.bf16.msra.mxu0 0
        %1952 = vmatprep.subr.bf16.mxu0 0
        %1953 = vmatpush2.bf16.msra.mxu0 0
        %1954 = vmatprep.subr.bf16.mxu0 0
        %1955 = vmatpush2.bf16.msra.mxu0 0
        %1956 = vmatprep.subr.bf16.mxu0 0
        %1957 = vmatpush2.bf16.msra.mxu0 0
        %1958 = vmatprep.subr.bf16.mxu0 0
        %1959 = vmatpush2.bf16.msra.mxu0 0
        %1960 = vmatprep.subr.bf16.mxu0 0
        %1961 = vmatpush2.bf16.msra.mxu0 0
        %1962 = vmatprep.subr.bf16.mxu0 0
        %1963 = vmatpush2.bf16.msra.mxu0 0
        %1964 = vmatprep.subr.bf16.mxu0 0
        %1965 = vmatpush2.bf16.msra.mxu0 0
        %1966 = vmatprep.mubr.bf16.mxu0 0
        %1967 = vmatmul.mubr.bf16.gmra.mxu0 %v1884
        %v1968 = vpop.f32.mrf.mxu0
        %v1969 = vadd.f32 0.0, %v1968
        %v1970 = vpop.f32.mrf.mxu0
        %v1971 = vpop.f32.mrf.mxu0
        %v1972 = vpop.f32.mrf.mxu0
        %1973 = vdwg.mxu0
        %v1974 = vadd.f32 %v1866, %v1969
        %s1975 = scalar_lea.vmem %s3, 832
        %v1976 = vld [vmem:[%s1975] sm:$0xf]
        %v1977 = vld [vmem:[%s1975 + $0x4] sm:$0xf]
        %v1978 = vld [vmem:[%s1975 + $0x8] sm:$0xf]
        %v1979 = vld [vmem:[%s1975 + $0xc] sm:$0xf]
        %v1980 = vld [vmem:[%s1975 + $0x10] sm:$0xf]
        %v1981 = vld [vmem:[%s1975 + $0x14] sm:$0xf]
        %v1982 = vld [vmem:[%s1975 + $0x18] sm:$0xf]
        %v1983 = vld [vmem:[%s1975 + $0x1c] sm:$0xf]
        %v1984 = vld [vmem:[%s1975 + $0x20] sm:$0xf]
        %v1985 = vld [vmem:[%s1975 + $0x24] sm:$0xf]
        %v1986 = vld [vmem:[%s1975 + $0x28] sm:$0xf]
        %v1987 = vld [vmem:[%s1975 + $0x2c] sm:$0xf]
        %v1988 = vld [vmem:[%s1975 + $0x30] sm:$0xf]
        %v1989 = vld [vmem:[%s1975 + $0x34] sm:$0xf]
        %v1990 = vld [vmem:[%s1975 + $0x38] sm:$0xf]
        %v1991 = vld [vmem:[%s1975 + $0x3c] sm:$0xf]
        %v1992 = vrot.slane %v1558, 2
        %v2010 = vunpack.c.l.b16 %v1976
        %v2011 = vunpack.c.l.b16 %v1977
        %v2012 = vunpack.c.l.b16 %v1978
        %v2013 = vunpack.c.l.b16 %v1979
        %v2014 = vunpack.c.l.b16 %v1980
        %v2015 = vunpack.c.l.b16 %v1981
        %v2016 = vunpack.c.l.b16 %v1982
        %v2017 = vunpack.c.l.b16 %v1983
        %v2018 = vunpack.c.l.b16 %v1984
        %v2019 = vunpack.c.l.b16 %v1985
        %v2020 = vunpack.c.l.b16 %v1986
        %v2021 = vunpack.c.l.b16 %v1987
        %v2022 = vunpack.c.l.b16 %v1988
        %v2023 = vunpack.c.l.b16 %v1989
        %v2024 = vunpack.c.l.b16 %v1990
        %v2025 = vunpack.c.l.b16 %v1991
        %v2026 = vpack.c.b16 %v2011, %v2010
        %v2027 = vpack.c.b16 %v2013, %v2012
        %v2028 = vpack.c.b16 %v2015, %v2014
        %v2029 = vpack.c.b16 %v2017, %v2016
        %v2030 = vpack.c.b16 %v2019, %v2018
        %v2031 = vpack.c.b16 %v2021, %v2020
        %v2032 = vpack.c.b16 %v2023, %v2022
        %v2033 = vpack.c.b16 %v2025, %v2024
        %2042 = vmatprep.subr.bf16.mxu0 0
        %2043 = vmatpush1.bf16.msra.mxu0 %v2033
        %2044 = vmatprep.subr.bf16.mxu0 0
        %2045 = vmatpush1.bf16.msra.mxu0 %v2032
        %2046 = vmatprep.subr.bf16.mxu0 0
        %2047 = vmatpush1.bf16.msra.mxu0 %v2031
        %2048 = vmatprep.subr.bf16.mxu0 0
        %2049 = vmatpush1.bf16.msra.mxu0 %v2030
        %2050 = vmatprep.subr.bf16.mxu0 0
        %2051 = vmatpush1.bf16.msra.mxu0 %v2029
        %2052 = vmatprep.subr.bf16.mxu0 0
        %2053 = vmatpush1.bf16.msra.mxu0 %v2028
        %2054 = vmatprep.subr.bf16.mxu0 0
        %2055 = vmatpush1.bf16.msra.mxu0 %v2027
        %2056 = vmatprep.subr.bf16.mxu0 0
        %2057 = vmatpush1.bf16.msra.mxu0 %v2026
        %2058 = vmatprep.subr.bf16.mxu0 0
        %2059 = vmatpush2.bf16.msra.mxu0 0
        %2060 = vmatprep.subr.bf16.mxu0 0
        %2061 = vmatpush2.bf16.msra.mxu0 0
        %2062 = vmatprep.subr.bf16.mxu0 0
        %2063 = vmatpush2.bf16.msra.mxu0 0
        %2064 = vmatprep.subr.bf16.mxu0 0
        %2065 = vmatpush2.bf16.msra.mxu0 0
        %2066 = vmatprep.subr.bf16.mxu0 0
        %2067 = vmatpush2.bf16.msra.mxu0 0
        %2068 = vmatprep.subr.bf16.mxu0 0
        %2069 = vmatpush2.bf16.msra.mxu0 0
        %2070 = vmatprep.subr.bf16.mxu0 0
        %2071 = vmatpush2.bf16.msra.mxu0 0
        %2072 = vmatprep.subr.bf16.mxu0 0
        %2073 = vmatpush2.bf16.msra.mxu0 0
        %2074 = vmatprep.mubr.bf16.mxu0 0
        %2075 = vmatmul.mubr.bf16.gmra.mxu0 %v1992
        %v2076 = vpop.f32.mrf.mxu0
        %v2077 = vadd.f32 0.0, %v2076
        %v2078 = vpop.f32.mrf.mxu0
        %v2079 = vpop.f32.mrf.mxu0
        %v2080 = vpop.f32.mrf.mxu0
        %2081 = vdwg.mxu0
        %v2082 = vadd.f32 %v1974, %v2077
        %s2083 = scalar_lea.vmem %s3, 896
        %v2084 = vld [vmem:[%s2083] sm:$0xf]
        %v2085 = vld [vmem:[%s2083 + $0x4] sm:$0xf]
        %v2086 = vld [vmem:[%s2083 + $0x8] sm:$0xf]
        %v2087 = vld [vmem:[%s2083 + $0xc] sm:$0xf]
        %v2088 = vld [vmem:[%s2083 + $0x10] sm:$0xf]
        %v2089 = vld [vmem:[%s2083 + $0x14] sm:$0xf]
        %v2090 = vld [vmem:[%s2083 + $0x18] sm:$0xf]
        %v2091 = vld [vmem:[%s2083 + $0x1c] sm:$0xf]
        %v2092 = vld [vmem:[%s2083 + $0x20] sm:$0xf]
        %v2093 = vld [vmem:[%s2083 + $0x24] sm:$0xf]
        %v2094 = vld [vmem:[%s2083 + $0x28] sm:$0xf]
        %v2095 = vld [vmem:[%s2083 + $0x2c] sm:$0xf]
        %v2096 = vld [vmem:[%s2083 + $0x30] sm:$0xf]
        %v2097 = vld [vmem:[%s2083 + $0x34] sm:$0xf]
        %v2098 = vld [vmem:[%s2083 + $0x38] sm:$0xf]
        %v2099 = vld [vmem:[%s2083 + $0x3c] sm:$0xf]
        %v2100 = vrot.slane %v1433, 3
        %v2118 = vunpack.c.l.b16 %v2084
        %v2119 = vunpack.c.l.b16 %v2085
        %v2120 = vunpack.c.l.b16 %v2086
        %v2121 = vunpack.c.l.b16 %v2087
        %v2122 = vunpack.c.l.b16 %v2088
        %v2123 = vunpack.c.l.b16 %v2089
        %v2124 = vunpack.c.l.b16 %v2090
        %v2125 = vunpack.c.l.b16 %v2091
        %v2126 = vunpack.c.l.b16 %v2092
        %v2127 = vunpack.c.l.b16 %v2093
        %v2128 = vunpack.c.l.b16 %v2094
        %v2129 = vunpack.c.l.b16 %v2095
        %v2130 = vunpack.c.l.b16 %v2096
        %v2131 = vunpack.c.l.b16 %v2097
        %v2132 = vunpack.c.l.b16 %v2098
        %v2133 = vunpack.c.l.b16 %v2099
        %v2134 = vpack.c.b16 %v2119, %v2118
        %v2135 = vpack.c.b16 %v2121, %v2120
        %v2136 = vpack.c.b16 %v2123, %v2122
        %v2137 = vpack.c.b16 %v2125, %v2124
        %v2138 = vpack.c.b16 %v2127, %v2126
        %v2139 = vpack.c.b16 %v2129, %v2128
        %v2140 = vpack.c.b16 %v2131, %v2130
        %v2141 = vpack.c.b16 %v2133, %v2132
        %2150 = vmatprep.subr.bf16.mxu0 0
        %2151 = vmatpush1.bf16.msra.mxu0 %v2141
        %2152 = vmatprep.subr.bf16.mxu0 0
        %2153 = vmatpush1.bf16.msra.mxu0 %v2140
        %2154 = vmatprep.subr.bf16.mxu0 0
        %2155 = vmatpush1.bf16.msra.mxu0 %v2139
        %2156 = vmatprep.subr.bf16.mxu0 0
        %2157 = vmatpush1.bf16.msra.mxu0 %v2138
        %2158 = vmatprep.subr.bf16.mxu0 0
        %2159 = vmatpush1.bf16.msra.mxu0 %v2137
        %2160 = vmatprep.subr.bf16.mxu0 0
        %2161 = vmatpush1.bf16.msra.mxu0 %v2136
        %2162 = vmatprep.subr.bf16.mxu0 0
        %2163 = vmatpush1.bf16.msra.mxu0 %v2135
        %2164 = vmatprep.subr.bf16.mxu0 0
        %2165 = vmatpush1.bf16.msra.mxu0 %v2134
        %2166 = vmatprep.subr.bf16.mxu0 0
        %2167 = vmatpush2.bf16.msra.mxu0 0
        %2168 = vmatprep.subr.bf16.mxu0 0
        %2169 = vmatpush2.bf16.msra.mxu0 0
        %2170 = vmatprep.subr.bf16.mxu0 0
        %2171 = vmatpush2.bf16.msra.mxu0 0
        %2172 = vmatprep.subr.bf16.mxu0 0
        %2173 = vmatpush2.bf16.msra.mxu0 0
        %2174 = vmatprep.subr.bf16.mxu0 0
        %2175 = vmatpush2.bf16.msra.mxu0 0
        %2176 = vmatprep.subr.bf16.mxu0 0
        %2177 = vmatpush2.bf16.msra.mxu0 0
        %2178 = vmatprep.subr.bf16.mxu0 0
        %2179 = vmatpush2.bf16.msra.mxu0 0
        %2180 = vmatprep.subr.bf16.mxu0 0
        %2181 = vmatpush2.bf16.msra.mxu0 0
        %2182 = vmatprep.mubr.bf16.mxu0 0
        %2183 = vmatmul.mubr.bf16.gmra.mxu0 %v2100
        %v2184 = vpop.f32.mrf.mxu0
        %v2185 = vadd.f32 0.0, %v2184
        %v2186 = vpop.f32.mrf.mxu0
        %v2187 = vpop.f32.mrf.mxu0
        %v2188 = vpop.f32.mrf.mxu0
        %2189 = vdwg.mxu0
        %v2190 = vadd.f32 %v2082, %v2185
        %s2191 = scalar_lea.vmem %s3, 960
        %v2192 = vld [vmem:[%s2191] sm:$0xf]
        %v2193 = vld [vmem:[%s2191 + $0x4] sm:$0xf]
        %v2194 = vld [vmem:[%s2191 + $0x8] sm:$0xf]
        %v2195 = vld [vmem:[%s2191 + $0xc] sm:$0xf]
        %v2196 = vld [vmem:[%s2191 + $0x10] sm:$0xf]
        %v2197 = vld [vmem:[%s2191 + $0x14] sm:$0xf]
        %v2198 = vld [vmem:[%s2191 + $0x18] sm:$0xf]
        %v2199 = vld [vmem:[%s2191 + $0x1c] sm:$0xf]
        %v2200 = vld [vmem:[%s2191 + $0x20] sm:$0xf]
        %v2201 = vld [vmem:[%s2191 + $0x24] sm:$0xf]
        %v2202 = vld [vmem:[%s2191 + $0x28] sm:$0xf]
        %v2203 = vld [vmem:[%s2191 + $0x2c] sm:$0xf]
        %v2204 = vld [vmem:[%s2191 + $0x30] sm:$0xf]
        %v2205 = vld [vmem:[%s2191 + $0x34] sm:$0xf]
        %v2206 = vld [vmem:[%s2191 + $0x38] sm:$0xf]
        %v2207 = vld [vmem:[%s2191 + $0x3c] sm:$0xf]
        %v2208 = vrot.slane %v1558, 3
        %v2226 = vunpack.c.l.b16 %v2192
        %v2227 = vunpack.c.l.b16 %v2193
        %v2228 = vunpack.c.l.b16 %v2194
        %v2229 = vunpack.c.l.b16 %v2195
        %v2230 = vunpack.c.l.b16 %v2196
        %v2231 = vunpack.c.l.b16 %v2197
        %v2232 = vunpack.c.l.b16 %v2198
        %v2233 = vunpack.c.l.b16 %v2199
        %v2234 = vunpack.c.l.b16 %v2200
        %v2235 = vunpack.c.l.b16 %v2201
        %v2236 = vunpack.c.l.b16 %v2202
        %v2237 = vunpack.c.l.b16 %v2203
        %v2238 = vunpack.c.l.b16 %v2204
        %v2239 = vunpack.c.l.b16 %v2205
        %v2240 = vunpack.c.l.b16 %v2206
        %v2241 = vunpack.c.l.b16 %v2207
        %v2242 = vpack.c.b16 %v2227, %v2226
        %v2243 = vpack.c.b16 %v2229, %v2228
        %v2244 = vpack.c.b16 %v2231, %v2230
        %v2245 = vpack.c.b16 %v2233, %v2232
        %v2246 = vpack.c.b16 %v2235, %v2234
        %v2247 = vpack.c.b16 %v2237, %v2236
        %v2248 = vpack.c.b16 %v2239, %v2238
        %v2249 = vpack.c.b16 %v2241, %v2240
        %2258 = vmatprep.subr.bf16.mxu0 0
        %2259 = vmatpush1.bf16.msra.mxu0 %v2249
        %2260 = vmatprep.subr.bf16.mxu0 0
        %2261 = vmatpush1.bf16.msra.mxu0 %v2248
        %2262 = vmatprep.subr.bf16.mxu0 0
        %2263 = vmatpush1.bf16.msra.mxu0 %v2247
        %2264 = vmatprep.subr.bf16.mxu0 0
        %2265 = vmatpush1.bf16.msra.mxu0 %v2246
        %2266 = vmatprep.subr.bf16.mxu0 0
        %2267 = vmatpush1.bf16.msra.mxu0 %v2245
        %2268 = vmatprep.subr.bf16.mxu0 0
        %2269 = vmatpush1.bf16.msra.mxu0 %v2244
        %2270 = vmatprep.subr.bf16.mxu0 0
        %2271 = vmatpush1.bf16.msra.mxu0 %v2243
        %2272 = vmatprep.subr.bf16.mxu0 0
        %2273 = vmatpush1.bf16.msra.mxu0 %v2242
        %2274 = vmatprep.subr.bf16.mxu0 0
        %2275 = vmatpush2.bf16.msra.mxu0 0
        %2276 = vmatprep.subr.bf16.mxu0 0
        %2277 = vmatpush2.bf16.msra.mxu0 0
        %2278 = vmatprep.subr.bf16.mxu0 0
        %2279 = vmatpush2.bf16.msra.mxu0 0
        %2280 = vmatprep.subr.bf16.mxu0 0
        %2281 = vmatpush2.bf16.msra.mxu0 0
        %2282 = vmatprep.subr.bf16.mxu0 0
        %2283 = vmatpush2.bf16.msra.mxu0 0
        %2284 = vmatprep.subr.bf16.mxu0 0
        %2285 = vmatpush2.bf16.msra.mxu0 0
        %2286 = vmatprep.subr.bf16.mxu0 0
        %2287 = vmatpush2.bf16.msra.mxu0 0
        %2288 = vmatprep.subr.bf16.mxu0 0
        %2289 = vmatpush2.bf16.msra.mxu0 0
        %2290 = vmatprep.mubr.bf16.mxu0 0
        %2291 = vmatmul.mubr.bf16.gmra.mxu0 %v2208
        %v2292 = vpop.f32.mrf.mxu0
        %v2293 = vadd.f32 0.0, %v2292
        %v2294 = vpop.f32.mrf.mxu0
        %v2295 = vpop.f32.mrf.mxu0
        %v2296 = vpop.f32.mrf.mxu0
        %2297 = vdwg.mxu0
        %v2298 = vadd.f32 %v2190, %v2293
        %v2299 = vpack.c.bf16 %v565, %v565
        %s2300 = scalar_lea.vmem %s3, 1024
        %v2301 = vld [vmem:[%s2300] sm:$0xf]
        %v2302 = vld [vmem:[%s2300 + $0x4] sm:$0xf]
        %v2303 = vld [vmem:[%s2300 + $0x8] sm:$0xf]
        %v2304 = vld [vmem:[%s2300 + $0xc] sm:$0xf]
        %v2305 = vld [vmem:[%s2300 + $0x10] sm:$0xf]
        %v2306 = vld [vmem:[%s2300 + $0x14] sm:$0xf]
        %v2307 = vld [vmem:[%s2300 + $0x18] sm:$0xf]
        %v2308 = vld [vmem:[%s2300 + $0x1c] sm:$0xf]
        %v2309 = vld [vmem:[%s2300 + $0x20] sm:$0xf]
        %v2310 = vld [vmem:[%s2300 + $0x24] sm:$0xf]
        %v2311 = vld [vmem:[%s2300 + $0x28] sm:$0xf]
        %v2312 = vld [vmem:[%s2300 + $0x2c] sm:$0xf]
        %v2313 = vld [vmem:[%s2300 + $0x30] sm:$0xf]
        %v2314 = vld [vmem:[%s2300 + $0x34] sm:$0xf]
        %v2315 = vld [vmem:[%s2300 + $0x38] sm:$0xf]
        %v2316 = vld [vmem:[%s2300 + $0x3c] sm:$0xf]
        %v2333 = vunpack.c.l.b16 %v2301
        %v2334 = vunpack.c.l.b16 %v2302
        %v2335 = vunpack.c.l.b16 %v2303
        %v2336 = vunpack.c.l.b16 %v2304
        %v2337 = vunpack.c.l.b16 %v2305
        %v2338 = vunpack.c.l.b16 %v2306
        %v2339 = vunpack.c.l.b16 %v2307
        %v2340 = vunpack.c.l.b16 %v2308
        %v2341 = vunpack.c.l.b16 %v2309
        %v2342 = vunpack.c.l.b16 %v2310
        %v2343 = vunpack.c.l.b16 %v2311
        %v2344 = vunpack.c.l.b16 %v2312
        %v2345 = vunpack.c.l.b16 %v2313
        %v2346 = vunpack.c.l.b16 %v2314
        %v2347 = vunpack.c.l.b16 %v2315
        %v2348 = vunpack.c.l.b16 %v2316
        %v2349 = vpack.c.b16 %v2334, %v2333
        %v2350 = vpack.c.b16 %v2336, %v2335
        %v2351 = vpack.c.b16 %v2338, %v2337
        %v2352 = vpack.c.b16 %v2340, %v2339
        %v2353 = vpack.c.b16 %v2342, %v2341
        %v2354 = vpack.c.b16 %v2344, %v2343
        %v2355 = vpack.c.b16 %v2346, %v2345
        %v2356 = vpack.c.b16 %v2348, %v2347
        %2365 = vmatprep.subr.bf16.mxu0 0
        %2366 = vmatpush1.bf16.msra.mxu0 %v2356
        %2367 = vmatprep.subr.bf16.mxu0 0
        %2368 = vmatpush1.bf16.msra.mxu0 %v2355
        %2369 = vmatprep.subr.bf16.mxu0 0
        %2370 = vmatpush1.bf16.msra.mxu0 %v2354
        %2371 = vmatprep.subr.bf16.mxu0 0
        %2372 = vmatpush1.bf16.msra.mxu0 %v2353
        %2373 = vmatprep.subr.bf16.mxu0 0
        %2374 = vmatpush1.bf16.msra.mxu0 %v2352
        %2375 = vmatprep.subr.bf16.mxu0 0
        %2376 = vmatpush1.bf16.msra.mxu0 %v2351
        %2377 = vmatprep.subr.bf16.mxu0 0
        %2378 = vmatpush1.bf16.msra.mxu0 %v2350
        %2379 = vmatprep.subr.bf16.mxu0 0
        %2380 = vmatpush1.bf16.msra.mxu0 %v2349
        %2381 = vmatprep.subr.bf16.mxu0 0
        %2382 = vmatpush2.bf16.msra.mxu0 0
        %2383 = vmatprep.subr.bf16.mxu0 0
        %2384 = vmatpush2.bf16.msra.mxu0 0
        %2385 = vmatprep.subr.bf16.mxu0 0
        %2386 = vmatpush2.bf16.msra.mxu0 0
        %2387 = vmatprep.subr.bf16.mxu0 0
        %2388 = vmatpush2.bf16.msra.mxu0 0
        %2389 = vmatprep.subr.bf16.mxu0 0
        %2390 = vmatpush2.bf16.msra.mxu0 0
        %2391 = vmatprep.subr.bf16.mxu0 0
        %2392 = vmatpush2.bf16.msra.mxu0 0
        %2393 = vmatprep.subr.bf16.mxu0 0
        %2394 = vmatpush2.bf16.msra.mxu0 0
        %2395 = vmatprep.subr.bf16.mxu0 0
        %2396 = vmatpush2.bf16.msra.mxu0 0
        %2397 = vmatprep.mubr.bf16.mxu0 0
        %2398 = vmatmul.mubr.bf16.gmra.mxu0 %v2299
        %v2399 = vpop.f32.mrf.mxu0
        %v2400 = vadd.f32 0.0, %v2399
        %v2401 = vpop.f32.mrf.mxu0
        %v2402 = vpop.f32.mrf.mxu0
        %v2403 = vpop.f32.mrf.mxu0
        %2404 = vdwg.mxu0
        %v2405 = vadd.f32 %v2298, %v2400
        %s2406 = scalar_lea.vmem %s3, 1088
        %v2407 = vld [vmem:[%s2406] sm:$0xf]
        %v2408 = vld [vmem:[%s2406 + $0x4] sm:$0xf]
        %v2409 = vld [vmem:[%s2406 + $0x8] sm:$0xf]
        %v2410 = vld [vmem:[%s2406 + $0xc] sm:$0xf]
        %v2411 = vld [vmem:[%s2406 + $0x10] sm:$0xf]
        %v2412 = vld [vmem:[%s2406 + $0x14] sm:$0xf]
        %v2413 = vld [vmem:[%s2406 + $0x18] sm:$0xf]
        %v2414 = vld [vmem:[%s2406 + $0x1c] sm:$0xf]
        %v2415 = vld [vmem:[%s2406 + $0x20] sm:$0xf]
        %v2416 = vld [vmem:[%s2406 + $0x24] sm:$0xf]
        %v2417 = vld [vmem:[%s2406 + $0x28] sm:$0xf]
        %v2418 = vld [vmem:[%s2406 + $0x2c] sm:$0xf]
        %v2419 = vld [vmem:[%s2406 + $0x30] sm:$0xf]
        %v2420 = vld [vmem:[%s2406 + $0x34] sm:$0xf]
        %v2421 = vld [vmem:[%s2406 + $0x38] sm:$0xf]
        %v2422 = vld [vmem:[%s2406 + $0x3c] sm:$0xf]
        %v2424 = vshrl.u32 %v2299, 16
        %v2443 = vunpack.c.l.b16 %v2407
        %v2444 = vunpack.c.l.b16 %v2408
        %v2445 = vunpack.c.l.b16 %v2409
        %v2446 = vunpack.c.l.b16 %v2410
        %v2447 = vunpack.c.l.b16 %v2411
        %v2448 = vunpack.c.l.b16 %v2412
        %v2449 = vunpack.c.l.b16 %v2413
        %v2450 = vunpack.c.l.b16 %v2414
        %v2451 = vunpack.c.l.b16 %v2415
        %v2452 = vunpack.c.l.b16 %v2416
        %v2453 = vunpack.c.l.b16 %v2417
        %v2454 = vunpack.c.l.b16 %v2418
        %v2455 = vunpack.c.l.b16 %v2419
        %v2456 = vunpack.c.l.b16 %v2420
        %v2457 = vunpack.c.l.b16 %v2421
        %v2458 = vunpack.c.l.b16 %v2422
        %v2459 = vpack.c.b16 %v2444, %v2443
        %v2460 = vpack.c.b16 %v2446, %v2445
        %v2461 = vpack.c.b16 %v2448, %v2447
        %v2462 = vpack.c.b16 %v2450, %v2449
        %v2463 = vpack.c.b16 %v2452, %v2451
        %v2464 = vpack.c.b16 %v2454, %v2453
        %v2465 = vpack.c.b16 %v2456, %v2455
        %v2466 = vpack.c.b16 %v2458, %v2457
        %2475 = vmatprep.subr.bf16.mxu0 0
        %2476 = vmatpush1.bf16.msra.mxu0 %v2466
        %2477 = vmatprep.subr.bf16.mxu0 0
        %2478 = vmatpush1.bf16.msra.mxu0 %v2465
        %2479 = vmatprep.subr.bf16.mxu0 0
        %2480 = vmatpush1.bf16.msra.mxu0 %v2464
        %2481 = vmatprep.subr.bf16.mxu0 0
        %2482 = vmatpush1.bf16.msra.mxu0 %v2463
        %2483 = vmatprep.subr.bf16.mxu0 0
        %2484 = vmatpush1.bf16.msra.mxu0 %v2462
        %2485 = vmatprep.subr.bf16.mxu0 0
        %2486 = vmatpush1.bf16.msra.mxu0 %v2461
        %2487 = vmatprep.subr.bf16.mxu0 0
        %2488 = vmatpush1.bf16.msra.mxu0 %v2460
        %2489 = vmatprep.subr.bf16.mxu0 0
        %2490 = vmatpush1.bf16.msra.mxu0 %v2459
        %2491 = vmatprep.subr.bf16.mxu0 0
        %2492 = vmatpush2.bf16.msra.mxu0 0
        %2493 = vmatprep.subr.bf16.mxu0 0
        %2494 = vmatpush2.bf16.msra.mxu0 0
        %2495 = vmatprep.subr.bf16.mxu0 0
        %2496 = vmatpush2.bf16.msra.mxu0 0
        %2497 = vmatprep.subr.bf16.mxu0 0
        %2498 = vmatpush2.bf16.msra.mxu0 0
        %2499 = vmatprep.subr.bf16.mxu0 0
        %2500 = vmatpush2.bf16.msra.mxu0 0
        %2501 = vmatprep.subr.bf16.mxu0 0
        %2502 = vmatpush2.bf16.msra.mxu0 0
        %2503 = vmatprep.subr.bf16.mxu0 0
        %2504 = vmatpush2.bf16.msra.mxu0 0
        %2505 = vmatprep.subr.bf16.mxu0 0
        %2506 = vmatpush2.bf16.msra.mxu0 0
        %2507 = vmatprep.mubr.bf16.mxu0 0
        %2508 = vmatmul.mubr.bf16.gmra.mxu0 %v2424
        %v2509 = vpop.f32.mrf.mxu0
        %v2510 = vadd.f32 0.0, %v2509
        %v2511 = vpop.f32.mrf.mxu0
        %v2512 = vpop.f32.mrf.mxu0
        %v2513 = vpop.f32.mrf.mxu0
        %2514 = vdwg.mxu0
        %v2515 = vadd.f32 %v2405, %v2510
        %s2516 = scalar_lea.vmem %s3, 1152
        %v2517 = vld [vmem:[%s2516] sm:$0xf]
        %v2518 = vld [vmem:[%s2516 + $0x4] sm:$0xf]
        %v2519 = vld [vmem:[%s2516 + $0x8] sm:$0xf]
        %v2520 = vld [vmem:[%s2516 + $0xc] sm:$0xf]
        %v2521 = vld [vmem:[%s2516 + $0x10] sm:$0xf]
        %v2522 = vld [vmem:[%s2516 + $0x14] sm:$0xf]
        %v2523 = vld [vmem:[%s2516 + $0x18] sm:$0xf]
        %v2524 = vld [vmem:[%s2516 + $0x1c] sm:$0xf]
        %v2525 = vld [vmem:[%s2516 + $0x20] sm:$0xf]
        %v2526 = vld [vmem:[%s2516 + $0x24] sm:$0xf]
        %v2527 = vld [vmem:[%s2516 + $0x28] sm:$0xf]
        %v2528 = vld [vmem:[%s2516 + $0x2c] sm:$0xf]
        %v2529 = vld [vmem:[%s2516 + $0x30] sm:$0xf]
        %v2530 = vld [vmem:[%s2516 + $0x34] sm:$0xf]
        %v2531 = vld [vmem:[%s2516 + $0x38] sm:$0xf]
        %v2532 = vld [vmem:[%s2516 + $0x3c] sm:$0xf]
        %v2534 = vrot.slane %v2299, 1
        %v2552 = vunpack.c.l.b16 %v2517
        %v2553 = vunpack.c.l.b16 %v2518
        %v2554 = vunpack.c.l.b16 %v2519
        %v2555 = vunpack.c.l.b16 %v2520
        %v2556 = vunpack.c.l.b16 %v2521
        %v2557 = vunpack.c.l.b16 %v2522
        %v2558 = vunpack.c.l.b16 %v2523
        %v2559 = vunpack.c.l.b16 %v2524
        %v2560 = vunpack.c.l.b16 %v2525
        %v2561 = vunpack.c.l.b16 %v2526
        %v2562 = vunpack.c.l.b16 %v2527
        %v2563 = vunpack.c.l.b16 %v2528
        %v2564 = vunpack.c.l.b16 %v2529
        %v2565 = vunpack.c.l.b16 %v2530
        %v2566 = vunpack.c.l.b16 %v2531
        %v2567 = vunpack.c.l.b16 %v2532
        %v2568 = vpack.c.b16 %v2553, %v2552
        %v2569 = vpack.c.b16 %v2555, %v2554
        %v2570 = vpack.c.b16 %v2557, %v2556
        %v2571 = vpack.c.b16 %v2559, %v2558
        %v2572 = vpack.c.b16 %v2561, %v2560
        %v2573 = vpack.c.b16 %v2563, %v2562
        %v2574 = vpack.c.b16 %v2565, %v2564
        %v2575 = vpack.c.b16 %v2567, %v2566
        %2584 = vmatprep.subr.bf16.mxu0 0
        %2585 = vmatpush1.bf16.msra.mxu0 %v2575
        %2586 = vmatprep.subr.bf16.mxu0 0
        %2587 = vmatpush1.bf16.msra.mxu0 %v2574
        %2588 = vmatprep.subr.bf16.mxu0 0
        %2589 = vmatpush1.bf16.msra.mxu0 %v2573
        %2590 = vmatprep.subr.bf16.mxu0 0
        %2591 = vmatpush1.bf16.msra.mxu0 %v2572
        %2592 = vmatprep.subr.bf16.mxu0 0
        %2593 = vmatpush1.bf16.msra.mxu0 %v2571
        %2594 = vmatprep.subr.bf16.mxu0 0
        %2595 = vmatpush1.bf16.msra.mxu0 %v2570
        %2596 = vmatprep.subr.bf16.mxu0 0
        %2597 = vmatpush1.bf16.msra.mxu0 %v2569
        %2598 = vmatprep.subr.bf16.mxu0 0
        %2599 = vmatpush1.bf16.msra.mxu0 %v2568
        %2600 = vmatprep.subr.bf16.mxu0 0
        %2601 = vmatpush2.bf16.msra.mxu0 0
        %2602 = vmatprep.subr.bf16.mxu0 0
        %2603 = vmatpush2.bf16.msra.mxu0 0
        %2604 = vmatprep.subr.bf16.mxu0 0
        %2605 = vmatpush2.bf16.msra.mxu0 0
        %2606 = vmatprep.subr.bf16.mxu0 0
        %2607 = vmatpush2.bf16.msra.mxu0 0
        %2608 = vmatprep.subr.bf16.mxu0 0
        %2609 = vmatpush2.bf16.msra.mxu0 0
        %2610 = vmatprep.subr.bf16.mxu0 0
        %2611 = vmatpush2.bf16.msra.mxu0 0
        %2612 = vmatprep.subr.bf16.mxu0 0
        %2613 = vmatpush2.bf16.msra.mxu0 0
        %2614 = vmatprep.subr.bf16.mxu0 0
        %2615 = vmatpush2.bf16.msra.mxu0 0
        %2616 = vmatprep.mubr.bf16.mxu0 0
        %2617 = vmatmul.mubr.bf16.gmra.mxu0 %v2534
        %v2618 = vpop.f32.mrf.mxu0
        %v2619 = vadd.f32 0.0, %v2618
        %v2620 = vpop.f32.mrf.mxu0
        %v2621 = vpop.f32.mrf.mxu0
        %v2622 = vpop.f32.mrf.mxu0
        %2623 = vdwg.mxu0
        %v2624 = vadd.f32 %v2515, %v2619
        %s2625 = scalar_lea.vmem %s3, 1216
        %v2626 = vld [vmem:[%s2625] sm:$0xf]
        %v2627 = vld [vmem:[%s2625 + $0x4] sm:$0xf]
        %v2628 = vld [vmem:[%s2625 + $0x8] sm:$0xf]
        %v2629 = vld [vmem:[%s2625 + $0xc] sm:$0xf]
        %v2630 = vld [vmem:[%s2625 + $0x10] sm:$0xf]
        %v2631 = vld [vmem:[%s2625 + $0x14] sm:$0xf]
        %v2632 = vld [vmem:[%s2625 + $0x18] sm:$0xf]
        %v2633 = vld [vmem:[%s2625 + $0x1c] sm:$0xf]
        %v2634 = vld [vmem:[%s2625 + $0x20] sm:$0xf]
        %v2635 = vld [vmem:[%s2625 + $0x24] sm:$0xf]
        %v2636 = vld [vmem:[%s2625 + $0x28] sm:$0xf]
        %v2637 = vld [vmem:[%s2625 + $0x2c] sm:$0xf]
        %v2638 = vld [vmem:[%s2625 + $0x30] sm:$0xf]
        %v2639 = vld [vmem:[%s2625 + $0x34] sm:$0xf]
        %v2640 = vld [vmem:[%s2625 + $0x38] sm:$0xf]
        %v2641 = vld [vmem:[%s2625 + $0x3c] sm:$0xf]
        %v2642 = vrot.slane %v2424, 1
        %v2660 = vunpack.c.l.b16 %v2626
        %v2661 = vunpack.c.l.b16 %v2627
        %v2662 = vunpack.c.l.b16 %v2628
        %v2663 = vunpack.c.l.b16 %v2629
        %v2664 = vunpack.c.l.b16 %v2630
        %v2665 = vunpack.c.l.b16 %v2631
        %v2666 = vunpack.c.l.b16 %v2632
        %v2667 = vunpack.c.l.b16 %v2633
        %v2668 = vunpack.c.l.b16 %v2634
        %v2669 = vunpack.c.l.b16 %v2635
        %v2670 = vunpack.c.l.b16 %v2636
        %v2671 = vunpack.c.l.b16 %v2637
        %v2672 = vunpack.c.l.b16 %v2638
        %v2673 = vunpack.c.l.b16 %v2639
        %v2674 = vunpack.c.l.b16 %v2640
        %v2675 = vunpack.c.l.b16 %v2641
        %v2676 = vpack.c.b16 %v2661, %v2660
        %v2677 = vpack.c.b16 %v2663, %v2662
        %v2678 = vpack.c.b16 %v2665, %v2664
        %v2679 = vpack.c.b16 %v2667, %v2666
        %v2680 = vpack.c.b16 %v2669, %v2668
        %v2681 = vpack.c.b16 %v2671, %v2670
        %v2682 = vpack.c.b16 %v2673, %v2672
        %v2683 = vpack.c.b16 %v2675, %v2674
        %2692 = vmatprep.subr.bf16.mxu0 0
        %2693 = vmatpush1.bf16.msra.mxu0 %v2683
        %2694 = vmatprep.subr.bf16.mxu0 0
        %2695 = vmatpush1.bf16.msra.mxu0 %v2682
        %2696 = vmatprep.subr.bf16.mxu0 0
        %2697 = vmatpush1.bf16.msra.mxu0 %v2681
        %2698 = vmatprep.subr.bf16.mxu0 0
        %2699 = vmatpush1.bf16.msra.mxu0 %v2680
        %2700 = vmatprep.subr.bf16.mxu0 0
        %2701 = vmatpush1.bf16.msra.mxu0 %v2679
        %2702 = vmatprep.subr.bf16.mxu0 0
        %2703 = vmatpush1.bf16.msra.mxu0 %v2678
        %2704 = vmatprep.subr.bf16.mxu0 0
        %2705 = vmatpush1.bf16.msra.mxu0 %v2677
        %2706 = vmatprep.subr.bf16.mxu0 0
        %2707 = vmatpush1.bf16.msra.mxu0 %v2676
        %2708 = vmatprep.subr.bf16.mxu0 0
        %2709 = vmatpush2.bf16.msra.mxu0 0
        %2710 = vmatprep.subr.bf16.mxu0 0
        %2711 = vmatpush2.bf16.msra.mxu0 0
        %2712 = vmatprep.subr.bf16.mxu0 0
        %2713 = vmatpush2.bf16.msra.mxu0 0
        %2714 = vmatprep.subr.bf16.mxu0 0
        %2715 = vmatpush2.bf16.msra.mxu0 0
        %2716 = vmatprep.subr.bf16.mxu0 0
        %2717 = vmatpush2.bf16.msra.mxu0 0
        %2718 = vmatprep.subr.bf16.mxu0 0
        %2719 = vmatpush2.bf16.msra.mxu0 0
        %2720 = vmatprep.subr.bf16.mxu0 0
        %2721 = vmatpush2.bf16.msra.mxu0 0
        %2722 = vmatprep.subr.bf16.mxu0 0
        %2723 = vmatpush2.bf16.msra.mxu0 0
        %2724 = vmatprep.mubr.bf16.mxu0 0
        %2725 = vmatmul.mubr.bf16.gmra.mxu0 %v2642
        %v2726 = vpop.f32.mrf.mxu0
        %v2727 = vadd.f32 0.0, %v2726
        %v2728 = vpop.f32.mrf.mxu0
        %v2729 = vpop.f32.mrf.mxu0
        %v2730 = vpop.f32.mrf.mxu0
        %2731 = vdwg.mxu0
        %v2732 = vadd.f32 %v2624, %v2727
        %s2733 = scalar_lea.vmem %s3, 1280
        %v2734 = vld [vmem:[%s2733] sm:$0xf]
        %v2735 = vld [vmem:[%s2733 + $0x4] sm:$0xf]
        %v2736 = vld [vmem:[%s2733 + $0x8] sm:$0xf]
        %v2737 = vld [vmem:[%s2733 + $0xc] sm:$0xf]
        %v2738 = vld [vmem:[%s2733 + $0x10] sm:$0xf]
        %v2739 = vld [vmem:[%s2733 + $0x14] sm:$0xf]
        %v2740 = vld [vmem:[%s2733 + $0x18] sm:$0xf]
        %v2741 = vld [vmem:[%s2733 + $0x1c] sm:$0xf]
        %v2742 = vld [vmem:[%s2733 + $0x20] sm:$0xf]
        %v2743 = vld [vmem:[%s2733 + $0x24] sm:$0xf]
        %v2744 = vld [vmem:[%s2733 + $0x28] sm:$0xf]
        %v2745 = vld [vmem:[%s2733 + $0x2c] sm:$0xf]
        %v2746 = vld [vmem:[%s2733 + $0x30] sm:$0xf]
        %v2747 = vld [vmem:[%s2733 + $0x34] sm:$0xf]
        %v2748 = vld [vmem:[%s2733 + $0x38] sm:$0xf]
        %v2749 = vld [vmem:[%s2733 + $0x3c] sm:$0xf]
        %v2750 = vrot.slane %v2299, 2
        %v2768 = vunpack.c.l.b16 %v2734
        %v2769 = vunpack.c.l.b16 %v2735
        %v2770 = vunpack.c.l.b16 %v2736
        %v2771 = vunpack.c.l.b16 %v2737
        %v2772 = vunpack.c.l.b16 %v2738
        %v2773 = vunpack.c.l.b16 %v2739
        %v2774 = vunpack.c.l.b16 %v2740
        %v2775 = vunpack.c.l.b16 %v2741
        %v2776 = vunpack.c.l.b16 %v2742
        %v2777 = vunpack.c.l.b16 %v2743
        %v2778 = vunpack.c.l.b16 %v2744
        %v2779 = vunpack.c.l.b16 %v2745
        %v2780 = vunpack.c.l.b16 %v2746
        %v2781 = vunpack.c.l.b16 %v2747
        %v2782 = vunpack.c.l.b16 %v2748
        %v2783 = vunpack.c.l.b16 %v2749
        %v2784 = vpack.c.b16 %v2769, %v2768
        %v2785 = vpack.c.b16 %v2771, %v2770
        %v2786 = vpack.c.b16 %v2773, %v2772
        %v2787 = vpack.c.b16 %v2775, %v2774
        %v2788 = vpack.c.b16 %v2777, %v2776
        %v2789 = vpack.c.b16 %v2779, %v2778
        %v2790 = vpack.c.b16 %v2781, %v2780
        %v2791 = vpack.c.b16 %v2783, %v2782
        %2800 = vmatprep.subr.bf16.mxu0 0
        %2801 = vmatpush1.bf16.msra.mxu0 %v2791
        %2802 = vmatprep.subr.bf16.mxu0 0
        %2803 = vmatpush1.bf16.msra.mxu0 %v2790
        %2804 = vmatprep.subr.bf16.mxu0 0
        %2805 = vmatpush1.bf16.msra.mxu0 %v2789
        %2806 = vmatprep.subr.bf16.mxu0 0
        %2807 = vmatpush1.bf16.msra.mxu0 %v2788
        %2808 = vmatprep.subr.bf16.mxu0 0
        %2809 = vmatpush1.bf16.msra.mxu0 %v2787
        %2810 = vmatprep.subr.bf16.mxu0 0
        %2811 = vmatpush1.bf16.msra.mxu0 %v2786
        %2812 = vmatprep.subr.bf16.mxu0 0
        %2813 = vmatpush1.bf16.msra.mxu0 %v2785
        %2814 = vmatprep.subr.bf16.mxu0 0
        %2815 = vmatpush1.bf16.msra.mxu0 %v2784
        %2816 = vmatprep.subr.bf16.mxu0 0
        %2817 = vmatpush2.bf16.msra.mxu0 0
        %2818 = vmatprep.subr.bf16.mxu0 0
        %2819 = vmatpush2.bf16.msra.mxu0 0
        %2820 = vmatprep.subr.bf16.mxu0 0
        %2821 = vmatpush2.bf16.msra.mxu0 0
        %2822 = vmatprep.subr.bf16.mxu0 0
        %2823 = vmatpush2.bf16.msra.mxu0 0
        %2824 = vmatprep.subr.bf16.mxu0 0
        %2825 = vmatpush2.bf16.msra.mxu0 0
        %2826 = vmatprep.subr.bf16.mxu0 0
        %2827 = vmatpush2.bf16.msra.mxu0 0
        %2828 = vmatprep.subr.bf16.mxu0 0
        %2829 = vmatpush2.bf16.msra.mxu0 0
        %2830 = vmatprep.subr.bf16.mxu0 0
        %2831 = vmatpush2.bf16.msra.mxu0 0
        %2832 = vmatprep.mubr.bf16.mxu0 0
        %2833 = vmatmul.mubr.bf16.gmra.mxu0 %v2750
        %v2834 = vpop.f32.mrf.mxu0
        %v2835 = vadd.f32 0.0, %v2834
        %v2836 = vpop.f32.mrf.mxu0
        %v2837 = vpop.f32.mrf.mxu0
        %v2838 = vpop.f32.mrf.mxu0
        %2839 = vdwg.mxu0
        %v2840 = vadd.f32 %v2732, %v2835
        %s2841 = scalar_lea.vmem %s3, 1344
        %v2842 = vld [vmem:[%s2841] sm:$0xf]
        %v2843 = vld [vmem:[%s2841 + $0x4] sm:$0xf]
        %v2844 = vld [vmem:[%s2841 + $0x8] sm:$0xf]
        %v2845 = vld [vmem:[%s2841 + $0xc] sm:$0xf]
        %v2846 = vld [vmem:[%s2841 + $0x10] sm:$0xf]
        %v2847 = vld [vmem:[%s2841 + $0x14] sm:$0xf]
        %v2848 = vld [vmem:[%s2841 + $0x18] sm:$0xf]
        %v2849 = vld [vmem:[%s2841 + $0x1c] sm:$0xf]
        %v2850 = vld [vmem:[%s2841 + $0x20] sm:$0xf]
        %v2851 = vld [vmem:[%s2841 + $0x24] sm:$0xf]
        %v2852 = vld [vmem:[%s2841 + $0x28] sm:$0xf]
        %v2853 = vld [vmem:[%s2841 + $0x2c] sm:$0xf]
        %v2854 = vld [vmem:[%s2841 + $0x30] sm:$0xf]
        %v2855 = vld [vmem:[%s2841 + $0x34] sm:$0xf]
        %v2856 = vld [vmem:[%s2841 + $0x38] sm:$0xf]
        %v2857 = vld [vmem:[%s2841 + $0x3c] sm:$0xf]
        %v2858 = vrot.slane %v2424, 2
        %v2876 = vunpack.c.l.b16 %v2842
        %v2877 = vunpack.c.l.b16 %v2843
        %v2878 = vunpack.c.l.b16 %v2844
        %v2879 = vunpack.c.l.b16 %v2845
        %v2880 = vunpack.c.l.b16 %v2846
        %v2881 = vunpack.c.l.b16 %v2847
        %v2882 = vunpack.c.l.b16 %v2848
        %v2883 = vunpack.c.l.b16 %v2849
        %v2884 = vunpack.c.l.b16 %v2850
        %v2885 = vunpack.c.l.b16 %v2851
        %v2886 = vunpack.c.l.b16 %v2852
        %v2887 = vunpack.c.l.b16 %v2853
        %v2888 = vunpack.c.l.b16 %v2854
        %v2889 = vunpack.c.l.b16 %v2855
        %v2890 = vunpack.c.l.b16 %v2856
        %v2891 = vunpack.c.l.b16 %v2857
        %v2892 = vpack.c.b16 %v2877, %v2876
        %v2893 = vpack.c.b16 %v2879, %v2878
        %v2894 = vpack.c.b16 %v2881, %v2880
        %v2895 = vpack.c.b16 %v2883, %v2882
        %v2896 = vpack.c.b16 %v2885, %v2884
        %v2897 = vpack.c.b16 %v2887, %v2886
        %v2898 = vpack.c.b16 %v2889, %v2888
        %v2899 = vpack.c.b16 %v2891, %v2890
        %2908 = vmatprep.subr.bf16.mxu0 0
        %2909 = vmatpush1.bf16.msra.mxu0 %v2899
        %2910 = vmatprep.subr.bf16.mxu0 0
        %2911 = vmatpush1.bf16.msra.mxu0 %v2898
        %2912 = vmatprep.subr.bf16.mxu0 0
        %2913 = vmatpush1.bf16.msra.mxu0 %v2897
        %2914 = vmatprep.subr.bf16.mxu0 0
        %2915 = vmatpush1.bf16.msra.mxu0 %v2896
        %2916 = vmatprep.subr.bf16.mxu0 0
        %2917 = vmatpush1.bf16.msra.mxu0 %v2895
        %2918 = vmatprep.subr.bf16.mxu0 0
        %2919 = vmatpush1.bf16.msra.mxu0 %v2894
        %2920 = vmatprep.subr.bf16.mxu0 0
        %2921 = vmatpush1.bf16.msra.mxu0 %v2893
        %2922 = vmatprep.subr.bf16.mxu0 0
        %2923 = vmatpush1.bf16.msra.mxu0 %v2892
        %2924 = vmatprep.subr.bf16.mxu0 0
        %2925 = vmatpush2.bf16.msra.mxu0 0
        %2926 = vmatprep.subr.bf16.mxu0 0
        %2927 = vmatpush2.bf16.msra.mxu0 0
        %2928 = vmatprep.subr.bf16.mxu0 0
        %2929 = vmatpush2.bf16.msra.mxu0 0
        %2930 = vmatprep.subr.bf16.mxu0 0
        %2931 = vmatpush2.bf16.msra.mxu0 0
        %2932 = vmatprep.subr.bf16.mxu0 0
        %2933 = vmatpush2.bf16.msra.mxu0 0
        %2934 = vmatprep.subr.bf16.mxu0 0
        %2935 = vmatpush2.bf16.msra.mxu0 0
        %2936 = vmatprep.subr.bf16.mxu0 0
        %2937 = vmatpush2.bf16.msra.mxu0 0
        %2938 = vmatprep.subr.bf16.mxu0 0
        %2939 = vmatpush2.bf16.msra.mxu0 0
        %2940 = vmatprep.mubr.bf16.mxu0 0
        %2941 = vmatmul.mubr.bf16.gmra.mxu0 %v2858
        %v2942 = vpop.f32.mrf.mxu0
        %v2943 = vadd.f32 0.0, %v2942
        %v2944 = vpop.f32.mrf.mxu0
        %v2945 = vpop.f32.mrf.mxu0
        %v2946 = vpop.f32.mrf.mxu0
        %2947 = vdwg.mxu0
        %v2948 = vadd.f32 %v2840, %v2943
        %s2949 = scalar_lea.vmem %s3, 1408
        %v2950 = vld [vmem:[%s2949] sm:$0xf]
        %v2951 = vld [vmem:[%s2949 + $0x4] sm:$0xf]
        %v2952 = vld [vmem:[%s2949 + $0x8] sm:$0xf]
        %v2953 = vld [vmem:[%s2949 + $0xc] sm:$0xf]
        %v2954 = vld [vmem:[%s2949 + $0x10] sm:$0xf]
        %v2955 = vld [vmem:[%s2949 + $0x14] sm:$0xf]
        %v2956 = vld [vmem:[%s2949 + $0x18] sm:$0xf]
        %v2957 = vld [vmem:[%s2949 + $0x1c] sm:$0xf]
        %v2958 = vld [vmem:[%s2949 + $0x20] sm:$0xf]
        %v2959 = vld [vmem:[%s2949 + $0x24] sm:$0xf]
        %v2960 = vld [vmem:[%s2949 + $0x28] sm:$0xf]
        %v2961 = vld [vmem:[%s2949 + $0x2c] sm:$0xf]
        %v2962 = vld [vmem:[%s2949 + $0x30] sm:$0xf]
        %v2963 = vld [vmem:[%s2949 + $0x34] sm:$0xf]
        %v2964 = vld [vmem:[%s2949 + $0x38] sm:$0xf]
        %v2965 = vld [vmem:[%s2949 + $0x3c] sm:$0xf]
        %v2966 = vrot.slane %v2299, 3
        %v2984 = vunpack.c.l.b16 %v2950
        %v2985 = vunpack.c.l.b16 %v2951
        %v2986 = vunpack.c.l.b16 %v2952
        %v2987 = vunpack.c.l.b16 %v2953
        %v2988 = vunpack.c.l.b16 %v2954
        %v2989 = vunpack.c.l.b16 %v2955
        %v2990 = vunpack.c.l.b16 %v2956
        %v2991 = vunpack.c.l.b16 %v2957
        %v2992 = vunpack.c.l.b16 %v2958
        %v2993 = vunpack.c.l.b16 %v2959
        %v2994 = vunpack.c.l.b16 %v2960
        %v2995 = vunpack.c.l.b16 %v2961
        %v2996 = vunpack.c.l.b16 %v2962
        %v2997 = vunpack.c.l.b16 %v2963
        %v2998 = vunpack.c.l.b16 %v2964
        %v2999 = vunpack.c.l.b16 %v2965
        %v3000 = vpack.c.b16 %v2985, %v2984
        %v3001 = vpack.c.b16 %v2987, %v2986
        %v3002 = vpack.c.b16 %v2989, %v2988
        %v3003 = vpack.c.b16 %v2991, %v2990
        %v3004 = vpack.c.b16 %v2993, %v2992
        %v3005 = vpack.c.b16 %v2995, %v2994
        %v3006 = vpack.c.b16 %v2997, %v2996
        %v3007 = vpack.c.b16 %v2999, %v2998
        %3016 = vmatprep.subr.bf16.mxu0 0
        %3017 = vmatpush1.bf16.msra.mxu0 %v3007
        %3018 = vmatprep.subr.bf16.mxu0 0
        %3019 = vmatpush1.bf16.msra.mxu0 %v3006
        %3020 = vmatprep.subr.bf16.mxu0 0
        %3021 = vmatpush1.bf16.msra.mxu0 %v3005
        %3022 = vmatprep.subr.bf16.mxu0 0
        %3023 = vmatpush1.bf16.msra.mxu0 %v3004
        %3024 = vmatprep.subr.bf16.mxu0 0
        %3025 = vmatpush1.bf16.msra.mxu0 %v3003
        %3026 = vmatprep.subr.bf16.mxu0 0
        %3027 = vmatpush1.bf16.msra.mxu0 %v3002
        %3028 = vmatprep.subr.bf16.mxu0 0
        %3029 = vmatpush1.bf16.msra.mxu0 %v3001
        %3030 = vmatprep.subr.bf16.mxu0 0
        %3031 = vmatpush1.bf16.msra.mxu0 %v3000
        %3032 = vmatprep.subr.bf16.mxu0 0
        %3033 = vmatpush2.bf16.msra.mxu0 0
        %3034 = vmatprep.subr.bf16.mxu0 0
        %3035 = vmatpush2.bf16.msra.mxu0 0
        %3036 = vmatprep.subr.bf16.mxu0 0
        %3037 = vmatpush2.bf16.msra.mxu0 0
        %3038 = vmatprep.subr.bf16.mxu0 0
        %3039 = vmatpush2.bf16.msra.mxu0 0
        %3040 = vmatprep.subr.bf16.mxu0 0
        %3041 = vmatpush2.bf16.msra.mxu0 0
        %3042 = vmatprep.subr.bf16.mxu0 0
        %3043 = vmatpush2.bf16.msra.mxu0 0
        %3044 = vmatprep.subr.bf16.mxu0 0
        %3045 = vmatpush2.bf16.msra.mxu0 0
        %3046 = vmatprep.subr.bf16.mxu0 0
        %3047 = vmatpush2.bf16.msra.mxu0 0
        %3048 = vmatprep.mubr.bf16.mxu0 0
        %3049 = vmatmul.mubr.bf16.gmra.mxu0 %v2966
        %v3050 = vpop.f32.mrf.mxu0
        %v3051 = vadd.f32 0.0, %v3050
        %v3052 = vpop.f32.mrf.mxu0
        %v3053 = vpop.f32.mrf.mxu0
        %v3054 = vpop.f32.mrf.mxu0
        %3055 = vdwg.mxu0
        %v3056 = vadd.f32 %v2948, %v3051
        %s3057 = scalar_lea.vmem %s3, 1472
        %v3058 = vld [vmem:[%s3057] sm:$0xf]
        %v3059 = vld [vmem:[%s3057 + $0x4] sm:$0xf]
        %v3060 = vld [vmem:[%s3057 + $0x8] sm:$0xf]
        %v3061 = vld [vmem:[%s3057 + $0xc] sm:$0xf]
        %v3062 = vld [vmem:[%s3057 + $0x10] sm:$0xf]
        %v3063 = vld [vmem:[%s3057 + $0x14] sm:$0xf]
        %v3064 = vld [vmem:[%s3057 + $0x18] sm:$0xf]
        %v3065 = vld [vmem:[%s3057 + $0x1c] sm:$0xf]
        %v3066 = vld [vmem:[%s3057 + $0x20] sm:$0xf]
        %v3067 = vld [vmem:[%s3057 + $0x24] sm:$0xf]
        %v3068 = vld [vmem:[%s3057 + $0x28] sm:$0xf]
        %v3069 = vld [vmem:[%s3057 + $0x2c] sm:$0xf]
        %v3070 = vld [vmem:[%s3057 + $0x30] sm:$0xf]
        %v3071 = vld [vmem:[%s3057 + $0x34] sm:$0xf]
        %v3072 = vld [vmem:[%s3057 + $0x38] sm:$0xf]
        %v3073 = vld [vmem:[%s3057 + $0x3c] sm:$0xf]
        %v3074 = vrot.slane %v2424, 3
        %v3092 = vunpack.c.l.b16 %v3058
        %v3093 = vunpack.c.l.b16 %v3059
        %v3094 = vunpack.c.l.b16 %v3060
        %v3095 = vunpack.c.l.b16 %v3061
        %v3096 = vunpack.c.l.b16 %v3062
        %v3097 = vunpack.c.l.b16 %v3063
        %v3098 = vunpack.c.l.b16 %v3064
        %v3099 = vunpack.c.l.b16 %v3065
        %v3100 = vunpack.c.l.b16 %v3066
        %v3101 = vunpack.c.l.b16 %v3067
        %v3102 = vunpack.c.l.b16 %v3068
        %v3103 = vunpack.c.l.b16 %v3069
        %v3104 = vunpack.c.l.b16 %v3070
        %v3105 = vunpack.c.l.b16 %v3071
        %v3106 = vunpack.c.l.b16 %v3072
        %v3107 = vunpack.c.l.b16 %v3073
        %v3108 = vpack.c.b16 %v3093, %v3092
        %v3109 = vpack.c.b16 %v3095, %v3094
        %v3110 = vpack.c.b16 %v3097, %v3096
        %v3111 = vpack.c.b16 %v3099, %v3098
        %v3112 = vpack.c.b16 %v3101, %v3100
        %v3113 = vpack.c.b16 %v3103, %v3102
        %v3114 = vpack.c.b16 %v3105, %v3104
        %v3115 = vpack.c.b16 %v3107, %v3106
        %3124 = vmatprep.subr.bf16.mxu0 0
        %3125 = vmatpush1.bf16.msra.mxu0 %v3115
        %3126 = vmatprep.subr.bf16.mxu0 0
        %3127 = vmatpush1.bf16.msra.mxu0 %v3114
        %3128 = vmatprep.subr.bf16.mxu0 0
        %3129 = vmatpush1.bf16.msra.mxu0 %v3113
        %3130 = vmatprep.subr.bf16.mxu0 0
        %3131 = vmatpush1.bf16.msra.mxu0 %v3112
        %3132 = vmatprep.subr.bf16.mxu0 0
        %3133 = vmatpush1.bf16.msra.mxu0 %v3111
        %3134 = vmatprep.subr.bf16.mxu0 0
        %3135 = vmatpush1.bf16.msra.mxu0 %v3110
        %3136 = vmatprep.subr.bf16.mxu0 0
        %3137 = vmatpush1.bf16.msra.mxu0 %v3109
        %3138 = vmatprep.subr.bf16.mxu0 0
        %3139 = vmatpush1.bf16.msra.mxu0 %v3108
        %3140 = vmatprep.subr.bf16.mxu0 0
        %3141 = vmatpush2.bf16.msra.mxu0 0
        %3142 = vmatprep.subr.bf16.mxu0 0
        %3143 = vmatpush2.bf16.msra.mxu0 0
        %3144 = vmatprep.subr.bf16.mxu0 0
        %3145 = vmatpush2.bf16.msra.mxu0 0
        %3146 = vmatprep.subr.bf16.mxu0 0
        %3147 = vmatpush2.bf16.msra.mxu0 0
        %3148 = vmatprep.subr.bf16.mxu0 0
        %3149 = vmatpush2.bf16.msra.mxu0 0
        %3150 = vmatprep.subr.bf16.mxu0 0
        %3151 = vmatpush2.bf16.msra.mxu0 0
        %3152 = vmatprep.subr.bf16.mxu0 0
        %3153 = vmatpush2.bf16.msra.mxu0 0
        %3154 = vmatprep.subr.bf16.mxu0 0
        %3155 = vmatpush2.bf16.msra.mxu0 0
        %3156 = vmatprep.mubr.bf16.mxu0 0
        %3157 = vmatmul.mubr.bf16.gmra.mxu0 %v3074
        %v3158 = vpop.f32.mrf.mxu0
        %v3159 = vadd.f32 0.0, %v3158
        %v3160 = vpop.f32.mrf.mxu0
        %v3161 = vpop.f32.mrf.mxu0
        %v3162 = vpop.f32.mrf.mxu0
        %3163 = vdwg.mxu0
        %v3164 = vadd.f32 %v3056, %v3159
        %v3165 = vpack.c.bf16 %v566, %v566
        %s3166 = scalar_lea.vmem %s3, 1536
        %v3167 = vld [vmem:[%s3166] sm:$0xf]
        %v3168 = vld [vmem:[%s3166 + $0x4] sm:$0xf]
        %v3169 = vld [vmem:[%s3166 + $0x8] sm:$0xf]
        %v3170 = vld [vmem:[%s3166 + $0xc] sm:$0xf]
        %v3171 = vld [vmem:[%s3166 + $0x10] sm:$0xf]
        %v3172 = vld [vmem:[%s3166 + $0x14] sm:$0xf]
        %v3173 = vld [vmem:[%s3166 + $0x18] sm:$0xf]
        %v3174 = vld [vmem:[%s3166 + $0x1c] sm:$0xf]
        %v3175 = vld [vmem:[%s3166 + $0x20] sm:$0xf]
        %v3176 = vld [vmem:[%s3166 + $0x24] sm:$0xf]
        %v3177 = vld [vmem:[%s3166 + $0x28] sm:$0xf]
        %v3178 = vld [vmem:[%s3166 + $0x2c] sm:$0xf]
        %v3179 = vld [vmem:[%s3166 + $0x30] sm:$0xf]
        %v3180 = vld [vmem:[%s3166 + $0x34] sm:$0xf]
        %v3181 = vld [vmem:[%s3166 + $0x38] sm:$0xf]
        %v3182 = vld [vmem:[%s3166 + $0x3c] sm:$0xf]
        %v3199 = vunpack.c.l.b16 %v3167
        %v3200 = vunpack.c.l.b16 %v3168
        %v3201 = vunpack.c.l.b16 %v3169
        %v3202 = vunpack.c.l.b16 %v3170
        %v3203 = vunpack.c.l.b16 %v3171
        %v3204 = vunpack.c.l.b16 %v3172
        %v3205 = vunpack.c.l.b16 %v3173
        %v3206 = vunpack.c.l.b16 %v3174
        %v3207 = vunpack.c.l.b16 %v3175
        %v3208 = vunpack.c.l.b16 %v3176
        %v3209 = vunpack.c.l.b16 %v3177
        %v3210 = vunpack.c.l.b16 %v3178
        %v3211 = vunpack.c.l.b16 %v3179
        %v3212 = vunpack.c.l.b16 %v3180
        %v3213 = vunpack.c.l.b16 %v3181
        %v3214 = vunpack.c.l.b16 %v3182
        %v3215 = vpack.c.b16 %v3200, %v3199
        %v3216 = vpack.c.b16 %v3202, %v3201
        %v3217 = vpack.c.b16 %v3204, %v3203
        %v3218 = vpack.c.b16 %v3206, %v3205
        %v3219 = vpack.c.b16 %v3208, %v3207
        %v3220 = vpack.c.b16 %v3210, %v3209
        %v3221 = vpack.c.b16 %v3212, %v3211
        %v3222 = vpack.c.b16 %v3214, %v3213
        %3231 = vmatprep.subr.bf16.mxu0 0
        %3232 = vmatpush1.bf16.msra.mxu0 %v3222
        %3233 = vmatprep.subr.bf16.mxu0 0
        %3234 = vmatpush1.bf16.msra.mxu0 %v3221
        %3235 = vmatprep.subr.bf16.mxu0 0
        %3236 = vmatpush1.bf16.msra.mxu0 %v3220
        %3237 = vmatprep.subr.bf16.mxu0 0
        %3238 = vmatpush1.bf16.msra.mxu0 %v3219
        %3239 = vmatprep.subr.bf16.mxu0 0
        %3240 = vmatpush1.bf16.msra.mxu0 %v3218
        %3241 = vmatprep.subr.bf16.mxu0 0
        %3242 = vmatpush1.bf16.msra.mxu0 %v3217
        %3243 = vmatprep.subr.bf16.mxu0 0
        %3244 = vmatpush1.bf16.msra.mxu0 %v3216
        %3245 = vmatprep.subr.bf16.mxu0 0
        %3246 = vmatpush1.bf16.msra.mxu0 %v3215
        %3247 = vmatprep.subr.bf16.mxu0 0
        %3248 = vmatpush2.bf16.msra.mxu0 0
        %3249 = vmatprep.subr.bf16.mxu0 0
        %3250 = vmatpush2.bf16.msra.mxu0 0
        %3251 = vmatprep.subr.bf16.mxu0 0
        %3252 = vmatpush2.bf16.msra.mxu0 0
        %3253 = vmatprep.subr.bf16.mxu0 0
        %3254 = vmatpush2.bf16.msra.mxu0 0
        %3255 = vmatprep.subr.bf16.mxu0 0
        %3256 = vmatpush2.bf16.msra.mxu0 0
        %3257 = vmatprep.subr.bf16.mxu0 0
        %3258 = vmatpush2.bf16.msra.mxu0 0
        %3259 = vmatprep.subr.bf16.mxu0 0
        %3260 = vmatpush2.bf16.msra.mxu0 0
        %3261 = vmatprep.subr.bf16.mxu0 0
        %3262 = vmatpush2.bf16.msra.mxu0 0
        %3263 = vmatprep.mubr.bf16.mxu0 0
        %3264 = vmatmul.mubr.bf16.gmra.mxu0 %v3165
        %v3265 = vpop.f32.mrf.mxu0
        %v3266 = vadd.f32 0.0, %v3265
        %v3267 = vpop.f32.mrf.mxu0
        %v3268 = vpop.f32.mrf.mxu0
        %v3269 = vpop.f32.mrf.mxu0
        %3270 = vdwg.mxu0
        %v3271 = vadd.f32 %v3164, %v3266
        %v3272 = vmax.f32 %v3271, 0.0
        %v3273 = vpack.c.bf16 %v3272, %v3272
        %v3274 = vld [vmem:[%s5] sm:$0xf]
        %v3275 = vld [vmem:[%s5 + $0x4] sm:$0xf]
        %v3276 = vld [vmem:[%s5 + $0x8] sm:$0xf]
        %v3277 = vld [vmem:[%s5 + $0xc] sm:$0xf]
        %v3278 = vld [vmem:[%s5 + $0x10] sm:$0xf]
        %v3279 = vld [vmem:[%s5 + $0x14] sm:$0xf]
        %v3280 = vld [vmem:[%s5 + $0x18] sm:$0xf]
        %v3281 = vld [vmem:[%s5 + $0x1c] sm:$0xf]
        %v3282 = vld [vmem:[%s5 + $0x20] sm:$0xf]
        %v3283 = vld [vmem:[%s5 + $0x24] sm:$0xf]
        %v3284 = vld [vmem:[%s5 + $0x28] sm:$0xf]
        %v3285 = vld [vmem:[%s5 + $0x2c] sm:$0xf]
        %v3286 = vld [vmem:[%s5 + $0x30] sm:$0xf]
        %v3287 = vld [vmem:[%s5 + $0x34] sm:$0xf]
        %v3288 = vld [vmem:[%s5 + $0x38] sm:$0xf]
        %v3289 = vld [vmem:[%s5 + $0x3c] sm:$0xf]
        %v3290 = vld [vmem:[%s6] sm:$0x1]
        %v3307 = vunpack.c.l.b16 %v3274
        %v3308 = vunpack.c.l.b16 %v3275
        %v3309 = vunpack.c.l.b16 %v3276
        %v3310 = vunpack.c.l.b16 %v3277
        %v3311 = vunpack.c.l.b16 %v3278
        %v3312 = vunpack.c.l.b16 %v3279
        %v3313 = vunpack.c.l.b16 %v3280
        %v3314 = vunpack.c.l.b16 %v3281
        %v3315 = vunpack.c.l.b16 %v3282
        %v3316 = vunpack.c.l.b16 %v3283
        %v3317 = vunpack.c.l.b16 %v3284
        %v3318 = vunpack.c.l.b16 %v3285
        %v3319 = vunpack.c.l.b16 %v3286
        %v3320 = vunpack.c.l.b16 %v3287
        %v3321 = vunpack.c.l.b16 %v3288
        %v3322 = vunpack.c.l.b16 %v3289
        %v3323 = vpack.c.b16 %v3308, %v3307
        %v3324 = vpack.c.b16 %v3310, %v3309
        %v3325 = vpack.c.b16 %v3312, %v3311
        %v3326 = vpack.c.b16 %v3314, %v3313
        %v3327 = vpack.c.b16 %v3316, %v3315
        %v3328 = vpack.c.b16 %v3318, %v3317
        %v3329 = vpack.c.b16 %v3320, %v3319
        %v3330 = vpack.c.b16 %v3322, %v3321
        %3339 = vmatprep.subr.bf16.mxu0 0
        %3340 = vmatpush1.bf16.msra.mxu0 %v3330
        %3341 = vmatprep.subr.bf16.mxu0 0
        %3342 = vmatpush1.bf16.msra.mxu0 %v3329
        %3343 = vmatprep.subr.bf16.mxu0 0
        %3344 = vmatpush1.bf16.msra.mxu0 %v3328
        %3345 = vmatprep.subr.bf16.mxu0 0
        %3346 = vmatpush1.bf16.msra.mxu0 %v3327
        %3347 = vmatprep.subr.bf16.mxu0 0
        %3348 = vmatpush1.bf16.msra.mxu0 %v3326
        %3349 = vmatprep.subr.bf16.mxu0 0
        %3350 = vmatpush1.bf16.msra.mxu0 %v3325
        %3351 = vmatprep.subr.bf16.mxu0 0
        %3352 = vmatpush1.bf16.msra.mxu0 %v3324
        %3353 = vmatprep.subr.bf16.mxu0 0
        %3354 = vmatpush1.bf16.msra.mxu0 %v3323
        %3355 = vmatprep.subr.bf16.mxu0 0
        %3356 = vmatpush2.bf16.msra.mxu0 0
        %3357 = vmatprep.subr.bf16.mxu0 0
        %3358 = vmatpush2.bf16.msra.mxu0 0
        %3359 = vmatprep.subr.bf16.mxu0 0
        %3360 = vmatpush2.bf16.msra.mxu0 0
        %3361 = vmatprep.subr.bf16.mxu0 0
        %3362 = vmatpush2.bf16.msra.mxu0 0
        %3363 = vmatprep.subr.bf16.mxu0 0
        %3364 = vmatpush2.bf16.msra.mxu0 0
        %3365 = vmatprep.subr.bf16.mxu0 0
        %3366 = vmatpush2.bf16.msra.mxu0 0
        %3367 = vmatprep.subr.bf16.mxu0 0
        %3368 = vmatpush2.bf16.msra.mxu0 0
        %3369 = vmatprep.subr.bf16.mxu0 0
        %3370 = vmatpush2.bf16.msra.mxu0 0
        %3371 = vmatprep.mubr.bf16.mxu0 0
        %3372 = vmatmul.mubr.bf16.gmra.mxu0 %v3273
        %v3373 = vpop.f32.mrf.mxu0
        %v3374 = vadd.f32 %v3290, %v3373
        %v3375 = vpop.f32.mrf.mxu0
        %v3376 = vpop.f32.mrf.mxu0
        %v3377 = vpop.f32.mrf.mxu0
        %3378 = vdwg.mxu0
        %v3379 = vmax.f32 %v3374, 0.0
        %v3380 = vpack.c.bf16 %v3379, %v3379
        %v3381 = vld [vmem:[%s7] sm:$0xf]
        %v3382 = vld [vmem:[%s7 + $0x4] sm:$0xf]
        %v3383 = vld [vmem:[%s7 + $0x8] sm:$0xf]
        %v3384 = vld [vmem:[%s7 + $0xc] sm:$0xf]
        %v3385 = vld [vmem:[%s7 + $0x10] sm:$0xf]
        %v3386 = vld [vmem:[%s7 + $0x14] sm:$0xf]
        %v3387 = vld [vmem:[%s7 + $0x18] sm:$0xf]
        %v3388 = vld [vmem:[%s7 + $0x1c] sm:$0xf]
        %v3389 = vld [vmem:[%s7 + $0x20] sm:$0xf]
        %v3390 = vld [vmem:[%s7 + $0x24] sm:$0xf]
        %v3391 = vld [vmem:[%s7 + $0x28] sm:$0xf]
        %v3392 = vld [vmem:[%s7 + $0x2c] sm:$0xf]
        %v3393 = vld [vmem:[%s7 + $0x30] sm:$0xf]
        %v3394 = vld [vmem:[%s7 + $0x34] sm:$0xf]
        %v3395 = vld [vmem:[%s7 + $0x38] sm:$0xf]
        %v3396 = vld [vmem:[%s7 + $0x3c] sm:$0xf]
        %v3397 = vld [vmem:[%s8] sm:$0x1]
        %v3414 = vunpack.c.l.b16 %v3381
        %v3415 = vunpack.c.l.b16 %v3382
        %v3416 = vunpack.c.l.b16 %v3383
        %v3417 = vunpack.c.l.b16 %v3384
        %v3418 = vunpack.c.l.b16 %v3385
        %v3419 = vunpack.c.l.b16 %v3386
        %v3420 = vunpack.c.l.b16 %v3387
        %v3421 = vunpack.c.l.b16 %v3388
        %v3422 = vunpack.c.l.b16 %v3389
        %v3423 = vunpack.c.l.b16 %v3390
        %v3424 = vunpack.c.l.b16 %v3391
        %v3425 = vunpack.c.l.b16 %v3392
        %v3426 = vunpack.c.l.b16 %v3393
        %v3427 = vunpack.c.l.b16 %v3394
        %v3428 = vunpack.c.l.b16 %v3395
        %v3429 = vunpack.c.l.b16 %v3396
        %v3430 = vpack.c.b16 %v3415, %v3414
        %v3431 = vpack.c.b16 %v3417, %v3416
        %v3432 = vpack.c.b16 %v3419, %v3418
        %v3433 = vpack.c.b16 %v3421, %v3420
        %v3434 = vpack.c.b16 %v3423, %v3422
        %v3435 = vpack.c.b16 %v3425, %v3424
        %v3436 = vpack.c.b16 %v3427, %v3426
        %v3437 = vpack.c.b16 %v3429, %v3428
        %3446 = vmatprep.subr.bf16.mxu0 0
        %3447 = vmatpush1.bf16.msra.mxu0 %v3437
        %3448 = vmatprep.subr.bf16.mxu0 0
        %3449 = vmatpush1.bf16.msra.mxu0 %v3436
        %3450 = vmatprep.subr.bf16.mxu0 0
        %3451 = vmatpush1.bf16.msra.mxu0 %v3435
        %3452 = vmatprep.subr.bf16.mxu0 0
        %3453 = vmatpush1.bf16.msra.mxu0 %v3434
        %3454 = vmatprep.subr.bf16.mxu0 0
        %3455 = vmatpush1.bf16.msra.mxu0 %v3433
        %3456 = vmatprep.subr.bf16.mxu0 0
        %3457 = vmatpush1.bf16.msra.mxu0 %v3432
        %3458 = vmatprep.subr.bf16.mxu0 0
        %3459 = vmatpush1.bf16.msra.mxu0 %v3431
        %3460 = vmatprep.subr.bf16.mxu0 0
        %3461 = vmatpush1.bf16.msra.mxu0 %v3430
        %3462 = vmatprep.subr.bf16.mxu0 0
        %3463 = vmatpush2.bf16.msra.mxu0 0
        %3464 = vmatprep.subr.bf16.mxu0 0
        %3465 = vmatpush2.bf16.msra.mxu0 0
        %3466 = vmatprep.subr.bf16.mxu0 0
        %3467 = vmatpush2.bf16.msra.mxu0 0
        %3468 = vmatprep.subr.bf16.mxu0 0
        %3469 = vmatpush2.bf16.msra.mxu0 0
        %3470 = vmatprep.subr.bf16.mxu0 0
        %3471 = vmatpush2.bf16.msra.mxu0 0
        %3472 = vmatprep.subr.bf16.mxu0 0
        %3473 = vmatpush2.bf16.msra.mxu0 0
        %3474 = vmatprep.subr.bf16.mxu0 0
        %3475 = vmatpush2.bf16.msra.mxu0 0
        %3476 = vmatprep.subr.bf16.mxu0 0
        %3477 = vmatpush2.bf16.msra.mxu0 0
        %3478 = vmatprep.mubr.bf16.mxu0 0
        %3479 = vmatmul.mubr.bf16.gmra.mxu0 %v3380
        %v3480 = vpop.f32.mrf.mxu0
        %v3481 = vadd.f32 %v3397, %v3480
        %v3482 = vpop.f32.mrf.mxu0
        %v3483 = vpop.f32.mrf.mxu0
        %v3484 = vpop.f32.mrf.mxu0
        %3485 = vdwg.mxu0
        %3486 = vst [vmem:[%s324] sm:$0x1] %v3481
        %s3487 = sand.u32 %s225, 1
        %s3488 = scalar_lea.sflag [#allocation3], %s3487
        %s3489 = sand.u32 %s225, 1
        %s3490 = scalar_lea.vmem [#allocation2], %s3489
        // Predicated region
        $region57: #{net_forward.3} parent=55 // pred_check
          %p3491 = pneg %p235
        $region58: #{net_forward.3} parent=55 // pred_check_branch
          %3493 = sbr.rel (%p3491) target = $region60
        $region59: #{net_forward.3} parent=55 // pred_region
          %s3495 = ssub.s32 16, 16
          %3496 = vsyncadd %s3488, %s3495
          %s3497 = smul.addr %s23, 16
          %s3498 = scalar_lea.hbm %s9, %s3497
          %s3500 = sshll.u32 %s3490, 4
          %s3501 = int_to_ptr.vmem [resolvable:$true] %s3500
          %3503 = dma.vmem_to_hbm [thread:$0]  %s3501, 16, %s3498, %s3488
        $region60: #{net_forward.3} parent=55 // pred_fallthru
          _
      $region56: #{net_forward.3} parent=5 // pred_fallthru
        _
      %p3504 = scmp.le.s32.totalorder 2, %s18
      // Predicated region
      $region61: #{net_forward.3} parent=5 // pred_check
        %p3505 = pneg %p3504
      $region62: #{net_forward.3} parent=5 // pred_check_branch
        %3507 = sbr.rel (%p3505) target = $region64
      $region63: #{net_forward.3} parent=5 // pred_region
        %s3508 = ssub.s32 %s18, 2
        // Predicated region
        $region65: #{net_forward.3} parent=63 // pred_check
          %p3509 = pneg %p241
        $region66: #{net_forward.3} parent=63 // pred_check_branch
          %3511 = sbr.rel (%p3509) target = $region68
        $region67: #{net_forward.3} parent=63 // pred_region
          %s3512 = sand.u32 %s226, 1
          %s3513 = scalar_lea.sflag [#allocation3], %s3512
          %s3514 = sand.u32 %s226, 1
          %s3515 = scalar_lea.vmem [#allocation2], %s3514
          %3516 = dma.done %s3513, 16
        $region68: #{net_forward.3} parent=63 // pred_fallthru
          _
      $region64: #{net_forward.3} parent=5 // pred_fallthru
        _
    $region6: #{net_forward.3} parent=1 // loop_footer
      %s22 = sadd.s32 1, %s18
    $region7: #{net_forward.3} parent=1 // loop_footer_branch
      %17 = sbr.rel target = $region3
    $region8: #{net_forward.3} parent=1 // loop_exit
      _
    %3517 = vsyncpa [#allocation3], 1
    %s3518 = scalar_lea.sflag [#allocation3], 1
    %3519 = vsyncpa %s3518, 1

</llo_original>
